<compile_context>
chip_gen: v5e
topology: v5e:2x2
jax: 0.10.0
libtpu: 0.0.40
codegen_flags: <defaults>
</compile_context>

<pallas_src>
import functools
import math

import jax
import jax.numpy as jnp
from jax import lax
from jax.experimental import pallas as pl
from jax.experimental.pallas import tpu as pltpu


def _round_up(x, m):
    return ((x + m - 1) // m) * m


def _num_tensorcores():
    """Best-effort detection of megacore parts (v7x). Falls back to 1."""
    try:
        kind = jax.devices()[0].device_kind.lower()
    except Exception:
        return 1
    return 2 if "v7" in kind else 1


def _disc_kernel(x_ref,        # (Ts, Bt, D)   f32   time-major input chunk
                 wih0_ref,     # (D,  3Hp)     bf16  gate lane-padded
                 bx0_ref,      # (1,  3Hp)     f32   b_ih0 + b_hh0[r,z]
                 whh0_ref,     # (Hp, 3Hp)     bf16
                 bn0_ref,      # (1,  Hp)      f32   b_hh0 n-gate only
                 wih1_ref,     # (Hp, 3Hp)     bf16
                 bx1_ref,      # (1,  3Hp)     f32   b_ih1 + b_hh1[r,z]
                 whh1_ref,     # (Hp, 3Hp)     bf16
                 bn1_ref,      # (1,  Hp)      f32   b_hh1 n-gate only
                 wlin_ref,     # (Hp, Cp)      bf16
                 blin_ref,     # (1,  Cp)      f32   pad lanes = -1e30
                 out_ref,      # (Bt, Cp)      f32   softmax probs
                 h0_ref, h1_ref,   # scratch (Bt, Hp) f32, persistent carries
                 gx0_ref,          # scratch (Ts, Bt, 3Hp) bf16, hoisted gates
                 *, seq_len, ts, ragged, unroll):
    ts_, bt, d = x_ref.shape
    hp = h0_ref.shape[1]
    c = pl.program_id(1)

    # Reset hidden state at the start of each batch tile's time sweep.
    @pl.when(c == 0)
    def _():
        h0_ref[...] = jnp.zeros_like(h0_ref)
        h1_ref[...] = jnp.zeros_like(h1_ref)

    # ---- Hoisted layer-0 input projection: one big MXU matmul per chunk. ----
    xc = x_ref[...].astype(jnp.bfloat16).reshape(ts_ * bt, d)
    gx0 = jnp.dot(xc, wih0_ref[...], preferred_element_type=jnp.float32)
    gx0 = gx0 + bx0_ref[...]
    gx0_ref[...] = gx0.reshape(ts_, bt, 3 * hp).astype(gx0_ref.dtype)

    # ---- Hoist loop-invariant weight loads and bias broadcasts. ----
    whh0 = whh0_ref[...]
    whh1 = whh1_ref[...]
    wih1 = wih1_ref[...]
    bn0 = jnp.broadcast_to(bn0_ref[...], (bt, hp))
    bn1 = jnp.broadcast_to(bn1_ref[...], (bt, hp))
    bx1 = jnp.broadcast_to(bx1_ref[...], (bt, 3 * hp))

    def step(t, carry):
        h0, h1 = carry                                     # (Bt, Hp) f32 each

        # Both recurrent pushes depend only on the previous carry, so the
        # scheduler can start them immediately (no concat on the lane axis).
        gh0 = jnp.dot(h0.astype(jnp.bfloat16), whh0,
                      preferred_element_type=jnp.float32)
        gh1 = jnp.dot(h1.astype(jnp.bfloat16), whh1,
                      preferred_element_type=jnp.float32)
        gx0_t = gx0_ref[t].astype(jnp.float32)             # (Bt, 3Hp)

        # ----- layer 0 (gate slices are all 128-lane aligned) -----
        rz0 = jax.nn.sigmoid(gx0_t[:, :2 * hp] + gh0[:, :2 * hp])
        n0 = jnp.tanh(gx0_t[:, 2 * hp:] + rz0[:, :hp] * (gh0[:, 2 * hp:] + bn0))
        z0 = rz0[:, hp:]
        h0n = n0 + z0 * (h0 - n0)                          # == (1-z)*n + z*h

        # ----- layer 1 (only this push is on the dependent chain) -----
        gx1 = jnp.dot(h0n.astype(jnp.bfloat16), wih1,
                      preferred_element_type=jnp.float32) + bx1
        rz1 = jax.nn.sigmoid(gx1[:, :2 * hp] + gh1[:, :2 * hp])
        n1 = jnp.tanh(gx1[:, 2 * hp:] + rz1[:, :hp] * (gh1[:, 2 * hp:] + bn1))
        z1 = rz1[:, hp:]
        h1n = n1 + z1 * (h1 - n1)

        if ragged:
            # Padded tail of the last chunk must not advance the state.
            valid = (c * ts + t) < seq_len
            h0n = jnp.where(valid, h0n, h0)
            h1n = jnp.where(valid, h1n, h1)
        return h0n, h1n

    h0f, h1f = lax.fori_loop(0, ts_, step, (h0_ref[...], h1_ref[...]),
                             unroll=unroll)
    h0_ref[...] = h0f
    h1_ref[...] = h1f

    # Linear + softmax on the final top-layer hidden state, only on last chunk.
    # Padded classes carry a -1e30 bias so they contribute 0 to the softmax.
    @pl.when(c == pl.num_programs(1) - 1)
    def _():
        logits = jnp.dot(h1f.astype(jnp.bfloat16), wlin_ref[...],
                         preferred_element_type=jnp.float32) + blin_ref[...]
        m = jnp.max(logits, axis=-1, keepdims=True)
        e = jnp.exp(logits - m)
        out_ref[...] = (e / jnp.sum(e, axis=-1, keepdims=True)).astype(out_ref.dtype)


def init_discriminator_params(key, num_classes, state_dim, hidden_dim):
    """Deterministic init matching the module: uniform_(-0.05, 0.05)."""
    def u(k, shape):
        return jax.random.uniform(k, shape, jnp.float32, -0.05, 0.05)

    ks = jax.random.split(key, 10)
    H, D, C = hidden_dim, state_dim, num_classes
    return {
        "weight_ih_l0": u(ks[0], (3 * H, D)),
        "weight_hh_l0": u(ks[1], (3 * H, H)),
        "bias_ih_l0":   u(ks[2], (3 * H,)),
        "bias_hh_l0":   u(ks[3], (3 * H,)),
        "weight_ih_l1": u(ks[4], (3 * H, H)),
        "weight_hh_l1": u(ks[5], (3 * H, H)),
        "bias_ih_l1":   u(ks[6], (3 * H,)),
        "bias_hh_l1":   u(ks[7], (3 * H,)),
        "lin_weight":   u(ks[8], (C, H)),
        "lin_bias":     u(ks[9], (C,)),
    }


def _prep_gate_weight(w_pt, H, Hp, Kin, Kp):
    """PyTorch (3H, Kin) gate-stacked weight -> (Kp, 3*Hp) bf16, per-gate lane pad."""
    wt = w_pt.T.astype(jnp.float32)                       # (Kin, 3H)
    w = jnp.zeros((Kp, 3 * Hp), jnp.float32)
    for g in range(3):
        w = w.at[:Kin, g * Hp:g * Hp + H].set(wt[:, g * H:(g + 1) * H])
    return w.astype(jnp.bfloat16)


def _prep_gate_bias(b, H, Hp):
    """(3H,) gate-stacked bias -> (1, 3*Hp) f32, per-gate lane pad."""
    out = jnp.zeros((1, 3 * Hp), jnp.float32)
    for g in range(3):
        out = out.at[0, g * Hp:g * Hp + H].set(b[g * H:(g + 1) * H])
    return out


@jax.jit
def discriminator_forward(x, params):
    """x: (B, S, D) float32 -> probs (B, C) float32."""
    B, S, D = x.shape
    H = params["weight_hh_l0"].shape[1]
    C = params["lin_weight"].shape[0]

    f32, bf16 = jnp.float32, jnp.bfloat16

    # ----- static tiling decisions (shape-derived, so static under jit) -----
    Hp = _round_up(max(H, 1), 128)             # gates lane-padded to 128
    Cp = _round_up(max(C, 1), 128)             # classifier lanes padded to 128

    Bp = _round_up(B, 8)
    n_cores = _num_tensorcores()
    if Bp <= 256:
        Bt, nb = Bp, 1
        if n_cores >= 2 and Bp >= 16:
            # v7x megacore: split the (parallel) batch axis across both cores.
            Bt = _round_up((Bp + 1) // 2, 8)
            nb = 2
            Bp = nb * Bt
    else:
        Bt = 256
        Bp = _round_up(Bp, Bt)
        nb = Bp // Bt

    # Time chunk sized against an explicit VMEM budget (v7x = 64 MiB physical).
    weights_bytes = 2 * 2 * (D * 3 * Hp + 3 * Hp * 3 * Hp + Hp * Cp)   # bf16, x2 buffers
    fixed_bytes = weights_bytes + 2 * Bt * Hp * 4 + 2 * Bt * Cp * 4 + (1 << 20)
    per_t_bytes = Bt * (3 * Hp * 2 + 2 * D * 4)        # bf16 gx0 scratch + x double-buffer
    budget = 40 * (1 << 20)
    ts_cap = max(1, (budget - fixed_bytes) // per_t_bytes)
    ts = int(max(1, min(64, S, ts_cap)))
    nc = -(-S // ts)                                   # ceil
    Tp = nc * ts
    ragged = (S % ts) != 0
    unroll = True if ts <= 8 else 4

    vmem_est = fixed_bytes + ts * per_t_bytes
    vmem_limit = int(min(56 * (1 << 20), max(32 * (1 << 20), vmem_est + (8 << 20))))

    # ----- layout / weight prep (plain JAX glue, runs once) -----
    x_tm = jnp.transpose(x, (1, 0, 2)).astype(f32)                  # (S, B, D)
    x_tm = jnp.pad(x_tm, ((0, Tp - S), (0, Bp - B), (0, 0)))        # (Tp, Bp, D)

    wih0 = _prep_gate_weight(params["weight_ih_l0"], H, Hp, D, D)   # (D,  3Hp)
    whh0 = _prep_gate_weight(params["weight_hh_l0"], H, Hp, H, Hp)  # (Hp, 3Hp)
    wih1 = _prep_gate_weight(params["weight_ih_l1"], H, Hp, H, Hp)  # (Hp, 3Hp)
    whh1 = _prep_gate_weight(params["weight_hh_l1"], H, Hp, H, Hp)  # (Hp, 3Hp)

    zeros_h = jnp.zeros((H,), f32)
    # Fold the r,z components of b_hh into the input bias (torch keeps only the
    # n component of b_hh inside the r-multiplied term).
    bx0 = _prep_gate_bias(
        params["bias_ih_l0"]
        + jnp.concatenate([params["bias_hh_l0"][:2 * H], zeros_h]), H, Hp)
    bn0 = jnp.zeros((1, Hp), f32).at[0, :H].set(params["bias_hh_l0"][2 * H:])
    bx1 = _prep_gate_bias(
        params["bias_ih_l1"]
        + jnp.concatenate([params["bias_hh_l1"][:2 * H], zeros_h]), H, Hp)
    bn1 = jnp.zeros((1, Hp), f32).at[0, :H].set(params["bias_hh_l1"][2 * H:])

    wlin = jnp.zeros((Hp, Cp), f32).at[:H, :C].set(
        params["lin_weight"].T.astype(f32)).astype(bf16)            # (Hp, Cp)
    blin = jnp.full((1, Cp), -1e30, f32).at[0, :C].set(
        params["lin_bias"].astype(f32))                             # (1, Cp)

    kernel = functools.partial(_disc_kernel, seq_len=S, ts=ts,
                               ragged=ragged, unroll=unroll)

    out = pl.pallas_call(
        kernel,
        out_shape=jax.ShapeDtypeStruct((Bp, Cp), f32),
        grid_spec=pltpu.PrefetchScalarGridSpec(
            num_scalar_prefetch=0,
            grid=(nb, nc),                    # (batch tiles, time chunks)
            in_specs=[
                pl.BlockSpec((ts, Bt, D), lambda b, c: (c, b, 0)),     # x stream
                pl.BlockSpec((D, 3 * Hp), lambda b, c: (0, 0)),        # wih0
                pl.BlockSpec((1, 3 * Hp), lambda b, c: (0, 0)),        # bx0
                pl.BlockSpec((Hp, 3 * Hp), lambda b, c: (0, 0)),       # whh0
                pl.BlockSpec((1, Hp), lambda b, c: (0, 0)),            # bn0
                pl.BlockSpec((Hp, 3 * Hp), lambda b, c: (0, 0)),       # wih1
                pl.BlockSpec((1, 3 * Hp), lambda b, c: (0, 0)),        # bx1
                pl.BlockSpec((Hp, 3 * Hp), lambda b, c: (0, 0)),       # whh1
                pl.BlockSpec((1, Hp), lambda b, c: (0, 0)),            # bn1
                pl.BlockSpec((Hp, Cp), lambda b, c: (0, 0)),           # wlin
                pl.BlockSpec((1, Cp), lambda b, c: (0, 0)),            # blin
            ],
            out_specs=pl.BlockSpec((Bt, Cp), lambda b, c: (b, 0)),
            scratch_shapes=[
                pltpu.VMEM((Bt, Hp), f32),              # h layer 0 (persistent)
                pltpu.VMEM((Bt, Hp), f32),              # h layer 1 (persistent)
                pltpu.VMEM((ts, Bt, 3 * Hp), bf16),     # hoisted layer-0 gates
            ],
        ),
        compiler_params=pltpu.CompilerParams(
            dimension_semantics=("parallel", "arbitrary"),
            vmem_limit_bytes=vmem_limit),
    )(x_tm, wih0, bx0, whh0, bn0, wih1, bx1, whh1, bn1, wlin, blin)

    return out[:B, :C]


if __name__ == "__main__":
    # Small shapes consistent with the module's forward: x is (B, S, state_dim).
    num_classes = 4
    state_dim = 8
    hidden_dim = 32
    batch = 2
    seq_len = 8

    key = jax.random.PRNGKey(0)
    k_param, k_x = jax.random.split(key)

    params = init_discriminator_params(k_param, num_classes, state_dim, hidden_dim)
    x = jax.random.normal(k_x, (batch, seq_len, state_dim), dtype=jnp.float32)

    prob = discriminator_forward(x, params)
    prob = jax.block_until_ready(prob)

    assert prob.shape == (batch, num_classes)
    assert bool(jnp.all(jnp.isfinite(prob)))
    # rows of a softmax sum to 1
    assert bool(jnp.allclose(jnp.sum(prob, axis=-1), 1.0, atol=1e-5))

    print("KERNEL_OK")
</pallas_src>

<mosaic_0001>
module attributes {stable_mosaic.version = 11 : i64} {
  func.func @_disc_kernel(%arg0: i32, %arg1: i32, %arg2: memref<8x8x8xf32, #tpu.memory_space<vmem>>, %arg3: memref<8x384xbf16, #tpu.memory_space<vmem>>, %arg4: memref<1x384xf32, #tpu.memory_space<vmem>>, %arg5: memref<128x384xbf16, #tpu.memory_space<vmem>>, %arg6: memref<1x128xf32, #tpu.memory_space<vmem>>, %arg7: memref<128x384xbf16, #tpu.memory_space<vmem>>, %arg8: memref<1x384xf32, #tpu.memory_space<vmem>>, %arg9: memref<128x384xbf16, #tpu.memory_space<vmem>>, %arg10: memref<1x128xf32, #tpu.memory_space<vmem>>, %arg11: memref<128x128xbf16, #tpu.memory_space<vmem>>, %arg12: memref<1x128xf32, #tpu.memory_space<vmem>>, %arg13: memref<8x128xf32, #tpu.memory_space<vmem>>, %arg14: memref<8x128xf32, #tpu.memory_space<vmem>>, %arg15: memref<8x128xf32, #tpu.memory_space<vmem>>, %arg16: memref<8x8x384xbf16, #tpu.memory_space<vmem>>) attributes {dimension_semantics = [#tpu.dimension_semantics<parallel>, #tpu.dimension_semantics<arbitrary>], iteration_bounds = array<i64: 1, 1>, scalar_prefetch = 0 : i64, scratch_operands = 3 : i64, tpu.core_type = #tpu.core_type<tc>, window_params = [{transform_indices = @transform_0, window_bounds = array<i64: 8, 8, 8>}, {pipeline_mode = #tpu.pipeline_mode<synchronous>, transform_indices = @transform_1, window_bounds = array<i64: 8, 384>}, {pipeline_mode = #tpu.pipeline_mode<synchronous>, transform_indices = @transform_2, window_bounds = array<i64: 1, 384>}, {pipeline_mode = #tpu.pipeline_mode<synchronous>, transform_indices = @transform_3, window_bounds = array<i64: 128, 384>}, {pipeline_mode = #tpu.pipeline_mode<synchronous>, transform_indices = @transform_4, window_bounds = array<i64: 1, 128>}, {pipeline_mode = #tpu.pipeline_mode<synchronous>, transform_indices = @transform_5, window_bounds = array<i64: 128, 384>}, {pipeline_mode = #tpu.pipeline_mode<synchronous>, transform_indices = @transform_6, window_bounds = array<i64: 1, 384>}, {pipeline_mode = #tpu.pipeline_mode<synchronous>, transform_indices = @transform_7, window_bounds = array<i64: 128, 384>}, {pipeline_mode = #tpu.pipeline_mode<synchronous>, transform_indices = @transform_8, window_bounds = array<i64: 1, 128>}, {pipeline_mode = #tpu.pipeline_mode<synchronous>, transform_indices = @transform_9, window_bounds = array<i64: 128, 128>}, {pipeline_mode = #tpu.pipeline_mode<synchronous>, transform_indices = @transform_10, window_bounds = array<i64: 1, 128>}, {transform_indices = @transform_11, window_bounds = array<i64: 8, 128>}]} {
    %c0_i32 = arith.constant 0 : i32
    %0 = arith.cmpi eq, %arg1, %c0_i32 : i32
    %1 = arith.extui %0 : i1 to i32
    %c0_i32_0 = arith.constant 0 : i32
    %2 = arith.cmpi ne, %1, %c0_i32_0 : i32
    scf.if %2 {
      %cst_89 = arith.constant 0.000000e+00 : f32
      %425 = vector.broadcast %cst_89 : f32 to vector<8x128xf32>
      %c0_90 = arith.constant 0 : index
      %c0_91 = arith.constant 0 : index
      %426 = vector.load %arg14[%c0_90, %c0_91] : memref<8x128xf32, #tpu.memory_space<vmem>>, vector<8x128xf32>
      tpu.vector_store %arg14[%c0_90, %c0_91], %425 {strides = array<i32>} : memref<8x128xf32, #tpu.memory_space<vmem>>, vector<8x128xf32>,
      %cst_92 = arith.constant 0.000000e+00 : f32
      %427 = vector.broadcast %cst_92 : f32 to vector<8x128xf32>
      %c0_93 = arith.constant 0 : index
      %c0_94 = arith.constant 0 : index
      %428 = vector.load %arg15[%c0_93, %c0_94] : memref<8x128xf32, #tpu.memory_space<vmem>>, vector<8x128xf32>
      tpu.vector_store %arg15[%c0_93, %c0_94], %427 {strides = array<i32>} : memref<8x128xf32, #tpu.memory_space<vmem>>, vector<8x128xf32>,
    } else {
    }
    %c0 = arith.constant 0 : index
    %c0_1 = arith.constant 0 : index
    %c0_2 = arith.constant 0 : index
    %3 = vector.load %arg2[%c0, %c0_1, %c0_2] : memref<8x8x8xf32, #tpu.memory_space<vmem>>, vector<8x8x8xf32>
    %4 = arith.truncf %3 : vector<8x8x8xf32> to vector<8x8x8xbf16>
    %5 = vector.shape_cast %4 : vector<8x8x8xbf16> to vector<64x8xbf16>
    %c0_3 = arith.constant 0 : index
    %c0_4 = arith.constant 0 : index
    %6 = vector.load %arg3[%c0_3, %c0_4] : memref<8x384xbf16, #tpu.memory_space<vmem>>, vector<8x384xbf16>
    %cst = arith.constant dense<0.000000e+00> : vector<64x384xf32>
    %7 = tpu.matmul %5, %6, %cst {dimension_numbers = #tpu.dot_dimension_numbers<[1], [0], [0], [1], [0, 0, 1, 1], [], []>} : vector<64x8xbf16>, vector<8x384xbf16>, vector<64x384xf32> -> vector<64x384xf32>
    %c0_5 = arith.constant 0 : index
    %c0_6 = arith.constant 0 : index
    %8 = vector.load %arg4[%c0_5, %c0_6] : memref<1x384xf32, #tpu.memory_space<vmem>>, vector<1x384xf32>
    %9 = vector.broadcast %8 : vector<1x384xf32> to vector<64x384xf32>
    %10 = arith.addf %7, %9 : vector<64x384xf32>
    %11 = vector.shape_cast %10 : vector<64x384xf32> to vector<8x8x384xf32>
    %12 = arith.truncf %11 : vector<8x8x384xf32> to vector<8x8x384xbf16>
    %c0_7 = arith.constant 0 : index
    %c0_8 = arith.constant 0 : index
    %c0_9 = arith.constant 0 : index
    %13 = vector.load %arg16[%c0_7, %c0_8, %c0_9] : memref<8x8x384xbf16, #tpu.memory_space<vmem>>, vector<8x8x384xbf16>
    tpu.vector_store %arg16[%c0_7, %c0_8, %c0_9], %12 {strides = array<i32>} : memref<8x8x384xbf16, #tpu.memory_space<vmem>>, vector<8x8x384xbf16>,
    %c0_10 = arith.constant 0 : index
    %c0_11 = arith.constant 0 : index
    %14 = vector.load %arg5[%c0_10, %c0_11] : memref<128x384xbf16, #tpu.memory_space<vmem>>, vector<128x384xbf16>
    %c0_12 = arith.constant 0 : index
    %c0_13 = arith.constant 0 : index
    %15 = vector.load %arg9[%c0_12, %c0_13] : memref<128x384xbf16, #tpu.memory_space<vmem>>, vector<128x384xbf16>
    %c0_14 = arith.constant 0 : index
    %c0_15 = arith.constant 0 : index
    %16 = vector.load %arg7[%c0_14, %c0_15] : memref<128x384xbf16, #tpu.memory_space<vmem>>, vector<128x384xbf16>
    %c0_16 = arith.constant 0 : index
    %c0_17 = arith.constant 0 : index
    %17 = vector.load %arg6[%c0_16, %c0_17] : memref<1x128xf32, #tpu.memory_space<vmem>>, vector<1x128xf32>
    %18 = vector.shape_cast %17 : vector<1x128xf32> to vector<1x128xf32>
    %19 = vector.broadcast %18 : vector<1x128xf32> to vector<8x128xf32>
    %c0_18 = arith.constant 0 : index
    %c0_19 = arith.constant 0 : index
    %20 = vector.load %arg10[%c0_18, %c0_19] : memref<1x128xf32, #tpu.memory_space<vmem>>, vector<1x128xf32>
    %21 = vector.shape_cast %20 : vector<1x128xf32> to vector<1x128xf32>
    %22 = vector.broadcast %21 : vector<1x128xf32> to vector<8x128xf32>
    %c0_20 = arith.constant 0 : index
    %c0_21 = arith.constant 0 : index
    %23 = vector.load %arg8[%c0_20, %c0_21] : memref<1x384xf32, #tpu.memory_space<vmem>>, vector<1x384xf32>
    %24 = vector.shape_cast %23 : vector<1x384xf32> to vector<1x384xf32>
    %25 = vector.broadcast %24 : vector<1x384xf32> to vector<8x384xf32>
    %c0_22 = arith.constant 0 : index
    %c0_23 = arith.constant 0 : index
    %26 = vector.load %arg14[%c0_22, %c0_23] : memref<8x128xf32, #tpu.memory_space<vmem>>, vector<8x128xf32>
    %c0_24 = arith.constant 0 : index
    %c0_25 = arith.constant 0 : index
    %27 = vector.load %arg15[%c0_24, %c0_25] : memref<8x128xf32, #tpu.memory_space<vmem>>, vector<8x128xf32>
    %c0_i32_26 = arith.constant 0 : i32
    %28 = arith.truncf %26 : vector<8x128xf32> to vector<8x128xbf16>
    %cst_27 = arith.constant dense<0.000000e+00> : vector<8x384xf32>
    %29 = tpu.matmul %28, %14, %cst_27 {dimension_numbers = #tpu.dot_dimension_numbers<[1], [0], [0], [1], [0, 0, 1, 1], [], []>} : vector<8x128xbf16>, vector<128x384xbf16>, vector<8x384xf32> -> vector<8x384xf32>
    %30 = arith.truncf %27 : vector<8x128xf32> to vector<8x128xbf16>
    %cst_28 = arith.constant dense<0.000000e+00> : vector<8x384xf32>
    %31 = tpu.matmul %30, %15, %cst_28 {dimension_numbers = #tpu.dot_dimension_numbers<[1], [0], [0], [1], [0, 0, 1, 1], [], []>} : vector<8x128xbf16>, vector<128x384xbf16>, vector<8x384xf32> -> vector<8x384xf32>
    %32 = arith.index_cast %c0_i32_26 : i32 to index
    %c0_29 = arith.constant 0 : index
    %c0_30 = arith.constant 0 : index
    %33 = vector.load %arg16[%32, %c0_29, %c0_30] : memref<8x8x384xbf16, #tpu.memory_space<vmem>>, vector<1x8x384xbf16>
    %34 = vector.shape_cast %33 : vector<1x8x384xbf16> to vector<8x384xbf16>
    %35 = arith.extf %34 : vector<8x384xbf16> to vector<8x384xf32>
    %36 = vector.extract_strided_slice %35 {offsets = [0, 0], sizes = [8, 256], strides = [1, 1]} : vector<8x384xf32> to vector<8x256xf32>
    %37 = vector.extract_strided_slice %29 {offsets = [0, 0], sizes = [8, 256], strides = [1, 1]} : vector<8x384xf32> to vector<8x256xf32>
    %38 = arith.addf %36, %37 : vector<8x256xf32>
    %39 = arith.negf %38 : vector<8x256xf32>
    %40 = math.exp %39 : vector<8x256xf32>
    %cst_31 = arith.constant 1.000000e+00 : f32
    %41 = vector.broadcast %cst_31 : f32 to vector<8x256xf32>
    %42 = arith.addf %41, %40 : vector<8x256xf32>
    %43 = arith.divf %41, %42 : vector<8x256xf32>
    %44 = vector.extract_strided_slice %35 {offsets = [0, 256], sizes = [8, 128], strides = [1, 1]} : vector<8x384xf32> to vector<8x128xf32>
    %45 = vector.extract_strided_slice %43 {offsets = [0, 0], sizes = [8, 128], strides = [1, 1]} : vector<8x256xf32> to vector<8x128xf32>
    %46 = vector.extract_strided_slice %29 {offsets = [0, 256], sizes = [8, 128], strides = [1, 1]} : vector<8x384xf32> to vector<8x128xf32>
    %47 = arith.addf %46, %19 : vector<8x128xf32>
    %48 = arith.mulf %45, %47 : vector<8x128xf32>
    %49 = arith.addf %44, %48 : vector<8x128xf32>
    %50 = math.tanh %49 : vector<8x128xf32>
    %51 = vector.extract_strided_slice %43 {offsets = [0, 128], sizes = [8, 128], strides = [1, 1]} : vector<8x256xf32> to vector<8x128xf32>
    %52 = arith.subf %26, %50 : vector<8x128xf32>
    %53 = arith.mulf %51, %52 : vector<8x128xf32>
    %54 = arith.addf %50, %53 : vector<8x128xf32>
    %55 = arith.truncf %54 : vector<8x128xf32> to vector<8x128xbf16>
    %cst_32 = arith.constant dense<0.000000e+00> : vector<8x384xf32>
    %56 = tpu.matmul %55, %16, %cst_32 {dimension_numbers = #tpu.dot_dimension_numbers<[1], [0], [0], [1], [0, 0, 1, 1], [], []>} : vector<8x128xbf16>, vector<128x384xbf16>, vector<8x384xf32> -> vector<8x384xf32>
    %57 = arith.addf %56, %25 : vector<8x384xf32>
    %58 = vector.extract_strided_slice %57 {offsets = [0, 0], sizes = [8, 256], strides = [1, 1]} : vector<8x384xf32> to vector<8x256xf32>
    %59 = vector.extract_strided_slice %31 {offsets = [0, 0], sizes = [8, 256], strides = [1, 1]} : vector<8x384xf32> to vector<8x256xf32>
    %60 = arith.addf %58, %59 : vector<8x256xf32>
    %61 = arith.negf %60 : vector<8x256xf32>
    %62 = math.exp %61 : vector<8x256xf32>
    %cst_33 = arith.constant 1.000000e+00 : f32
    %63 = vector.broadcast %cst_33 : f32 to vector<8x256xf32>
    %64 = arith.addf %63, %62 : vector<8x256xf32>
    %65 = arith.divf %63, %64 : vector<8x256xf32>
    %66 = vector.extract_strided_slice %57 {offsets = [0, 256], sizes = [8, 128], strides = [1, 1]} : vector<8x384xf32> to vector<8x128xf32>
    %67 = vector.extract_strided_slice %65 {offsets = [0, 0], sizes = [8, 128], strides = [1, 1]} : vector<8x256xf32> to vector<8x128xf32>
    %68 = vector.extract_strided_slice %31 {offsets = [0, 256], sizes = [8, 128], strides = [1, 1]} : vector<8x384xf32> to vector<8x128xf32>
    %69 = arith.addf %68, %22 : vector<8x128xf32>
    %70 = arith.mulf %67, %69 : vector<8x128xf32>
    %71 = arith.addf %66, %70 : vector<8x128xf32>
    %72 = math.tanh %71 : vector<8x128xf32>
    %73 = vector.extract_strided_slice %65 {offsets = [0, 128], sizes = [8, 128], strides = [1, 1]} : vector<8x256xf32> to vector<8x128xf32>
    %74 = arith.subf %27, %72 : vector<8x128xf32>
    %75 = arith.mulf %73, %74 : vector<8x128xf32>
    %76 = arith.addf %72, %75 : vector<8x128xf32>
    %c1_i32 = arith.constant 1 : i32
    %77 = arith.truncf %54 : vector<8x128xf32> to vector<8x128xbf16>
    %cst_34 = arith.constant dense<0.000000e+00> : vector<8x384xf32>
    %78 = tpu.matmul %77, %14, %cst_34 {dimension_numbers = #tpu.dot_dimension_numbers<[1], [0], [0], [1], [0, 0, 1, 1], [], []>} : vector<8x128xbf16>, vector<128x384xbf16>, vector<8x384xf32> -> vector<8x384xf32>
    %79 = arith.truncf %76 : vector<8x128xf32> to vector<8x128xbf16>
    %cst_35 = arith.constant dense<0.000000e+00> : vector<8x384xf32>
    %80 = tpu.matmul %79, %15, %cst_35 {dimension_numbers = #tpu.dot_dimension_numbers<[1], [0], [0], [1], [0, 0, 1, 1], [], []>} : vector<8x128xbf16>, vector<128x384xbf16>, vector<8x384xf32> -> vector<8x384xf32>
    %81 = arith.index_cast %c1_i32 : i32 to index
    %c0_36 = arith.constant 0 : index
    %c0_37 = arith.constant 0 : index
    %82 = vector.load %arg16[%81, %c0_36, %c0_37] : memref<8x8x384xbf16, #tpu.memory_space<vmem>>, vector<1x8x384xbf16>
    %83 = vector.shape_cast %82 : vector<1x8x384xbf16> to vector<8x384xbf16>
    %84 = arith.extf %83 : vector<8x384xbf16> to vector<8x384xf32>
    %85 = vector.extract_strided_slice %84 {offsets = [0, 0], sizes = [8, 256], strides = [1, 1]} : vector<8x384xf32> to vector<8x256xf32>
    %86 = vector.extract_strided_slice %78 {offsets = [0, 0], sizes = [8, 256], strides = [1, 1]} : vector<8x384xf32> to vector<8x256xf32>
    %87 = arith.addf %85, %86 : vector<8x256xf32>
    %88 = arith.negf %87 : vector<8x256xf32>
    %89 = math.exp %88 : vector<8x256xf32>
    %cst_38 = arith.constant 1.000000e+00 : f32
    %90 = vector.broadcast %cst_38 : f32 to vector<8x256xf32>
    %91 = arith.addf %90, %89 : vector<8x256xf32>
    %92 = arith.divf %90, %91 : vector<8x256xf32>
    %93 = vector.extract_strided_slice %84 {offsets = [0, 256], sizes = [8, 128], strides = [1, 1]} : vector<8x384xf32> to vector<8x128xf32>
    %94 = vector.extract_strided_slice %92 {offsets = [0, 0], sizes = [8, 128], strides = [1, 1]} : vector<8x256xf32> to vector<8x128xf32>
    %95 = vector.extract_strided_slice %78 {offsets = [0, 256], sizes = [8, 128], strides = [1, 1]} : vector<8x384xf32> to vector<8x128xf32>
    %96 = arith.addf %95, %19 : vector<8x128xf32>
    %97 = arith.mulf %94, %96 : vector<8x128xf32>
    %98 = arith.addf %93, %97 : vector<8x128xf32>
    %99 = math.tanh %98 : vector<8x128xf32>
    %100 = vector.extract_strided_slice %92 {offsets = [0, 128], sizes = [8, 128], strides = [1, 1]} : vector<8x256xf32> to vector<8x128xf32>
    %101 = arith.subf %54, %99 : vector<8x128xf32>
    %102 = arith.mulf %100, %101 : vector<8x128xf32>
    %103 = arith.addf %99, %102 : vector<8x128xf32>
    %104 = arith.truncf %103 : vector<8x128xf32> to vector<8x128xbf16>
    %cst_39 = arith.constant dense<0.000000e+00> : vector<8x384xf32>
    %105 = tpu.matmul %104, %16, %cst_39 {dimension_numbers = #tpu.dot_dimension_numbers<[1], [0], [0], [1], [0, 0, 1, 1], [], []>} : vector<8x128xbf16>, vector<128x384xbf16>, vector<8x384xf32> -> vector<8x384xf32>
    %106 = arith.addf %105, %25 : vector<8x384xf32>
    %107 = vector.extract_strided_slice %106 {offsets = [0, 0], sizes = [8, 256], strides = [1, 1]} : vector<8x384xf32> to vector<8x256xf32>
    %108 = vector.extract_strided_slice %80 {offsets = [0, 0], sizes = [8, 256], strides = [1, 1]} : vector<8x384xf32> to vector<8x256xf32>
    %109 = arith.addf %107, %108 : vector<8x256xf32>
    %110 = arith.negf %109 : vector<8x256xf32>
    %111 = math.exp %110 : vector<8x256xf32>
    %cst_40 = arith.constant 1.000000e+00 : f32
    %112 = vector.broadcast %cst_40 : f32 to vector<8x256xf32>
    %113 = arith.addf %112, %111 : vector<8x256xf32>
    %114 = arith.divf %112, %113 : vector<8x256xf32>
    %115 = vector.extract_strided_slice %106 {offsets = [0, 256], sizes = [8, 128], strides = [1, 1]} : vector<8x384xf32> to vector<8x128xf32>
    %116 = vector.extract_strided_slice %114 {offsets = [0, 0], sizes = [8, 128], strides = [1, 1]} : vector<8x256xf32> to vector<8x128xf32>
    %117 = vector.extract_strided_slice %80 {offsets = [0, 256], sizes = [8, 128], strides = [1, 1]} : vector<8x384xf32> to vector<8x128xf32>
    %118 = arith.addf %117, %22 : vector<8x128xf32>
    %119 = arith.mulf %116, %118 : vector<8x128xf32>
    %120 = arith.addf %115, %119 : vector<8x128xf32>
    %121 = math.tanh %120 : vector<8x128xf32>
    %122 = vector.extract_strided_slice %114 {offsets = [0, 128], sizes = [8, 128], strides = [1, 1]} : vector<8x256xf32> to vector<8x128xf32>
    %123 = arith.subf %76, %121 : vector<8x128xf32>
    %124 = arith.mulf %122, %123 : vector<8x128xf32>
    %125 = arith.addf %121, %124 : vector<8x128xf32>
    %c2_i32 = arith.constant 2 : i32
    %126 = arith.truncf %103 : vector<8x128xf32> to vector<8x128xbf16>
    %cst_41 = arith.constant dense<0.000000e+00> : vector<8x384xf32>
    %127 = tpu.matmul %126, %14, %cst_41 {dimension_numbers = #tpu.dot_dimension_numbers<[1], [0], [0], [1], [0, 0, 1, 1], [], []>} : vector<8x128xbf16>, vector<128x384xbf16>, vector<8x384xf32> -> vector<8x384xf32>
    %128 = arith.truncf %125 : vector<8x128xf32> to vector<8x128xbf16>
    %cst_42 = arith.constant dense<0.000000e+00> : vector<8x384xf32>
    %129 = tpu.matmul %128, %15, %cst_42 {dimension_numbers = #tpu.dot_dimension_numbers<[1], [0], [0], [1], [0, 0, 1, 1], [], []>} : vector<8x128xbf16>, vector<128x384xbf16>, vector<8x384xf32> -> vector<8x384xf32>
    %130 = arith.index_cast %c2_i32 : i32 to index
    %c0_43 = arith.constant 0 : index
    %c0_44 = arith.constant 0 : index
    %131 = vector.load %arg16[%130, %c0_43, %c0_44] : memref<8x8x384xbf16, #tpu.memory_space<vmem>>, vector<1x8x384xbf16>
    %132 = vector.shape_cast %131 : vector<1x8x384xbf16> to vector<8x384xbf16>
    %133 = arith.extf %132 : vector<8x384xbf16> to vector<8x384xf32>
    %134 = vector.extract_strided_slice %133 {offsets = [0, 0], sizes = [8, 256], strides = [1, 1]} : vector<8x384xf32> to vector<8x256xf32>
    %135 = vector.extract_strided_slice %127 {offsets = [0, 0], sizes = [8, 256], strides = [1, 1]} : vector<8x384xf32> to vector<8x256xf32>
    %136 = arith.addf %134, %135 : vector<8x256xf32>
    %137 = arith.negf %136 : vector<8x256xf32>
    %138 = math.exp %137 : vector<8x256xf32>
    %cst_45 = arith.constant 1.000000e+00 : f32
    %139 = vector.broadcast %cst_45 : f32 to vector<8x256xf32>
    %140 = arith.addf %139, %138 : vector<8x256xf32>
    %141 = arith.divf %139, %140 : vector<8x256xf32>
    %142 = vector.extract_strided_slice %133 {offsets = [0, 256], sizes = [8, 128], strides = [1, 1]} : vector<8x384xf32> to vector<8x128xf32>
    %143 = vector.extract_strided_slice %141 {offsets = [0, 0], sizes = [8, 128], strides = [1, 1]} : vector<8x256xf32> to vector<8x128xf32>
    %144 = vector.extract_strided_slice %127 {offsets = [0, 256], sizes = [8, 128], strides = [1, 1]} : vector<8x384xf32> to vector<8x128xf32>
    %145 = arith.addf %144, %19 : vector<8x128xf32>
    %146 = arith.mulf %143, %145 : vector<8x128xf32>
    %147 = arith.addf %142, %146 : vector<8x128xf32>
    %148 = math.tanh %147 : vector<8x128xf32>
    %149 = vector.extract_strided_slice %141 {offsets = [0, 128], sizes = [8, 128], strides = [1, 1]} : vector<8x256xf32> to vector<8x128xf32>
    %150 = arith.subf %103, %148 : vector<8x128xf32>
    %151 = arith.mulf %149, %150 : vector<8x128xf32>
    %152 = arith.addf %148, %151 : vector<8x128xf32>
    %153 = arith.truncf %152 : vector<8x128xf32> to vector<8x128xbf16>
    %cst_46 = arith.constant dense<0.000000e+00> : vector<8x384xf32>
    %154 = tpu.matmul %153, %16, %cst_46 {dimension_numbers = #tpu.dot_dimension_numbers<[1], [0], [0], [1], [0, 0, 1, 1], [], []>} : vector<8x128xbf16>, vector<128x384xbf16>, vector<8x384xf32> -> vector<8x384xf32>
    %155 = arith.addf %154, %25 : vector<8x384xf32>
    %156 = vector.extract_strided_slice %155 {offsets = [0, 0], sizes = [8, 256], strides = [1, 1]} : vector<8x384xf32> to vector<8x256xf32>
    %157 = vector.extract_strided_slice %129 {offsets = [0, 0], sizes = [8, 256], strides = [1, 1]} : vector<8x384xf32> to vector<8x256xf32>
    %158 = arith.addf %156, %157 : vector<8x256xf32>
    %159 = arith.negf %158 : vector<8x256xf32>
    %160 = math.exp %159 : vector<8x256xf32>
    %cst_47 = arith.constant 1.000000e+00 : f32
    %161 = vector.broadcast %cst_47 : f32 to vector<8x256xf32>
    %162 = arith.addf %161, %160 : vector<8x256xf32>
    %163 = arith.divf %161, %162 : vector<8x256xf32>
    %164 = vector.extract_strided_slice %155 {offsets = [0, 256], sizes = [8, 128], strides = [1, 1]} : vector<8x384xf32> to vector<8x128xf32>
    %165 = vector.extract_strided_slice %163 {offsets = [0, 0], sizes = [8, 128], strides = [1, 1]} : vector<8x256xf32> to vector<8x128xf32>
    %166 = vector.extract_strided_slice %129 {offsets = [0, 256], sizes = [8, 128], strides = [1, 1]} : vector<8x384xf32> to vector<8x128xf32>
    %167 = arith.addf %166, %22 : vector<8x128xf32>
    %168 = arith.mulf %165, %167 : vector<8x128xf32>
    %169 = arith.addf %164, %168 : vector<8x128xf32>
    %170 = math.tanh %169 : vector<8x128xf32>
    %171 = vector.extract_strided_slice %163 {offsets = [0, 128], sizes = [8, 128], strides = [1, 1]} : vector<8x256xf32> to vector<8x128xf32>
    %172 = arith.subf %125, %170 : vector<8x128xf32>
    %173 = arith.mulf %171, %172 : vector<8x128xf32>
    %174 = arith.addf %170, %173 : vector<8x128xf32>
    %c3_i32 = arith.constant 3 : i32
    %175 = arith.truncf %152 : vector<8x128xf32> to vector<8x128xbf16>
    %cst_48 = arith.constant dense<0.000000e+00> : vector<8x384xf32>
    %176 = tpu.matmul %175, %14, %cst_48 {dimension_numbers = #tpu.dot_dimension_numbers<[1], [0], [0], [1], [0, 0, 1, 1], [], []>} : vector<8x128xbf16>, vector<128x384xbf16>, vector<8x384xf32> -> vector<8x384xf32>
    %177 = arith.truncf %174 : vector<8x128xf32> to vector<8x128xbf16>
    %cst_49 = arith.constant dense<0.000000e+00> : vector<8x384xf32>
    %178 = tpu.matmul %177, %15, %cst_49 {dimension_numbers = #tpu.dot_dimension_numbers<[1], [0], [0], [1], [0, 0, 1, 1], [], []>} : vector<8x128xbf16>, vector<128x384xbf16>, vector<8x384xf32> -> vector<8x384xf32>
    %179 = arith.index_cast %c3_i32 : i32 to index
    %c0_50 = arith.constant 0 : index
    %c0_51 = arith.constant 0 : index
    %180 = vector.load %arg16[%179, %c0_50, %c0_51] : memref<8x8x384xbf16, #tpu.memory_space<vmem>>, vector<1x8x384xbf16>
    %181 = vector.shape_cast %180 : vector<1x8x384xbf16> to vector<8x384xbf16>
    %182 = arith.extf %181 : vector<8x384xbf16> to vector<8x384xf32>
    %183 = vector.extract_strided_slice %182 {offsets = [0, 0], sizes = [8, 256], strides = [1, 1]} : vector<8x384xf32> to vector<8x256xf32>
    %184 = vector.extract_strided_slice %176 {offsets = [0, 0], sizes = [8, 256], strides = [1, 1]} : vector<8x384xf32> to vector<8x256xf32>
    %185 = arith.addf %183, %184 : vector<8x256xf32>
    %186 = arith.negf %185 : vector<8x256xf32>
    %187 = math.exp %186 : vector<8x256xf32>
    %cst_52 = arith.constant 1.000000e+00 : f32
    %188 = vector.broadcast %cst_52 : f32 to vector<8x256xf32>
    %189 = arith.addf %188, %187 : vector<8x256xf32>
    %190 = arith.divf %188, %189 : vector<8x256xf32>
    %191 = vector.extract_strided_slice %182 {offsets = [0, 256], sizes = [8, 128], strides = [1, 1]} : vector<8x384xf32> to vector<8x128xf32>
    %192 = vector.extract_strided_slice %190 {offsets = [0, 0], sizes = [8, 128], strides = [1, 1]} : vector<8x256xf32> to vector<8x128xf32>
    %193 = vector.extract_strided_slice %176 {offsets = [0, 256], sizes = [8, 128], strides = [1, 1]} : vector<8x384xf32> to vector<8x128xf32>
    %194 = arith.addf %193, %19 : vector<8x128xf32>
    %195 = arith.mulf %192, %194 : vector<8x128xf32>
    %196 = arith.addf %191, %195 : vector<8x128xf32>
    %197 = math.tanh %196 : vector<8x128xf32>
    %198 = vector.extract_strided_slice %190 {offsets = [0, 128], sizes = [8, 128], strides = [1, 1]} : vector<8x256xf32> to vector<8x128xf32>
    %199 = arith.subf %152, %197 : vector<8x128xf32>
    %200 = arith.mulf %198, %199 : vector<8x128xf32>
    %201 = arith.addf %197, %200 : vector<8x128xf32>
    %202 = arith.truncf %201 : vector<8x128xf32> to vector<8x128xbf16>
    %cst_53 = arith.constant dense<0.000000e+00> : vector<8x384xf32>
    %203 = tpu.matmul %202, %16, %cst_53 {dimension_numbers = #tpu.dot_dimension_numbers<[1], [0], [0], [1], [0, 0, 1, 1], [], []>} : vector<8x128xbf16>, vector<128x384xbf16>, vector<8x384xf32> -> vector<8x384xf32>
    %204 = arith.addf %203, %25 : vector<8x384xf32>
    %205 = vector.extract_strided_slice %204 {offsets = [0, 0], sizes = [8, 256], strides = [1, 1]} : vector<8x384xf32> to vector<8x256xf32>
    %206 = vector.extract_strided_slice %178 {offsets = [0, 0], sizes = [8, 256], strides = [1, 1]} : vector<8x384xf32> to vector<8x256xf32>
    %207 = arith.addf %205, %206 : vector<8x256xf32>
    %208 = arith.negf %207 : vector<8x256xf32>
    %209 = math.exp %208 : vector<8x256xf32>
    %cst_54 = arith.constant 1.000000e+00 : f32
    %210 = vector.broadcast %cst_54 : f32 to vector<8x256xf32>
    %211 = arith.addf %210, %209 : vector<8x256xf32>
    %212 = arith.divf %210, %211 : vector<8x256xf32>
    %213 = vector.extract_strided_slice %204 {offsets = [0, 256], sizes = [8, 128], strides = [1, 1]} : vector<8x384xf32> to vector<8x128xf32>
    %214 = vector.extract_strided_slice %212 {offsets = [0, 0], sizes = [8, 128], strides = [1, 1]} : vector<8x256xf32> to vector<8x128xf32>
    %215 = vector.extract_strided_slice %178 {offsets = [0, 256], sizes = [8, 128], strides = [1, 1]} : vector<8x384xf32> to vector<8x128xf32>
    %216 = arith.addf %215, %22 : vector<8x128xf32>
    %217 = arith.mulf %214, %216 : vector<8x128xf32>
    %218 = arith.addf %213, %217 : vector<8x128xf32>
    %219 = math.tanh %218 : vector<8x128xf32>
    %220 = vector.extract_strided_slice %212 {offsets = [0, 128], sizes = [8, 128], strides = [1, 1]} : vector<8x256xf32> to vector<8x128xf32>
    %221 = arith.subf %174, %219 : vector<8x128xf32>
    %222 = arith.mulf %220, %221 : vector<8x128xf32>
    %223 = arith.addf %219, %222 : vector<8x128xf32>
    %c4_i32 = arith.constant 4 : i32
    %224 = arith.truncf %201 : vector<8x128xf32> to vector<8x128xbf16>
    %cst_55 = arith.constant dense<0.000000e+00> : vector<8x384xf32>
    %225 = tpu.matmul %224, %14, %cst_55 {dimension_numbers = #tpu.dot_dimension_numbers<[1], [0], [0], [1], [0, 0, 1, 1], [], []>} : vector<8x128xbf16>, vector<128x384xbf16>, vector<8x384xf32> -> vector<8x384xf32>
    %226 = arith.truncf %223 : vector<8x128xf32> to vector<8x128xbf16>
    %cst_56 = arith.constant dense<0.000000e+00> : vector<8x384xf32>
    %227 = tpu.matmul %226, %15, %cst_56 {dimension_numbers = #tpu.dot_dimension_numbers<[1], [0], [0], [1], [0, 0, 1, 1], [], []>} : vector<8x128xbf16>, vector<128x384xbf16>, vector<8x384xf32> -> vector<8x384xf32>
    %228 = arith.index_cast %c4_i32 : i32 to index
    %c0_57 = arith.constant 0 : index
    %c0_58 = arith.constant 0 : index
    %229 = vector.load %arg16[%228, %c0_57, %c0_58] : memref<8x8x384xbf16, #tpu.memory_space<vmem>>, vector<1x8x384xbf16>
    %230 = vector.shape_cast %229 : vector<1x8x384xbf16> to vector<8x384xbf16>
    %231 = arith.extf %230 : vector<8x384xbf16> to vector<8x384xf32>
    %232 = vector.extract_strided_slice %231 {offsets = [0, 0], sizes = [8, 256], strides = [1, 1]} : vector<8x384xf32> to vector<8x256xf32>
    %233 = vector.extract_strided_slice %225 {offsets = [0, 0], sizes = [8, 256], strides = [1, 1]} : vector<8x384xf32> to vector<8x256xf32>
    %234 = arith.addf %232, %233 : vector<8x256xf32>
    %235 = arith.negf %234 : vector<8x256xf32>
    %236 = math.exp %235 : vector<8x256xf32>
    %cst_59 = arith.constant 1.000000e+00 : f32
    %237 = vector.broadcast %cst_59 : f32 to vector<8x256xf32>
    %238 = arith.addf %237, %236 : vector<8x256xf32>
    %239 = arith.divf %237, %238 : vector<8x256xf32>
    %240 = vector.extract_strided_slice %231 {offsets = [0, 256], sizes = [8, 128], strides = [1, 1]} : vector<8x384xf32> to vector<8x128xf32>
    %241 = vector.extract_strided_slice %239 {offsets = [0, 0], sizes = [8, 128], strides = [1, 1]} : vector<8x256xf32> to vector<8x128xf32>
    %242 = vector.extract_strided_slice %225 {offsets = [0, 256], sizes = [8, 128], strides = [1, 1]} : vector<8x384xf32> to vector<8x128xf32>
    %243 = arith.addf %242, %19 : vector<8x128xf32>
    %244 = arith.mulf %241, %243 : vector<8x128xf32>
    %245 = arith.addf %240, %244 : vector<8x128xf32>
    %246 = math.tanh %245 : vector<8x128xf32>
    %247 = vector.extract_strided_slice %239 {offsets = [0, 128], sizes = [8, 128], strides = [1, 1]} : vector<8x256xf32> to vector<8x128xf32>
    %248 = arith.subf %201, %246 : vector<8x128xf32>
    %249 = arith.mulf %247, %248 : vector<8x128xf32>
    %250 = arith.addf %246, %249 : vector<8x128xf32>
    %251 = arith.truncf %250 : vector<8x128xf32> to vector<8x128xbf16>
    %cst_60 = arith.constant dense<0.000000e+00> : vector<8x384xf32>
    %252 = tpu.matmul %251, %16, %cst_60 {dimension_numbers = #tpu.dot_dimension_numbers<[1], [0], [0], [1], [0, 0, 1, 1], [], []>} : vector<8x128xbf16>, vector<128x384xbf16>, vector<8x384xf32> -> vector<8x384xf32>
    %253 = arith.addf %252, %25 : vector<8x384xf32>
    %254 = vector.extract_strided_slice %253 {offsets = [0, 0], sizes = [8, 256], strides = [1, 1]} : vector<8x384xf32> to vector<8x256xf32>
    %255 = vector.extract_strided_slice %227 {offsets = [0, 0], sizes = [8, 256], strides = [1, 1]} : vector<8x384xf32> to vector<8x256xf32>
    %256 = arith.addf %254, %255 : vector<8x256xf32>
    %257 = arith.negf %256 : vector<8x256xf32>
    %258 = math.exp %257 : vector<8x256xf32>
    %cst_61 = arith.constant 1.000000e+00 : f32
    %259 = vector.broadcast %cst_61 : f32 to vector<8x256xf32>
    %260 = arith.addf %259, %258 : vector<8x256xf32>
    %261 = arith.divf %259, %260 : vector<8x256xf32>
    %262 = vector.extract_strided_slice %253 {offsets = [0, 256], sizes = [8, 128], strides = [1, 1]} : vector<8x384xf32> to vector<8x128xf32>
    %263 = vector.extract_strided_slice %261 {offsets = [0, 0], sizes = [8, 128], strides = [1, 1]} : vector<8x256xf32> to vector<8x128xf32>
    %264 = vector.extract_strided_slice %227 {offsets = [0, 256], sizes = [8, 128], strides = [1, 1]} : vector<8x384xf32> to vector<8x128xf32>
    %265 = arith.addf %264, %22 : vector<8x128xf32>
    %266 = arith.mulf %263, %265 : vector<8x128xf32>
    %267 = arith.addf %262, %266 : vector<8x128xf32>
    %268 = math.tanh %267 : vector<8x128xf32>
    %269 = vector.extract_strided_slice %261 {offsets = [0, 128], sizes = [8, 128], strides = [1, 1]} : vector<8x256xf32> to vector<8x128xf32>
    %270 = arith.subf %223, %268 : vector<8x128xf32>
    %271 = arith.mulf %269, %270 : vector<8x128xf32>
    %272 = arith.addf %268, %271 : vector<8x128xf32>
    %c5_i32 = arith.constant 5 : i32
    %273 = arith.truncf %250 : vector<8x128xf32> to vector<8x128xbf16>
    %cst_62 = arith.constant dense<0.000000e+00> : vector<8x384xf32>
    %274 = tpu.matmul %273, %14, %cst_62 {dimension_numbers = #tpu.dot_dimension_numbers<[1], [0], [0], [1], [0, 0, 1, 1], [], []>} : vector<8x128xbf16>, vector<128x384xbf16>, vector<8x384xf32> -> vector<8x384xf32>
    %275 = arith.truncf %272 : vector<8x128xf32> to vector<8x128xbf16>
    %cst_63 = arith.constant dense<0.000000e+00> : vector<8x384xf32>
    %276 = tpu.matmul %275, %15, %cst_63 {dimension_numbers = #tpu.dot_dimension_numbers<[1], [0], [0], [1], [0, 0, 1, 1], [], []>} : vector<8x128xbf16>, vector<128x384xbf16>, vector<8x384xf32> -> vector<8x384xf32>
    %277 = arith.index_cast %c5_i32 : i32 to index
    %c0_64 = arith.constant 0 : index
    %c0_65 = arith.constant 0 : index
    %278 = vector.load %arg16[%277, %c0_64, %c0_65] : memref<8x8x384xbf16, #tpu.memory_space<vmem>>, vector<1x8x384xbf16>
    %279 = vector.shape_cast %278 : vector<1x8x384xbf16> to vector<8x384xbf16>
    %280 = arith.extf %279 : vector<8x384xbf16> to vector<8x384xf32>
    %281 = vector.extract_strided_slice %280 {offsets = [0, 0], sizes = [8, 256], strides = [1, 1]} : vector<8x384xf32> to vector<8x256xf32>
    %282 = vector.extract_strided_slice %274 {offsets = [0, 0], sizes = [8, 256], strides = [1, 1]} : vector<8x384xf32> to vector<8x256xf32>
    %283 = arith.addf %281, %282 : vector<8x256xf32>
    %284 = arith.negf %283 : vector<8x256xf32>
    %285 = math.exp %284 : vector<8x256xf32>
    %cst_66 = arith.constant 1.000000e+00 : f32
    %286 = vector.broadcast %cst_66 : f32 to vector<8x256xf32>
    %287 = arith.addf %286, %285 : vector<8x256xf32>
    %288 = arith.divf %286, %287 : vector<8x256xf32>
    %289 = vector.extract_strided_slice %280 {offsets = [0, 256], sizes = [8, 128], strides = [1, 1]} : vector<8x384xf32> to vector<8x128xf32>
    %290 = vector.extract_strided_slice %288 {offsets = [0, 0], sizes = [8, 128], strides = [1, 1]} : vector<8x256xf32> to vector<8x128xf32>
    %291 = vector.extract_strided_slice %274 {offsets = [0, 256], sizes = [8, 128], strides = [1, 1]} : vector<8x384xf32> to vector<8x128xf32>
    %292 = arith.addf %291, %19 : vector<8x128xf32>
    %293 = arith.mulf %290, %292 : vector<8x128xf32>
    %294 = arith.addf %289, %293 : vector<8x128xf32>
    %295 = math.tanh %294 : vector<8x128xf32>
    %296 = vector.extract_strided_slice %288 {offsets = [0, 128], sizes = [8, 128], strides = [1, 1]} : vector<8x256xf32> to vector<8x128xf32>
    %297 = arith.subf %250, %295 : vector<8x128xf32>
    %298 = arith.mulf %296, %297 : vector<8x128xf32>
    %299 = arith.addf %295, %298 : vector<8x128xf32>
    %300 = arith.truncf %299 : vector<8x128xf32> to vector<8x128xbf16>
    %cst_67 = arith.constant dense<0.000000e+00> : vector<8x384xf32>
    %301 = tpu.matmul %300, %16, %cst_67 {dimension_numbers = #tpu.dot_dimension_numbers<[1], [0], [0], [1], [0, 0, 1, 1], [], []>} : vector<8x128xbf16>, vector<128x384xbf16>, vector<8x384xf32> -> vector<8x384xf32>
    %302 = arith.addf %301, %25 : vector<8x384xf32>
    %303 = vector.extract_strided_slice %302 {offsets = [0, 0], sizes = [8, 256], strides = [1, 1]} : vector<8x384xf32> to vector<8x256xf32>
    %304 = vector.extract_strided_slice %276 {offsets = [0, 0], sizes = [8, 256], strides = [1, 1]} : vector<8x384xf32> to vector<8x256xf32>
    %305 = arith.addf %303, %304 : vector<8x256xf32>
    %306 = arith.negf %305 : vector<8x256xf32>
    %307 = math.exp %306 : vector<8x256xf32>
    %cst_68 = arith.constant 1.000000e+00 : f32
    %308 = vector.broadcast %cst_68 : f32 to vector<8x256xf32>
    %309 = arith.addf %308, %307 : vector<8x256xf32>
    %310 = arith.divf %308, %309 : vector<8x256xf32>
    %311 = vector.extract_strided_slice %302 {offsets = [0, 256], sizes = [8, 128], strides = [1, 1]} : vector<8x384xf32> to vector<8x128xf32>
    %312 = vector.extract_strided_slice %310 {offsets = [0, 0], sizes = [8, 128], strides = [1, 1]} : vector<8x256xf32> to vector<8x128xf32>
    %313 = vector.extract_strided_slice %276 {offsets = [0, 256], sizes = [8, 128], strides = [1, 1]} : vector<8x384xf32> to vector<8x128xf32>
    %314 = arith.addf %313, %22 : vector<8x128xf32>
    %315 = arith.mulf %312, %314 : vector<8x128xf32>
    %316 = arith.addf %311, %315 : vector<8x128xf32>
    %317 = math.tanh %316 : vector<8x128xf32>
    %318 = vector.extract_strided_slice %310 {offsets = [0, 128], sizes = [8, 128], strides = [1, 1]} : vector<8x256xf32> to vector<8x128xf32>
    %319 = arith.subf %272, %317 : vector<8x128xf32>
    %320 = arith.mulf %318, %319 : vector<8x128xf32>
    %321 = arith.addf %317, %320 : vector<8x128xf32>
    %c6_i32 = arith.constant 6 : i32
    %322 = arith.truncf %299 : vector<8x128xf32> to vector<8x128xbf16>
    %cst_69 = arith.constant dense<0.000000e+00> : vector<8x384xf32>
    %323 = tpu.matmul %322, %14, %cst_69 {dimension_numbers = #tpu.dot_dimension_numbers<[1], [0], [0], [1], [0, 0, 1, 1], [], []>} : vector<8x128xbf16>, vector<128x384xbf16>, vector<8x384xf32> -> vector<8x384xf32>
    %324 = arith.truncf %321 : vector<8x128xf32> to vector<8x128xbf16>
    %cst_70 = arith.constant dense<0.000000e+00> : vector<8x384xf32>
    %325 = tpu.matmul %324, %15, %cst_70 {dimension_numbers = #tpu.dot_dimension_numbers<[1], [0], [0], [1], [0, 0, 1, 1], [], []>} : vector<8x128xbf16>, vector<128x384xbf16>, vector<8x384xf32> -> vector<8x384xf32>
    %326 = arith.index_cast %c6_i32 : i32 to index
    %c0_71 = arith.constant 0 : index
    %c0_72 = arith.constant 0 : index
    %327 = vector.load %arg16[%326, %c0_71, %c0_72] : memref<8x8x384xbf16, #tpu.memory_space<vmem>>, vector<1x8x384xbf16>
    %328 = vector.shape_cast %327 : vector<1x8x384xbf16> to vector<8x384xbf16>
    %329 = arith.extf %328 : vector<8x384xbf16> to vector<8x384xf32>
    %330 = vector.extract_strided_slice %329 {offsets = [0, 0], sizes = [8, 256], strides = [1, 1]} : vector<8x384xf32> to vector<8x256xf32>
    %331 = vector.extract_strided_slice %323 {offsets = [0, 0], sizes = [8, 256], strides = [1, 1]} : vector<8x384xf32> to vector<8x256xf32>
    %332 = arith.addf %330, %331 : vector<8x256xf32>
    %333 = arith.negf %332 : vector<8x256xf32>
    %334 = math.exp %333 : vector<8x256xf32>
    %cst_73 = arith.constant 1.000000e+00 : f32
    %335 = vector.broadcast %cst_73 : f32 to vector<8x256xf32>
    %336 = arith.addf %335, %334 : vector<8x256xf32>
    %337 = arith.divf %335, %336 : vector<8x256xf32>
    %338 = vector.extract_strided_slice %329 {offsets = [0, 256], sizes = [8, 128], strides = [1, 1]} : vector<8x384xf32> to vector<8x128xf32>
    %339 = vector.extract_strided_slice %337 {offsets = [0, 0], sizes = [8, 128], strides = [1, 1]} : vector<8x256xf32> to vector<8x128xf32>
    %340 = vector.extract_strided_slice %323 {offsets = [0, 256], sizes = [8, 128], strides = [1, 1]} : vector<8x384xf32> to vector<8x128xf32>
    %341 = arith.addf %340, %19 : vector<8x128xf32>
    %342 = arith.mulf %339, %341 : vector<8x128xf32>
    %343 = arith.addf %338, %342 : vector<8x128xf32>
    %344 = math.tanh %343 : vector<8x128xf32>
    %345 = vector.extract_strided_slice %337 {offsets = [0, 128], sizes = [8, 128], strides = [1, 1]} : vector<8x256xf32> to vector<8x128xf32>
    %346 = arith.subf %299, %344 : vector<8x128xf32>
    %347 = arith.mulf %345, %346 : vector<8x128xf32>
    %348 = arith.addf %344, %347 : vector<8x128xf32>
    %349 = arith.truncf %348 : vector<8x128xf32> to vector<8x128xbf16>
    %cst_74 = arith.constant dense<0.000000e+00> : vector<8x384xf32>
    %350 = tpu.matmul %349, %16, %cst_74 {dimension_numbers = #tpu.dot_dimension_numbers<[1], [0], [0], [1], [0, 0, 1, 1], [], []>} : vector<8x128xbf16>, vector<128x384xbf16>, vector<8x384xf32> -> vector<8x384xf32>
    %351 = arith.addf %350, %25 : vector<8x384xf32>
    %352 = vector.extract_strided_slice %351 {offsets = [0, 0], sizes = [8, 256], strides = [1, 1]} : vector<8x384xf32> to vector<8x256xf32>
    %353 = vector.extract_strided_slice %325 {offsets = [0, 0], sizes = [8, 256], strides = [1, 1]} : vector<8x384xf32> to vector<8x256xf32>
    %354 = arith.addf %352, %353 : vector<8x256xf32>
    %355 = arith.negf %354 : vector<8x256xf32>
    %356 = math.exp %355 : vector<8x256xf32>
    %cst_75 = arith.constant 1.000000e+00 : f32
    %357 = vector.broadcast %cst_75 : f32 to vector<8x256xf32>
    %358 = arith.addf %357, %356 : vector<8x256xf32>
    %359 = arith.divf %357, %358 : vector<8x256xf32>
    %360 = vector.extract_strided_slice %351 {offsets = [0, 256], sizes = [8, 128], strides = [1, 1]} : vector<8x384xf32> to vector<8x128xf32>
    %361 = vector.extract_strided_slice %359 {offsets = [0, 0], sizes = [8, 128], strides = [1, 1]} : vector<8x256xf32> to vector<8x128xf32>
    %362 = vector.extract_strided_slice %325 {offsets = [0, 256], sizes = [8, 128], strides = [1, 1]} : vector<8x384xf32> to vector<8x128xf32>
    %363 = arith.addf %362, %22 : vector<8x128xf32>
    %364 = arith.mulf %361, %363 : vector<8x128xf32>
    %365 = arith.addf %360, %364 : vector<8x128xf32>
    %366 = math.tanh %365 : vector<8x128xf32>
    %367 = vector.extract_strided_slice %359 {offsets = [0, 128], sizes = [8, 128], strides = [1, 1]} : vector<8x256xf32> to vector<8x128xf32>
    %368 = arith.subf %321, %366 : vector<8x128xf32>
    %369 = arith.mulf %367, %368 : vector<8x128xf32>
    %370 = arith.addf %366, %369 : vector<8x128xf32>
    %c7_i32 = arith.constant 7 : i32
    %371 = arith.truncf %348 : vector<8x128xf32> to vector<8x128xbf16>
    %cst_76 = arith.constant dense<0.000000e+00> : vector<8x384xf32>
    %372 = tpu.matmul %371, %14, %cst_76 {dimension_numbers = #tpu.dot_dimension_numbers<[1], [0], [0], [1], [0, 0, 1, 1], [], []>} : vector<8x128xbf16>, vector<128x384xbf16>, vector<8x384xf32> -> vector<8x384xf32>
    %373 = arith.truncf %370 : vector<8x128xf32> to vector<8x128xbf16>
    %cst_77 = arith.constant dense<0.000000e+00> : vector<8x384xf32>
    %374 = tpu.matmul %373, %15, %cst_77 {dimension_numbers = #tpu.dot_dimension_numbers<[1], [0], [0], [1], [0, 0, 1, 1], [], []>} : vector<8x128xbf16>, vector<128x384xbf16>, vector<8x384xf32> -> vector<8x384xf32>
    %375 = arith.index_cast %c7_i32 : i32 to index
    %c0_78 = arith.constant 0 : index
    %c0_79 = arith.constant 0 : index
    %376 = vector.load %arg16[%375, %c0_78, %c0_79] : memref<8x8x384xbf16, #tpu.memory_space<vmem>>, vector<1x8x384xbf16>
    %377 = vector.shape_cast %376 : vector<1x8x384xbf16> to vector<8x384xbf16>
    %378 = arith.extf %377 : vector<8x384xbf16> to vector<8x384xf32>
    %379 = vector.extract_strided_slice %378 {offsets = [0, 0], sizes = [8, 256], strides = [1, 1]} : vector<8x384xf32> to vector<8x256xf32>
    %380 = vector.extract_strided_slice %372 {offsets = [0, 0], sizes = [8, 256], strides = [1, 1]} : vector<8x384xf32> to vector<8x256xf32>
    %381 = arith.addf %379, %380 : vector<8x256xf32>
    %382 = arith.negf %381 : vector<8x256xf32>
    %383 = math.exp %382 : vector<8x256xf32>
    %cst_80 = arith.constant 1.000000e+00 : f32
    %384 = vector.broadcast %cst_80 : f32 to vector<8x256xf32>
    %385 = arith.addf %384, %383 : vector<8x256xf32>
    %386 = arith.divf %384, %385 : vector<8x256xf32>
    %387 = vector.extract_strided_slice %378 {offsets = [0, 256], sizes = [8, 128], strides = [1, 1]} : vector<8x384xf32> to vector<8x128xf32>
    %388 = vector.extract_strided_slice %386 {offsets = [0, 0], sizes = [8, 128], strides = [1, 1]} : vector<8x256xf32> to vector<8x128xf32>
    %389 = vector.extract_strided_slice %372 {offsets = [0, 256], sizes = [8, 128], strides = [1, 1]} : vector<8x384xf32> to vector<8x128xf32>
    %390 = arith.addf %389, %19 : vector<8x128xf32>
    %391 = arith.mulf %388, %390 : vector<8x128xf32>
    %392 = arith.addf %387, %391 : vector<8x128xf32>
    %393 = math.tanh %392 : vector<8x128xf32>
    %394 = vector.extract_strided_slice %386 {offsets = [0, 128], sizes = [8, 128], strides = [1, 1]} : vector<8x256xf32> to vector<8x128xf32>
    %395 = arith.subf %348, %393 : vector<8x128xf32>
    %396 = arith.mulf %394, %395 : vector<8x128xf32>
    %397 = arith.addf %393, %396 : vector<8x128xf32>
    %398 = arith.truncf %397 : vector<8x128xf32> to vector<8x128xbf16>
    %cst_81 = arith.constant dense<0.000000e+00> : vector<8x384xf32>
    %399 = tpu.matmul %398, %16, %cst_81 {dimension_numbers = #tpu.dot_dimension_numbers<[1], [0], [0], [1], [0, 0, 1, 1], [], []>} : vector<8x128xbf16>, vector<128x384xbf16>, vector<8x384xf32> -> vector<8x384xf32>
    %400 = arith.addf %399, %25 : vector<8x384xf32>
    %401 = vector.extract_strided_slice %400 {offsets = [0, 0], sizes = [8, 256], strides = [1, 1]} : vector<8x384xf32> to vector<8x256xf32>
    %402 = vector.extract_strided_slice %374 {offsets = [0, 0], sizes = [8, 256], strides = [1, 1]} : vector<8x384xf32> to vector<8x256xf32>
    %403 = arith.addf %401, %402 : vector<8x256xf32>
    %404 = arith.negf %403 : vector<8x256xf32>
    %405 = math.exp %404 : vector<8x256xf32>
    %cst_82 = arith.constant 1.000000e+00 : f32
    %406 = vector.broadcast %cst_82 : f32 to vector<8x256xf32>
    %407 = arith.addf %406, %405 : vector<8x256xf32>
    %408 = arith.divf %406, %407 : vector<8x256xf32>
    %409 = vector.extract_strided_slice %400 {offsets = [0, 256], sizes = [8, 128], strides = [1, 1]} : vector<8x384xf32> to vector<8x128xf32>
    %410 = vector.extract_strided_slice %408 {offsets = [0, 0], sizes = [8, 128], strides = [1, 1]} : vector<8x256xf32> to vector<8x128xf32>
    %411 = vector.extract_strided_slice %374 {offsets = [0, 256], sizes = [8, 128], strides = [1, 1]} : vector<8x384xf32> to vector<8x128xf32>
    %412 = arith.addf %411, %22 : vector<8x128xf32>
    %413 = arith.mulf %410, %412 : vector<8x128xf32>
    %414 = arith.addf %409, %413 : vector<8x128xf32>
    %415 = math.tanh %414 : vector<8x128xf32>
    %416 = vector.extract_strided_slice %408 {offsets = [0, 128], sizes = [8, 128], strides = [1, 1]} : vector<8x256xf32> to vector<8x128xf32>
    %417 = arith.subf %370, %415 : vector<8x128xf32>
    %418 = arith.mulf %416, %417 : vector<8x128xf32>
    %419 = arith.addf %415, %418 : vector<8x128xf32>
    %c8_i32 = arith.constant 8 : i32
    %c0_83 = arith.constant 0 : index
    %c0_84 = arith.constant 0 : index
    %420 = vector.load %arg14[%c0_83, %c0_84] : memref<8x128xf32, #tpu.memory_space<vmem>>, vector<8x128xf32>
    tpu.vector_store %arg14[%c0_83, %c0_84], %397 {strides = array<i32>} : memref<8x128xf32, #tpu.memory_space<vmem>>, vector<8x128xf32>,
    %c0_85 = arith.constant 0 : index
    %c0_86 = arith.constant 0 : index
    %421 = vector.load %arg15[%c0_85, %c0_86] : memref<8x128xf32, #tpu.memory_space<vmem>>, vector<8x128xf32>
    tpu.vector_store %arg15[%c0_85, %c0_86], %419 {strides = array<i32>} : memref<8x128xf32, #tpu.memory_space<vmem>>, vector<8x128xf32>,
    %c0_i32_87 = arith.constant 0 : i32
    %422 = arith.cmpi eq, %arg1, %c0_i32_87 : i32
    %423 = arith.extui %422 : i1 to i32
    %c0_i32_88 = arith.constant 0 : i32
    %424 = arith.cmpi ne, %423, %c0_i32_88 : i32
    scf.if %424 {
      %425 = arith.truncf %419 : vector<8x128xf32> to vector<8x128xbf16>
      %c0_89 = arith.constant 0 : index
      %c0_90 = arith.constant 0 : index
      %426 = vector.load %arg11[%c0_89, %c0_90] : memref<128x128xbf16, #tpu.memory_space<vmem>>, vector<128x128xbf16>
      %cst_91 = arith.constant dense<0.000000e+00> : vector<8x128xf32>
      %427 = tpu.matmul %425, %426, %cst_91 {dimension_numbers = #tpu.dot_dimension_numbers<[1], [0], [0], [1], [0, 0, 1, 1], [], []>} : vector<8x128xbf16>, vector<128x128xbf16>, vector<8x128xf32> -> vector<8x128xf32>
      %c0_92 = arith.constant 0 : index
      %c0_93 = arith.constant 0 : index
      %428 = vector.load %arg12[%c0_92, %c0_93] : memref<1x128xf32, #tpu.memory_space<vmem>>, vector<1x128xf32>
      %429 = vector.broadcast %428 : vector<1x128xf32> to vector<8x128xf32>
      %430 = arith.addf %427, %429 : vector<8x128xf32>
      %cst_94 = arith.constant dense<0xFF800000> : vector<8xf32>
      %431 = vector.multi_reduction <maximumf>, %430, %cst_94 [1] : vector<8x128xf32> to vector<8xf32>
      %432 = vector.shape_cast %431 : vector<8xf32> to vector<8x1xf32>
      %433 = vector.broadcast %432 : vector<8x1xf32> to vector<8x128xf32>
      %434 = arith.subf %430, %433 : vector<8x128xf32>
      %435 = math.exp %434 : vector<8x128xf32>
      %cst_95 = arith.constant dense<0.000000e+00> : vector<8xf32>
      %436 = vector.multi_reduction <add>, %435, %cst_95 [1] : vector<8x128xf32> to vector<8xf32>
      %437 = vector.shape_cast %436 : vector<8xf32> to vector<8x1xf32>
      %438 = vector.broadcast %437 : vector<8x1xf32> to vector<8x128xf32>
      %439 = arith.divf %435, %438 : vector<8x128xf32>
      %c0_96 = arith.constant 0 : index
      %c0_97 = arith.constant 0 : index
      %440 = vector.load %arg13[%c0_96, %c0_97] : memref<8x128xf32, #tpu.memory_space<vmem>>, vector<8x128xf32>
      tpu.vector_store %arg13[%c0_96, %c0_97], %439 {strides = array<i32>} : memref<8x128xf32, #tpu.memory_space<vmem>>, vector<8x128xf32>,
    } else {
    }
    return
  }
  func.func @transform_0(%arg0: i32, %arg1: i32) -> (i32, i32, i32) {
    %c0_i32 = arith.constant 0 : i32
    %c0_i32_0 = arith.constant 0 : i32
    return %arg1, %arg0, %c0_i32 : i32, i32, i32
  }
  func.func @transform_1(%arg0: i32, %arg1: i32) -> (i32, i32) {
    %c0_i32 = arith.constant 0 : i32
    %c0_i32_0 = arith.constant 0 : i32
    %c0_i32_1 = arith.constant 0 : i32
    return %c0_i32, %c0_i32_0 : i32, i32
  }
  func.func @transform_2(%arg0: i32, %arg1: i32) -> (i32, i32) {
    %c0_i32 = arith.constant 0 : i32
    %c0_i32_0 = arith.constant 0 : i32
    %c0_i32_1 = arith.constant 0 : i32
    return %c0_i32, %c0_i32_0 : i32, i32
  }
  func.func @transform_3(%arg0: i32, %arg1: i32) -> (i32, i32) {
    %c0_i32 = arith.constant 0 : i32
    %c0_i32_0 = arith.constant 0 : i32
    %c0_i32_1 = arith.constant 0 : i32
    return %c0_i32, %c0_i32_0 : i32, i32
  }
  func.func @transform_4(%arg0: i32, %arg1: i32) -> (i32, i32) {
    %c0_i32 = arith.constant 0 : i32
    %c0_i32_0 = arith.constant 0 : i32
    %c0_i32_1 = arith.constant 0 : i32
    return %c0_i32, %c0_i32_0 : i32, i32
  }
  func.func @transform_5(%arg0: i32, %arg1: i32) -> (i32, i32) {
    %c0_i32 = arith.constant 0 : i32
    %c0_i32_0 = arith.constant 0 : i32
    %c0_i32_1 = arith.constant 0 : i32
    return %c0_i32, %c0_i32_0 : i32, i32
  }
  func.func @transform_6(%arg0: i32, %arg1: i32) -> (i32, i32) {
    %c0_i32 = arith.constant 0 : i32
    %c0_i32_0 = arith.constant 0 : i32
    %c0_i32_1 = arith.constant 0 : i32
    return %c0_i32, %c0_i32_0 : i32, i32
  }
  func.func @transform_7(%arg0: i32, %arg1: i32) -> (i32, i32) {
    %c0_i32 = arith.constant 0 : i32
    %c0_i32_0 = arith.constant 0 : i32
    %c0_i32_1 = arith.constant 0 : i32
    return %c0_i32, %c0_i32_0 : i32, i32
  }
  func.func @transform_8(%arg0: i32, %arg1: i32) -> (i32, i32) {
    %c0_i32 = arith.constant 0 : i32
    %c0_i32_0 = arith.constant 0 : i32
    %c0_i32_1 = arith.constant 0 : i32
    return %c0_i32, %c0_i32_0 : i32, i32
  }
  func.func @transform_9(%arg0: i32, %arg1: i32) -> (i32, i32) {
    %c0_i32 = arith.constant 0 : i32
    %c0_i32_0 = arith.constant 0 : i32
    %c0_i32_1 = arith.constant 0 : i32
    return %c0_i32, %c0_i32_0 : i32, i32
  }
  func.func @transform_10(%arg0: i32, %arg1: i32) -> (i32, i32) {
    %c0_i32 = arith.constant 0 : i32
    %c0_i32_0 = arith.constant 0 : i32
    %c0_i32_1 = arith.constant 0 : i32
    return %c0_i32, %c0_i32_0 : i32, i32
  }
  func.func @transform_11(%arg0: i32, %arg1: i32) -> (i32, i32) {
    %c0_i32 = arith.constant 0 : i32
    %c0_i32_0 = arith.constant 0 : i32
    return %arg0, %c0_i32 : i32, i32
  }
}

</mosaic_0001>

<llo_original>
// kernel: discriminator_forward.1
$region0: #{discriminator_forward.1}
  #allocation0 [shape = 'u32[]', space=smem, size = 0x4, offset = 0x4, fixed_abs, tag = 'smem constant byte address 0x4 - core index']
  #allocation1 [shape = 'u32[72,128]{1,0:T(1,128)}', space=vmem, size = 0x9000, scoped, tag = 'internal scratch']
  #allocation2 [shape = 'f32[8,128]{1,0:T(8,128)}', space=vmem, size = 0x1000, scoped, tag = 'scratch operand']
  #allocation3 [shape = 'f32[8,128]{1,0:T(8,128)}', space=vmem, size = 0x1000, scoped, tag = 'scratch operand']
  #allocation4 [shape = 'bf16[8,8,384]{2,1,0:T(8,128)(2,1)}', space=vmem, size = 0xc000, scoped, tag = 'scratch operand']
  %s0 = inlined_call_operand.vmem [shape: f32[8,8,8], index: 0, kind: input, shape index: {}]
  %s1 = inlined_call_operand.vmem [shape: bf16[8,384], index: 1, kind: input, shape index: {}]
  %s2 = inlined_call_operand.vmem [shape: f32[1,384], index: 2, kind: input, shape index: {}]
  %s3 = inlined_call_operand.vmem [shape: bf16[128,384], index: 3, kind: input, shape index: {}]
  %s4 = inlined_call_operand.vmem [shape: f32[1,128], index: 4, kind: input, shape index: {}]
  %s5 = inlined_call_operand.vmem [shape: bf16[128,384], index: 5, kind: input, shape index: {}]
  %s6 = inlined_call_operand.vmem [shape: f32[1,384], index: 6, kind: input, shape index: {}]
  %s7 = inlined_call_operand.vmem [shape: bf16[128,384], index: 7, kind: input, shape index: {}]
  %s8 = inlined_call_operand.vmem [shape: f32[1,128], index: 8, kind: input, shape index: {}]
  %s9 = inlined_call_operand.vmem [shape: bf16[128,128], index: 9, kind: input, shape index: {}]
  %s10 = inlined_call_operand.vmem [shape: f32[1,128], index: 10, kind: input, shape index: {}]
  %s11 = inlined_call_operand.vmem [shape: f32[8,128], index: 11, kind: output, shape index: {}]
  %s12 = sld [smem:[#allocation0]]
  $region62: #{discriminator_forward.1} parent=0
    _
  %s14 = ssub.s32 1, %s12
  %s15 = scalar_select 0, %s14, %s12
  // Predicated region
  $region2: #{discriminator_forward.1} parent=0 // pred_check
    _
  $region3: #{discriminator_forward.1} parent=0 // pred_check_branch
    %17 = sbr.rel (0) target = $region5
  $region4: #{discriminator_forward.1} parent=0 // pred_region
    _
  $region5: #{discriminator_forward.1} parent=0 // pred_fallthru
    _
  // Predicated region
  $region6: #{discriminator_forward.1} parent=0 // pred_check
    _
  $region7: #{discriminator_forward.1} parent=0 // pred_check_branch
    %19 = sbr.rel (0) target = $region9
  $region8: #{discriminator_forward.1} parent=0 // pred_region
    _
  $region9: #{discriminator_forward.1} parent=0 // pred_fallthru
    _
  // Predicated region
  $region10: #{discriminator_forward.1} parent=0 // pred_check
    _
  $region11: #{discriminator_forward.1} parent=0 // pred_check_branch
    %21 = sbr.rel (0) target = $region13
  $region12: #{discriminator_forward.1} parent=0 // pred_region
    _
  $region13: #{discriminator_forward.1} parent=0 // pred_fallthru
    _
  // Predicated region
  $region14: #{discriminator_forward.1} parent=0 // pred_check
    _
  $region15: #{discriminator_forward.1} parent=0 // pred_check_branch
    %23 = sbr.rel (0) target = $region17
  $region16: #{discriminator_forward.1} parent=0 // pred_region
    _
  $region17: #{discriminator_forward.1} parent=0 // pred_fallthru
    _
  // Predicated region
  $region18: #{discriminator_forward.1} parent=0 // pred_check
    _
  $region19: #{discriminator_forward.1} parent=0 // pred_check_branch
    %25 = sbr.rel (0) target = $region21
  $region20: #{discriminator_forward.1} parent=0 // pred_region
    _
  $region21: #{discriminator_forward.1} parent=0 // pred_fallthru
    _
  // Predicated region
  $region22: #{discriminator_forward.1} parent=0 // pred_check
    _
  $region23: #{discriminator_forward.1} parent=0 // pred_check_branch
    %27 = sbr.rel (0) target = $region25
  $region24: #{discriminator_forward.1} parent=0 // pred_region
    _
  $region25: #{discriminator_forward.1} parent=0 // pred_fallthru
    _
  // Predicated region
  $region26: #{discriminator_forward.1} parent=0 // pred_check
    _
  $region27: #{discriminator_forward.1} parent=0 // pred_check_branch
    %29 = sbr.rel (0) target = $region29
  $region28: #{discriminator_forward.1} parent=0 // pred_region
    _
  $region29: #{discriminator_forward.1} parent=0 // pred_fallthru
    _
  // Predicated region
  $region30: #{discriminator_forward.1} parent=0 // pred_check
    _
  $region31: #{discriminator_forward.1} parent=0 // pred_check_branch
    %31 = sbr.rel (0) target = $region33
  $region32: #{discriminator_forward.1} parent=0 // pred_region
    _
  $region33: #{discriminator_forward.1} parent=0 // pred_fallthru
    _
  // Predicated region
  $region34: #{discriminator_forward.1} parent=0 // pred_check
    _
  $region35: #{discriminator_forward.1} parent=0 // pred_check_branch
    %33 = sbr.rel (0) target = $region37
  $region36: #{discriminator_forward.1} parent=0 // pred_region
    _
  $region37: #{discriminator_forward.1} parent=0 // pred_fallthru
    _
  // Predicated region
  $region38: #{discriminator_forward.1} parent=0 // pred_check
    _
  $region39: #{discriminator_forward.1} parent=0 // pred_check_branch
    %35 = sbr.rel (0) target = $region41
  $region40: #{discriminator_forward.1} parent=0 // pred_region
    _
  $region41: #{discriminator_forward.1} parent=0 // pred_fallthru
    _
  // Predicated region
  $region42: #{discriminator_forward.1} parent=0 // pred_check
    _
  $region43: #{discriminator_forward.1} parent=0 // pred_check_branch
    %37 = sbr.rel (0) target = $region45
  $region44: #{discriminator_forward.1} parent=0 // pred_region
    _
  $region45: #{discriminator_forward.1} parent=0 // pred_fallthru
    _
  %p39 = scmp.eq.s32.totalorder 0, 0
  // Predicated region
  $region46: #{discriminator_forward.1} parent=0 // pred_check
    %p40 = pneg %p39
  $region47: #{discriminator_forward.1} parent=0 // pred_check_branch
    %42 = sbr.rel (%p40) target = $region49
  $region48: #{discriminator_forward.1} parent=0 // pred_region
    %43 = vst [vmem:[#allocation2] sm:$0xff] 0.0
    %44 = vst [vmem:[#allocation3] sm:$0xff] 0.0
  $region49: #{discriminator_forward.1} parent=0 // pred_fallthru
    _
  %v45 = vld [vmem:[%s0] sm:$0xff]
  %v46 = vld [vmem:[%s0 + $0x8] sm:$0xff]
  %v47 = vld [vmem:[%s0 + $0x10] sm:$0xff]
  %v48 = vld [vmem:[%s0 + $0x18] sm:$0xff]
  %v49 = vld [vmem:[%s0 + $0x20] sm:$0xff]
  %v50 = vld [vmem:[%s0 + $0x28] sm:$0xff]
  %v51 = vld [vmem:[%s0 + $0x30] sm:$0xff]
  %v52 = vld [vmem:[%s0 + $0x38] sm:$0xff]
  %v53 = vpack.c.bf16 %v45, %v45
  %v54 = vpack.c.bf16 %v46, %v46
  %v55 = vpack.c.bf16 %v47, %v47
  %v56 = vpack.c.bf16 %v48, %v48
  %v57 = vpack.c.bf16 %v49, %v49
  %v58 = vpack.c.bf16 %v50, %v50
  %v59 = vpack.c.bf16 %v51, %v51
  %v60 = vpack.c.bf16 %v52, %v52
  %v61 = vld [vmem:[%s1] sm:$0xff]
  %v62 = vld [vmem:[%s1 + $0x8] sm:$0xf]
  %v63 = vld [vmem:[%s2] sm:$0x7]
  %v65 = vperm.slane %v63, 0
  %v66 = vperm.slane %v63, 1
  %v67 = vperm.slane %v63, 2
  %v79 = vunpack.c.l.b16 %v53
  %v80 = vunpack.c.l.b16 %v54
  %v81 = vunpack.c.l.b16 %v55
  %v82 = vunpack.c.l.b16 %v56
  %v83 = vunpack.c.l.b16 %v57
  %v84 = vunpack.c.l.b16 %v58
  %v85 = vunpack.c.l.b16 %v59
  %v86 = vunpack.c.l.b16 %v60
  %v87 = vpack.c.b16 %v80, %v79
  %v88 = vpack.c.b16 %v82, %v81
  %v89 = vpack.c.b16 %v84, %v83
  %v90 = vpack.c.b16 %v86, %v85
  %v93 = vunpack.c.l.b16 %v61
  %v94 = vunpack.c.h.b16 %v61
  %v95 = vunpack.c.l.b16 %v62
  %v96 = vpack.c.b16 %v93, %v93
  %v97 = vpack.c.b16 %v94, %v94
  %v98 = vpack.c.b16 %v95, %v95
  %vm99 = vcmask 64512
  %v101 = vsel %vm99, %v87, 0
  %v104 = vsel %vm99, %v88, 0
  %v107 = vsel %vm99, %v89, 0
  %v110 = vsel %vm99, %v90, 0
  %vm112 = vcmask 1043456
  %v114 = vsel %vm112, %v96, 0
  %v117 = vsel %vm112, %v97, 0
  %v120 = vsel %vm112, %v98, 0
  %122 = vmatpush.bf16.msra.mxu0 0
  %123 = vmatpush.bf16.msra.mxu0 0
  %124 = vmatpush.bf16.msra.mxu0 0
  %125 = vmatpush.bf16.msra.mxu0 0
  %126 = vmatpush.bf16.msra.mxu0 0
  %127 = vmatpush.bf16.msra.mxu0 0
  %128 = vmatpush.bf16.msra.mxu0 0
  %129 = vmatpush.bf16.msra.mxu0 %v114
  %130 = vmatmul.bf16.gmra.mxu0 %v101
  %v131 = vpop.f32.mrf.mxu0
  %v132 = vadd.f32 %v65, %v131
  %v133 = vpop.f32.mrf.mxu0
  %v134 = vadd.f32 %v65, %v133
  %135 = vmatmul.bf16.gmra.mxu0 %v104
  %v136 = vpop.f32.mrf.mxu0
  %v137 = vadd.f32 %v65, %v136
  %v138 = vpop.f32.mrf.mxu0
  %v139 = vadd.f32 %v65, %v138
  %140 = vmatmul.bf16.gmra.mxu0 %v107
  %v141 = vpop.f32.mrf.mxu0
  %v142 = vadd.f32 %v65, %v141
  %v143 = vpop.f32.mrf.mxu0
  %v144 = vadd.f32 %v65, %v143
  %145 = vmatmul.bf16.gmra.mxu0 %v110
  %v146 = vpop.f32.mrf.mxu0
  %v147 = vadd.f32 %v65, %v146
  %v148 = vpop.f32.mrf.mxu0
  %v149 = vadd.f32 %v65, %v148
  %150 = vdwg.mxu0
  %151 = vmatpush.bf16.msra.mxu0 0
  %152 = vmatpush.bf16.msra.mxu0 0
  %153 = vmatpush.bf16.msra.mxu0 0
  %154 = vmatpush.bf16.msra.mxu0 0
  %155 = vmatpush.bf16.msra.mxu0 0
  %156 = vmatpush.bf16.msra.mxu0 0
  %157 = vmatpush.bf16.msra.mxu0 0
  %158 = vmatpush.bf16.msra.mxu0 %v117
  %159 = vmatmul.bf16.gmra.mxu0 %v101
  %v160 = vpop.f32.mrf.mxu0
  %v161 = vadd.f32 %v66, %v160
  %v162 = vpop.f32.mrf.mxu0
  %v163 = vadd.f32 %v66, %v162
  %164 = vmatmul.bf16.gmra.mxu0 %v104
  %v165 = vpop.f32.mrf.mxu0
  %v166 = vadd.f32 %v66, %v165
  %v167 = vpop.f32.mrf.mxu0
  %v168 = vadd.f32 %v66, %v167
  %169 = vmatmul.bf16.gmra.mxu0 %v107
  %v170 = vpop.f32.mrf.mxu0
  %v171 = vadd.f32 %v66, %v170
  %v172 = vpop.f32.mrf.mxu0
  %v173 = vadd.f32 %v66, %v172
  %174 = vmatmul.bf16.gmra.mxu0 %v110
  %v175 = vpop.f32.mrf.mxu0
  %v176 = vadd.f32 %v66, %v175
  %v177 = vpop.f32.mrf.mxu0
  %v178 = vadd.f32 %v66, %v177
  %179 = vdwg.mxu0
  %180 = vmatpush.bf16.msra.mxu0 0
  %181 = vmatpush.bf16.msra.mxu0 0
  %182 = vmatpush.bf16.msra.mxu0 0
  %183 = vmatpush.bf16.msra.mxu0 0
  %184 = vmatpush.bf16.msra.mxu0 0
  %185 = vmatpush.bf16.msra.mxu0 0
  %186 = vmatpush.bf16.msra.mxu0 0
  %187 = vmatpush.bf16.msra.mxu0 %v120
  %188 = vmatmul.bf16.gmra.mxu0 %v101
  %v189 = vpop.f32.mrf.mxu0
  %v190 = vadd.f32 %v67, %v189
  %v191 = vpop.f32.mrf.mxu0
  %v192 = vadd.f32 %v67, %v191
  %193 = vmatmul.bf16.gmra.mxu0 %v104
  %v194 = vpop.f32.mrf.mxu0
  %v195 = vadd.f32 %v67, %v194
  %v196 = vpop.f32.mrf.mxu0
  %v197 = vadd.f32 %v67, %v196
  %198 = vmatmul.bf16.gmra.mxu0 %v107
  %v199 = vpop.f32.mrf.mxu0
  %v200 = vadd.f32 %v67, %v199
  %v201 = vpop.f32.mrf.mxu0
  %v202 = vadd.f32 %v67, %v201
  %203 = vmatmul.bf16.gmra.mxu0 %v110
  %v204 = vpop.f32.mrf.mxu0
  %v205 = vadd.f32 %v67, %v204
  %v206 = vpop.f32.mrf.mxu0
  %v207 = vadd.f32 %v67, %v206
  %208 = vdwg.mxu0
  %v209 = vpack.c.bf16 %v161, %v132
  %v210 = vpack.c.bf16 %v190, %v190
  %v211 = vpack.c.bf16 %v163, %v134
  %v212 = vpack.c.bf16 %v192, %v192
  %v213 = vpack.c.bf16 %v166, %v137
  %v214 = vpack.c.bf16 %v195, %v195
  %v215 = vpack.c.bf16 %v168, %v139
  %v216 = vpack.c.bf16 %v197, %v197
  %v217 = vpack.c.bf16 %v171, %v142
  %v218 = vpack.c.bf16 %v200, %v200
  %v219 = vpack.c.bf16 %v173, %v144
  %v220 = vpack.c.bf16 %v202, %v202
  %v221 = vpack.c.bf16 %v176, %v147
  %v222 = vpack.c.bf16 %v205, %v205
  %v223 = vpack.c.bf16 %v178, %v149
  %v224 = vpack.c.bf16 %v207, %v207
  %225 = vst [vmem:[#allocation4] sm:$0xff] %v209
  %226 = vst [vmem:[#allocation4 + $0x8] sm:$0xf] %v210
  %227 = vst [vmem:[#allocation4 + $0xc] sm:$0xff] %v211
  %228 = vst [vmem:[#allocation4 + $0x14] sm:$0xf] %v212
  %229 = vst [vmem:[#allocation4 + $0x18] sm:$0xff] %v213
  %230 = vst [vmem:[#allocation4 + $0x20] sm:$0xf] %v214
  %231 = vst [vmem:[#allocation4 + $0x24] sm:$0xff] %v215
  %232 = vst [vmem:[#allocation4 + $0x2c] sm:$0xf] %v216
  %233 = vst [vmem:[#allocation4 + $0x30] sm:$0xff] %v217
  %234 = vst [vmem:[#allocation4 + $0x38] sm:$0xf] %v218
  %235 = vst [vmem:[#allocation4 + $0x3c] sm:$0xff] %v219
  %236 = vst [vmem:[#allocation4 + $0x44] sm:$0xf] %v220
  %237 = vst [vmem:[#allocation4 + $0x48] sm:$0xff] %v221
  %238 = vst [vmem:[#allocation4 + $0x50] sm:$0xf] %v222
  %239 = vst [vmem:[#allocation4 + $0x54] sm:$0xff] %v223
  %240 = vst [vmem:[#allocation4 + $0x5c] sm:$0xf] %v224
  %v241 = vld [vmem:[%s3] sm:$0xff]
  %v242 = vld [vmem:[%s3 + $0x8] sm:$0xf]
  %v243 = vld [vmem:[%s3 + $0xc] sm:$0xff]
  %v244 = vld [vmem:[%s3 + $0x14] sm:$0xf]
  %v245 = vld [vmem:[%s3 + $0x18] sm:$0xff]
  %v246 = vld [vmem:[%s3 + $0x20] sm:$0xf]
  %v247 = vld [vmem:[%s3 + $0x24] sm:$0xff]
  %v248 = vld [vmem:[%s3 + $0x2c] sm:$0xf]
  %v249 = vld [vmem:[%s3 + $0x30] sm:$0xff]
  %v250 = vld [vmem:[%s3 + $0x38] sm:$0xf]
  %v251 = vld [vmem:[%s3 + $0x3c] sm:$0xff]
  %v252 = vld [vmem:[%s3 + $0x44] sm:$0xf]
  %v253 = vld [vmem:[%s3 + $0x48] sm:$0xff]
  %v254 = vld [vmem:[%s3 + $0x50] sm:$0xf]
  %v255 = vld [vmem:[%s3 + $0x54] sm:$0xff]
  %v256 = vld [vmem:[%s3 + $0x5c] sm:$0xf]
  %v257 = vld [vmem:[%s3 + $0x60] sm:$0xff]
  %v258 = vld [vmem:[%s3 + $0x68] sm:$0xf]
  %v259 = vld [vmem:[%s3 + $0x6c] sm:$0xff]
  %v260 = vld [vmem:[%s3 + $0x74] sm:$0xf]
  %v261 = vld [vmem:[%s3 + $0x78] sm:$0xff]
  %v262 = vld [vmem:[%s3 + $0x80] sm:$0xf]
  %v263 = vld [vmem:[%s3 + $0x84] sm:$0xff]
  %v264 = vld [vmem:[%s3 + $0x8c] sm:$0xf]
  %v265 = vld [vmem:[%s3 + $0x90] sm:$0xff]
  %v266 = vld [vmem:[%s3 + $0x98] sm:$0xf]
  %v267 = vld [vmem:[%s3 + $0x9c] sm:$0xff]
  %v268 = vld [vmem:[%s3 + $0xa4] sm:$0xf]
  %v269 = vld [vmem:[%s3 + $0xa8] sm:$0xff]
  %v270 = vld [vmem:[%s3 + $0xb0] sm:$0xf]
  %v271 = vld [vmem:[%s3 + $0xb4] sm:$0xff]
  %v272 = vld [vmem:[%s3 + $0xbc] sm:$0xf]
  %v273 = vld [vmem:[%s7] sm:$0xff]
  %v274 = vld [vmem:[%s7 + $0x8] sm:$0xf]
  %v275 = vld [vmem:[%s7 + $0xc] sm:$0xff]
  %v276 = vld [vmem:[%s7 + $0x14] sm:$0xf]
  %v277 = vld [vmem:[%s7 + $0x18] sm:$0xff]
  %v278 = vld [vmem:[%s7 + $0x20] sm:$0xf]
  %v279 = vld [vmem:[%s7 + $0x24] sm:$0xff]
  %v280 = vld [vmem:[%s7 + $0x2c] sm:$0xf]
  %v281 = vld [vmem:[%s7 + $0x30] sm:$0xff]
  %v282 = vld [vmem:[%s7 + $0x38] sm:$0xf]
  %v283 = vld [vmem:[%s7 + $0x3c] sm:$0xff]
  %v284 = vld [vmem:[%s7 + $0x44] sm:$0xf]
  %v285 = vld [vmem:[%s7 + $0x48] sm:$0xff]
  %v286 = vld [vmem:[%s7 + $0x50] sm:$0xf]
  %v287 = vld [vmem:[%s7 + $0x54] sm:$0xff]
  %v288 = vld [vmem:[%s7 + $0x5c] sm:$0xf]
  %v289 = vld [vmem:[%s7 + $0x60] sm:$0xff]
  %v290 = vld [vmem:[%s7 + $0x68] sm:$0xf]
  %v291 = vld [vmem:[%s7 + $0x6c] sm:$0xff]
  %v292 = vld [vmem:[%s7 + $0x74] sm:$0xf]
  %v293 = vld [vmem:[%s7 + $0x78] sm:$0xff]
  %v294 = vld [vmem:[%s7 + $0x80] sm:$0xf]
  %v295 = vld [vmem:[%s7 + $0x84] sm:$0xff]
  %v296 = vld [vmem:[%s7 + $0x8c] sm:$0xf]
  %v297 = vld [vmem:[%s7 + $0x90] sm:$0xff]
  %v298 = vld [vmem:[%s7 + $0x98] sm:$0xf]
  %v299 = vld [vmem:[%s7 + $0x9c] sm:$0xff]
  %v300 = vld [vmem:[%s7 + $0xa4] sm:$0xf]
  %v301 = vld [vmem:[%s7 + $0xa8] sm:$0xff]
  %v302 = vld [vmem:[%s7 + $0xb0] sm:$0xf]
  %v303 = vld [vmem:[%s7 + $0xb4] sm:$0xff]
  %v304 = vld [vmem:[%s7 + $0xbc] sm:$0xf]
  %v305 = vld [vmem:[%s5] sm:$0xff]
  %v306 = vld [vmem:[%s5 + $0x8] sm:$0xf]
  %v307 = vld [vmem:[%s5 + $0xc] sm:$0xff]
  %v308 = vld [vmem:[%s5 + $0x14] sm:$0xf]
  %v309 = vld [vmem:[%s5 + $0x18] sm:$0xff]
  %v310 = vld [vmem:[%s5 + $0x20] sm:$0xf]
  %v311 = vld [vmem:[%s5 + $0x24] sm:$0xff]
  %v312 = vld [vmem:[%s5 + $0x2c] sm:$0xf]
  %v313 = vld [vmem:[%s5 + $0x30] sm:$0xff]
  %v314 = vld [vmem:[%s5 + $0x38] sm:$0xf]
  %v315 = vld [vmem:[%s5 + $0x3c] sm:$0xff]
  %v316 = vld [vmem:[%s5 + $0x44] sm:$0xf]
  %v317 = vld [vmem:[%s5 + $0x48] sm:$0xff]
  %v318 = vld [vmem:[%s5 + $0x50] sm:$0xf]
  %v319 = vld [vmem:[%s5 + $0x54] sm:$0xff]
  %v320 = vld [vmem:[%s5 + $0x5c] sm:$0xf]
  %v321 = vld [vmem:[%s5 + $0x60] sm:$0xff]
  %v322 = vld [vmem:[%s5 + $0x68] sm:$0xf]
  %v323 = vld [vmem:[%s5 + $0x6c] sm:$0xff]
  %v324 = vld [vmem:[%s5 + $0x74] sm:$0xf]
  %v325 = vld [vmem:[%s5 + $0x78] sm:$0xff]
  %v326 = vld [vmem:[%s5 + $0x80] sm:$0xf]
  %v327 = vld [vmem:[%s5 + $0x84] sm:$0xff]
  %v328 = vld [vmem:[%s5 + $0x8c] sm:$0xf]
  %v329 = vld [vmem:[%s5 + $0x90] sm:$0xff]
  %v330 = vld [vmem:[%s5 + $0x98] sm:$0xf]
  %v331 = vld [vmem:[%s5 + $0x9c] sm:$0xff]
  %v332 = vld [vmem:[%s5 + $0xa4] sm:$0xf]
  %v333 = vld [vmem:[%s5 + $0xa8] sm:$0xff]
  %v334 = vld [vmem:[%s5 + $0xb0] sm:$0xf]
  %v335 = vld [vmem:[%s5 + $0xb4] sm:$0xff]
  %v336 = vld [vmem:[%s5 + $0xbc] sm:$0xf]
  %v337 = vld [vmem:[%s4] sm:$0x1]
  %v339 = vperm.slane %v337, 0
  %v341 = vld [vmem:[%s8] sm:$0x1]
  %v343 = vperm.slane %v341, 0
  %v345 = vld [vmem:[%s6] sm:$0x7]
  %v347 = vperm.slane %v345, 0
  %v348 = vperm.slane %v345, 1
  %v349 = vperm.slane %v345, 2
  %v353 = vld [vmem:[#allocation2] sm:$0xff]
  %v354 = vld [vmem:[#allocation3] sm:$0xff]
  %v355 = vpack.c.bf16 %v353, %v353
  %v388 = vunpack.c.l.b16 %v241
  %v389 = vunpack.c.h.b16 %v241
  %v390 = vunpack.c.l.b16 %v242
  %v391 = vunpack.c.l.b16 %v243
  %v392 = vunpack.c.h.b16 %v243
  %v393 = vunpack.c.l.b16 %v244
  %v394 = vunpack.c.l.b16 %v245
  %v395 = vunpack.c.h.b16 %v245
  %v396 = vunpack.c.l.b16 %v246
  %v397 = vunpack.c.l.b16 %v247
  %v398 = vunpack.c.h.b16 %v247
  %v399 = vunpack.c.l.b16 %v248
  %v400 = vunpack.c.l.b16 %v249
  %v401 = vunpack.c.h.b16 %v249
  %v402 = vunpack.c.l.b16 %v250
  %v403 = vunpack.c.l.b16 %v251
  %v404 = vunpack.c.h.b16 %v251
  %v405 = vunpack.c.l.b16 %v252
  %v406 = vunpack.c.l.b16 %v253
  %v407 = vunpack.c.h.b16 %v253
  %v408 = vunpack.c.l.b16 %v254
  %v409 = vunpack.c.l.b16 %v255
  %v410 = vunpack.c.h.b16 %v255
  %v411 = vunpack.c.l.b16 %v256
  %v412 = vunpack.c.l.b16 %v257
  %v413 = vunpack.c.h.b16 %v257
  %v414 = vunpack.c.l.b16 %v258
  %v415 = vunpack.c.l.b16 %v259
  %v416 = vunpack.c.h.b16 %v259
  %v417 = vunpack.c.l.b16 %v260
  %v418 = vunpack.c.l.b16 %v261
  %v419 = vunpack.c.h.b16 %v261
  %v420 = vunpack.c.l.b16 %v262
  %v421 = vunpack.c.l.b16 %v263
  %v422 = vunpack.c.h.b16 %v263
  %v423 = vunpack.c.l.b16 %v264
  %v424 = vunpack.c.l.b16 %v265
  %v425 = vunpack.c.h.b16 %v265
  %v426 = vunpack.c.l.b16 %v266
  %v427 = vunpack.c.l.b16 %v267
  %v428 = vunpack.c.h.b16 %v267
  %v429 = vunpack.c.l.b16 %v268
  %v430 = vunpack.c.l.b16 %v269
  %v431 = vunpack.c.h.b16 %v269
  %v432 = vunpack.c.l.b16 %v270
  %v433 = vunpack.c.l.b16 %v271
  %v434 = vunpack.c.h.b16 %v271
  %v435 = vunpack.c.l.b16 %v272
  %v436 = vpack.c.b16 %v391, %v388
  %v437 = vpack.c.b16 %v392, %v389
  %v438 = vpack.c.b16 %v393, %v390
  %v439 = vpack.c.b16 %v397, %v394
  %v440 = vpack.c.b16 %v398, %v395
  %v441 = vpack.c.b16 %v399, %v396
  %v442 = vpack.c.b16 %v403, %v400
  %v443 = vpack.c.b16 %v404, %v401
  %v444 = vpack.c.b16 %v405, %v402
  %v445 = vpack.c.b16 %v409, %v406
  %v446 = vpack.c.b16 %v410, %v407
  %v447 = vpack.c.b16 %v411, %v408
  %v448 = vpack.c.b16 %v415, %v412
  %v449 = vpack.c.b16 %v416, %v413
  %v450 = vpack.c.b16 %v417, %v414
  %v451 = vpack.c.b16 %v421, %v418
  %v452 = vpack.c.b16 %v422, %v419
  %v453 = vpack.c.b16 %v423, %v420
  %v454 = vpack.c.b16 %v427, %v424
  %v455 = vpack.c.b16 %v428, %v425
  %v456 = vpack.c.b16 %v429, %v426
  %v457 = vpack.c.b16 %v433, %v430
  %v458 = vpack.c.b16 %v434, %v431
  %v459 = vpack.c.b16 %v435, %v432
  %484 = vmatpush.bf16.msra.mxu0 %v457
  %485 = vmatpush.bf16.msra.mxu0 %v454
  %486 = vmatpush.bf16.msra.mxu0 %v451
  %487 = vmatpush.bf16.msra.mxu0 %v448
  %488 = vmatpush.bf16.msra.mxu0 %v445
  %489 = vmatpush.bf16.msra.mxu0 %v442
  %490 = vmatpush.bf16.msra.mxu0 %v439
  %491 = vmatpush.bf16.msra.mxu0 %v436
  %492 = vmatmul.bf16.gmra.mxu0 %v355
  %v493 = vpop.f32.mrf.mxu0
  %v494 = vadd.f32 0.0, %v493
  %v495 = vpop.f32.mrf.mxu0
  %496 = vdwg.mxu0
  %497 = vmatpush.bf16.msra.mxu0 %v458
  %498 = vmatpush.bf16.msra.mxu0 %v455
  %499 = vmatpush.bf16.msra.mxu0 %v452
  %500 = vmatpush.bf16.msra.mxu0 %v449
  %501 = vmatpush.bf16.msra.mxu0 %v446
  %502 = vmatpush.bf16.msra.mxu0 %v443
  %503 = vmatpush.bf16.msra.mxu0 %v440
  %504 = vmatpush.bf16.msra.mxu0 %v437
  %505 = vmatmul.bf16.gmra.mxu0 %v355
  %v506 = vpop.f32.mrf.mxu0
  %v507 = vadd.f32 0.0, %v506
  %v508 = vpop.f32.mrf.mxu0
  %509 = vdwg.mxu0
  %510 = vmatpush.bf16.msra.mxu0 %v459
  %511 = vmatpush.bf16.msra.mxu0 %v456
  %512 = vmatpush.bf16.msra.mxu0 %v453
  %513 = vmatpush.bf16.msra.mxu0 %v450
  %514 = vmatpush.bf16.msra.mxu0 %v447
  %515 = vmatpush.bf16.msra.mxu0 %v444
  %516 = vmatpush.bf16.msra.mxu0 %v441
  %517 = vmatpush.bf16.msra.mxu0 %v438
  %518 = vmatmul.bf16.gmra.mxu0 %v355
  %v519 = vpop.f32.mrf.mxu0
  %v520 = vadd.f32 0.0, %v519
  %v521 = vpop.f32.mrf.mxu0
  %522 = vdwg.mxu0
  %v523 = vpack.c.bf16 %v354, %v354
  %v556 = vunpack.c.l.b16 %v273
  %v557 = vunpack.c.h.b16 %v273
  %v558 = vunpack.c.l.b16 %v274
  %v559 = vunpack.c.l.b16 %v275
  %v560 = vunpack.c.h.b16 %v275
  %v561 = vunpack.c.l.b16 %v276
  %v562 = vunpack.c.l.b16 %v277
  %v563 = vunpack.c.h.b16 %v277
  %v564 = vunpack.c.l.b16 %v278
  %v565 = vunpack.c.l.b16 %v279
  %v566 = vunpack.c.h.b16 %v279
  %v567 = vunpack.c.l.b16 %v280
  %v568 = vunpack.c.l.b16 %v281
  %v569 = vunpack.c.h.b16 %v281
  %v570 = vunpack.c.l.b16 %v282
  %v571 = vunpack.c.l.b16 %v283
  %v572 = vunpack.c.h.b16 %v283
  %v573 = vunpack.c.l.b16 %v284
  %v574 = vunpack.c.l.b16 %v285
  %v575 = vunpack.c.h.b16 %v285
  %v576 = vunpack.c.l.b16 %v286
  %v577 = vunpack.c.l.b16 %v287
  %v578 = vunpack.c.h.b16 %v287
  %v579 = vunpack.c.l.b16 %v288
  %v580 = vunpack.c.l.b16 %v289
  %v581 = vunpack.c.h.b16 %v289
  %v582 = vunpack.c.l.b16 %v290
  %v583 = vunpack.c.l.b16 %v291
  %v584 = vunpack.c.h.b16 %v291
  %v585 = vunpack.c.l.b16 %v292
  %v586 = vunpack.c.l.b16 %v293
  %v587 = vunpack.c.h.b16 %v293
  %v588 = vunpack.c.l.b16 %v294
  %v589 = vunpack.c.l.b16 %v295
  %v590 = vunpack.c.h.b16 %v295
  %v591 = vunpack.c.l.b16 %v296
  %v592 = vunpack.c.l.b16 %v297
  %v593 = vunpack.c.h.b16 %v297
  %v594 = vunpack.c.l.b16 %v298
  %v595 = vunpack.c.l.b16 %v299
  %v596 = vunpack.c.h.b16 %v299
  %v597 = vunpack.c.l.b16 %v300
  %v598 = vunpack.c.l.b16 %v301
  %v599 = vunpack.c.h.b16 %v301
  %v600 = vunpack.c.l.b16 %v302
  %v601 = vunpack.c.l.b16 %v303
  %v602 = vunpack.c.h.b16 %v303
  %v603 = vunpack.c.l.b16 %v304
  %v604 = vpack.c.b16 %v559, %v556
  %v605 = vpack.c.b16 %v560, %v557
  %v606 = vpack.c.b16 %v561, %v558
  %v607 = vpack.c.b16 %v565, %v562
  %v608 = vpack.c.b16 %v566, %v563
  %v609 = vpack.c.b16 %v567, %v564
  %v610 = vpack.c.b16 %v571, %v568
  %v611 = vpack.c.b16 %v572, %v569
  %v612 = vpack.c.b16 %v573, %v570
  %v613 = vpack.c.b16 %v577, %v574
  %v614 = vpack.c.b16 %v578, %v575
  %v615 = vpack.c.b16 %v579, %v576
  %v616 = vpack.c.b16 %v583, %v580
  %v617 = vpack.c.b16 %v584, %v581
  %v618 = vpack.c.b16 %v585, %v582
  %v619 = vpack.c.b16 %v589, %v586
  %v620 = vpack.c.b16 %v590, %v587
  %v621 = vpack.c.b16 %v591, %v588
  %v622 = vpack.c.b16 %v595, %v592
  %v623 = vpack.c.b16 %v596, %v593
  %v624 = vpack.c.b16 %v597, %v594
  %v625 = vpack.c.b16 %v601, %v598
  %v626 = vpack.c.b16 %v602, %v599
  %v627 = vpack.c.b16 %v603, %v600
  %652 = vmatpush.bf16.msra.mxu0 %v625
  %653 = vmatpush.bf16.msra.mxu0 %v622
  %654 = vmatpush.bf16.msra.mxu0 %v619
  %655 = vmatpush.bf16.msra.mxu0 %v616
  %656 = vmatpush.bf16.msra.mxu0 %v613
  %657 = vmatpush.bf16.msra.mxu0 %v610
  %658 = vmatpush.bf16.msra.mxu0 %v607
  %659 = vmatpush.bf16.msra.mxu0 %v604
  %660 = vmatmul.bf16.gmra.mxu0 %v523
  %v661 = vpop.f32.mrf.mxu0
  %v662 = vadd.f32 0.0, %v661
  %v663 = vpop.f32.mrf.mxu0
  %664 = vdwg.mxu0
  %665 = vmatpush.bf16.msra.mxu0 %v626
  %666 = vmatpush.bf16.msra.mxu0 %v623
  %667 = vmatpush.bf16.msra.mxu0 %v620
  %668 = vmatpush.bf16.msra.mxu0 %v617
  %669 = vmatpush.bf16.msra.mxu0 %v614
  %670 = vmatpush.bf16.msra.mxu0 %v611
  %671 = vmatpush.bf16.msra.mxu0 %v608
  %672 = vmatpush.bf16.msra.mxu0 %v605
  %673 = vmatmul.bf16.gmra.mxu0 %v523
  %v674 = vpop.f32.mrf.mxu0
  %v675 = vadd.f32 0.0, %v674
  %v676 = vpop.f32.mrf.mxu0
  %677 = vdwg.mxu0
  %678 = vmatpush.bf16.msra.mxu0 %v627
  %679 = vmatpush.bf16.msra.mxu0 %v624
  %680 = vmatpush.bf16.msra.mxu0 %v621
  %681 = vmatpush.bf16.msra.mxu0 %v618
  %682 = vmatpush.bf16.msra.mxu0 %v615
  %683 = vmatpush.bf16.msra.mxu0 %v612
  %684 = vmatpush.bf16.msra.mxu0 %v609
  %685 = vmatpush.bf16.msra.mxu0 %v606
  %686 = vmatmul.bf16.gmra.mxu0 %v523
  %v687 = vpop.f32.mrf.mxu0
  %v688 = vadd.f32 0.0, %v687
  %v689 = vpop.f32.mrf.mxu0
  %690 = vdwg.mxu0
  %v691 = vld [vmem:[#allocation4] sm:$0xff]
  %v692 = vld [vmem:[#allocation4 + $0x8] sm:$0xf]
  %v693 = vunpack.c.l.bf16 %v691
  %v694 = vunpack.c.h.bf16 %v691
  %v695 = vunpack.c.l.bf16 %v692
  %v696 = vadd.f32 %v693, %v494
  %v697 = vadd.f32 %v694, %v507
  %v698 = vxor.u32 %v696, 2147483648
  %v699 = vxor.u32 %v697, 2147483648
  %v700 = vmul.f32 %v698, 1.442695
  %v701 = vpow.pop %v700
  %v702 = vmul.f32 %v699, 1.442695
  %v703 = vpow.pop %v702
  %v704 = vadd.f32 %v701, 1.0
  %v705 = vadd.f32 %v703, 1.0
  %v706 = vrcp.pop %v704
  %v707 = vmul.f32 %v704, %v706
  %v708 = vsub.f32 1.0, %v707
  %v709 = vmul.f32 %v706, %v708
  %v710 = vadd.f32 %v706, %v709
  %vm711 = vweird.f32 %v704
  %vm712 = vweird.f32 %v706
  %vm713 = vmor %vm711, %vm712
  %v714 = vsel %vm713, %v706, %v710
  %v715 = vand.u32 2147483647, %v704
  %vm716 = vcmp.eq.f32.partialorder %v715, 8.507059e+37
  %v717 = vand.u32 %v704, 2147483648
  %v718 = vor.u32 1.1754944e-38, %v717
  %v719 = vsel %vm716, %v718, %v714
  %v720 = vmul.f32 1.0, %v719
  %v721 = vrcp.pop %v705
  %v722 = vmul.f32 %v705, %v721
  %v723 = vsub.f32 1.0, %v722
  %v724 = vmul.f32 %v721, %v723
  %v725 = vadd.f32 %v721, %v724
  %vm726 = vweird.f32 %v705
  %vm727 = vweird.f32 %v721
  %vm728 = vmor %vm726, %vm727
  %v729 = vsel %vm728, %v721, %v725
  %v730 = vand.u32 2147483647, %v705
  %vm731 = vcmp.eq.f32.partialorder %v730, 8.507059e+37
  %v732 = vand.u32 %v705, 2147483648
  %v733 = vor.u32 1.1754944e-38, %v732
  %v734 = vsel %vm731, %v733, %v729
  %v735 = vmul.f32 1.0, %v734
  %v736 = vadd.f32 %v520, %v339
  %v737 = vmul.f32 %v720, %v736
  %v738 = vadd.f32 %v695, %v737
  %v739 = vtanh.pop %v738
  %v740 = vsub.f32 %v353, %v739
  %v741 = vmul.f32 %v735, %v740
  %v742 = vadd.f32 %v739, %v741
  %v743 = vpack.c.bf16 %v742, %v742
  %v776 = vunpack.c.l.b16 %v305
  %v777 = vunpack.c.h.b16 %v305
  %v778 = vunpack.c.l.b16 %v306
  %v779 = vunpack.c.l.b16 %v307
  %v780 = vunpack.c.h.b16 %v307
  %v781 = vunpack.c.l.b16 %v308
  %v782 = vunpack.c.l.b16 %v309
  %v783 = vunpack.c.h.b16 %v309
  %v784 = vunpack.c.l.b16 %v310
  %v785 = vunpack.c.l.b16 %v311
  %v786 = vunpack.c.h.b16 %v311
  %v787 = vunpack.c.l.b16 %v312
  %v788 = vunpack.c.l.b16 %v313
  %v789 = vunpack.c.h.b16 %v313
  %v790 = vunpack.c.l.b16 %v314
  %v791 = vunpack.c.l.b16 %v315
  %v792 = vunpack.c.h.b16 %v315
  %v793 = vunpack.c.l.b16 %v316
  %v794 = vunpack.c.l.b16 %v317
  %v795 = vunpack.c.h.b16 %v317
  %v796 = vunpack.c.l.b16 %v318
  %v797 = vunpack.c.l.b16 %v319
  %v798 = vunpack.c.h.b16 %v319
  %v799 = vunpack.c.l.b16 %v320
  %v800 = vunpack.c.l.b16 %v321
  %v801 = vunpack.c.h.b16 %v321
  %v802 = vunpack.c.l.b16 %v322
  %v803 = vunpack.c.l.b16 %v323
  %v804 = vunpack.c.h.b16 %v323
  %v805 = vunpack.c.l.b16 %v324
  %v806 = vunpack.c.l.b16 %v325
  %v807 = vunpack.c.h.b16 %v325
  %v808 = vunpack.c.l.b16 %v326
  %v809 = vunpack.c.l.b16 %v327
  %v810 = vunpack.c.h.b16 %v327
  %v811 = vunpack.c.l.b16 %v328
  %v812 = vunpack.c.l.b16 %v329
  %v813 = vunpack.c.h.b16 %v329
  %v814 = vunpack.c.l.b16 %v330
  %v815 = vunpack.c.l.b16 %v331
  %v816 = vunpack.c.h.b16 %v331
  %v817 = vunpack.c.l.b16 %v332
  %v818 = vunpack.c.l.b16 %v333
  %v819 = vunpack.c.h.b16 %v333
  %v820 = vunpack.c.l.b16 %v334
  %v821 = vunpack.c.l.b16 %v335
  %v822 = vunpack.c.h.b16 %v335
  %v823 = vunpack.c.l.b16 %v336
  %v824 = vpack.c.b16 %v779, %v776
  %v825 = vpack.c.b16 %v780, %v777
  %v826 = vpack.c.b16 %v781, %v778
  %v827 = vpack.c.b16 %v785, %v782
  %v828 = vpack.c.b16 %v786, %v783
  %v829 = vpack.c.b16 %v787, %v784
  %v830 = vpack.c.b16 %v791, %v788
  %v831 = vpack.c.b16 %v792, %v789
  %v832 = vpack.c.b16 %v793, %v790
  %v833 = vpack.c.b16 %v797, %v794
  %v834 = vpack.c.b16 %v798, %v795
  %v835 = vpack.c.b16 %v799, %v796
  %v836 = vpack.c.b16 %v803, %v800
  %v837 = vpack.c.b16 %v804, %v801
  %v838 = vpack.c.b16 %v805, %v802
  %v839 = vpack.c.b16 %v809, %v806
  %v840 = vpack.c.b16 %v810, %v807
  %v841 = vpack.c.b16 %v811, %v808
  %v842 = vpack.c.b16 %v815, %v812
  %v843 = vpack.c.b16 %v816, %v813
  %v844 = vpack.c.b16 %v817, %v814
  %v845 = vpack.c.b16 %v821, %v818
  %v846 = vpack.c.b16 %v822, %v819
  %v847 = vpack.c.b16 %v823, %v820
  %872 = vmatpush.bf16.msra.mxu0 %v845
  %873 = vmatpush.bf16.msra.mxu0 %v842
  %874 = vmatpush.bf16.msra.mxu0 %v839
  %875 = vmatpush.bf16.msra.mxu0 %v836
  %876 = vmatpush.bf16.msra.mxu0 %v833
  %877 = vmatpush.bf16.msra.mxu0 %v830
  %878 = vmatpush.bf16.msra.mxu0 %v827
  %879 = vmatpush.bf16.msra.mxu0 %v824
  %880 = vmatmul.bf16.gmra.mxu0 %v743
  %v881 = vpop.f32.mrf.mxu0
  %v882 = vadd.f32 %v347, %v881
  %v883 = vpop.f32.mrf.mxu0
  %884 = vdwg.mxu0
  %885 = vmatpush.bf16.msra.mxu0 %v846
  %886 = vmatpush.bf16.msra.mxu0 %v843
  %887 = vmatpush.bf16.msra.mxu0 %v840
  %888 = vmatpush.bf16.msra.mxu0 %v837
  %889 = vmatpush.bf16.msra.mxu0 %v834
  %890 = vmatpush.bf16.msra.mxu0 %v831
  %891 = vmatpush.bf16.msra.mxu0 %v828
  %892 = vmatpush.bf16.msra.mxu0 %v825
  %893 = vmatmul.bf16.gmra.mxu0 %v743
  %v894 = vpop.f32.mrf.mxu0
  %v895 = vadd.f32 %v348, %v894
  %v896 = vpop.f32.mrf.mxu0
  %897 = vdwg.mxu0
  %898 = vmatpush.bf16.msra.mxu0 %v847
  %899 = vmatpush.bf16.msra.mxu0 %v844
  %900 = vmatpush.bf16.msra.mxu0 %v841
  %901 = vmatpush.bf16.msra.mxu0 %v838
  %902 = vmatpush.bf16.msra.mxu0 %v835
  %903 = vmatpush.bf16.msra.mxu0 %v832
  %904 = vmatpush.bf16.msra.mxu0 %v829
  %905 = vmatpush.bf16.msra.mxu0 %v826
  %906 = vmatmul.bf16.gmra.mxu0 %v743
  %v907 = vpop.f32.mrf.mxu0
  %v908 = vadd.f32 %v349, %v907
  %v909 = vpop.f32.mrf.mxu0
  %910 = vdwg.mxu0
  %v911 = vadd.f32 %v882, %v662
  %v912 = vadd.f32 %v895, %v675
  %v913 = vxor.u32 %v911, 2147483648
  %v914 = vxor.u32 %v912, 2147483648
  %v915 = vmul.f32 %v913, 1.442695
  %v916 = vpow.pop %v915
  %v917 = vmul.f32 %v914, 1.442695
  %v918 = vpow.pop %v917
  %v919 = vadd.f32 %v916, 1.0
  %v920 = vadd.f32 %v918, 1.0
  %v921 = vrcp.pop %v919
  %v922 = vmul.f32 %v919, %v921
  %v923 = vsub.f32 1.0, %v922
  %v924 = vmul.f32 %v921, %v923
  %v925 = vadd.f32 %v921, %v924
  %vm926 = vweird.f32 %v919
  %vm927 = vweird.f32 %v921
  %vm928 = vmor %vm926, %vm927
  %v929 = vsel %vm928, %v921, %v925
  %v930 = vand.u32 2147483647, %v919
  %vm931 = vcmp.eq.f32.partialorder %v930, 8.507059e+37
  %v932 = vand.u32 %v919, 2147483648
  %v933 = vor.u32 1.1754944e-38, %v932
  %v934 = vsel %vm931, %v933, %v929
  %v935 = vmul.f32 1.0, %v934
  %v936 = vrcp.pop %v920
  %v937 = vmul.f32 %v920, %v936
  %v938 = vsub.f32 1.0, %v937
  %v939 = vmul.f32 %v936, %v938
  %v940 = vadd.f32 %v936, %v939
  %vm941 = vweird.f32 %v920
  %vm942 = vweird.f32 %v936
  %vm943 = vmor %vm941, %vm942
  %v944 = vsel %vm943, %v936, %v940
  %v945 = vand.u32 2147483647, %v920
  %vm946 = vcmp.eq.f32.partialorder %v945, 8.507059e+37
  %v947 = vand.u32 %v920, 2147483648
  %v948 = vor.u32 1.1754944e-38, %v947
  %v949 = vsel %vm946, %v948, %v944
  %v950 = vmul.f32 1.0, %v949
  %v951 = vadd.f32 %v688, %v343
  %v952 = vmul.f32 %v935, %v951
  %v953 = vadd.f32 %v908, %v952
  %v954 = vtanh.pop %v953
  %v955 = vsub.f32 %v354, %v954
  %v956 = vmul.f32 %v950, %v955
  %v957 = vadd.f32 %v954, %v956
  %958 = vmatpush.bf16.msra.mxu0 %v457
  %959 = vmatpush.bf16.msra.mxu0 %v454
  %960 = vmatpush.bf16.msra.mxu0 %v451
  %961 = vmatpush.bf16.msra.mxu0 %v448
  %962 = vmatpush.bf16.msra.mxu0 %v445
  %963 = vmatpush.bf16.msra.mxu0 %v442
  %964 = vmatpush.bf16.msra.mxu0 %v439
  %965 = vmatpush.bf16.msra.mxu0 %v436
  %966 = vmatmul.bf16.gmra.mxu0 %v743
  %v967 = vpop.f32.mrf.mxu0
  %v968 = vadd.f32 0.0, %v967
  %v969 = vpop.f32.mrf.mxu0
  %970 = vdwg.mxu0
  %971 = vmatpush.bf16.msra.mxu0 %v458
  %972 = vmatpush.bf16.msra.mxu0 %v455
  %973 = vmatpush.bf16.msra.mxu0 %v452
  %974 = vmatpush.bf16.msra.mxu0 %v449
  %975 = vmatpush.bf16.msra.mxu0 %v446
  %976 = vmatpush.bf16.msra.mxu0 %v443
  %977 = vmatpush.bf16.msra.mxu0 %v440
  %978 = vmatpush.bf16.msra.mxu0 %v437
  %979 = vmatmul.bf16.gmra.mxu0 %v743
  %v980 = vpop.f32.mrf.mxu0
  %v981 = vadd.f32 0.0, %v980
  %v982 = vpop.f32.mrf.mxu0
  %983 = vdwg.mxu0
  %984 = vmatpush.bf16.msra.mxu0 %v459
  %985 = vmatpush.bf16.msra.mxu0 %v456
  %986 = vmatpush.bf16.msra.mxu0 %v453
  %987 = vmatpush.bf16.msra.mxu0 %v450
  %988 = vmatpush.bf16.msra.mxu0 %v447
  %989 = vmatpush.bf16.msra.mxu0 %v444
  %990 = vmatpush.bf16.msra.mxu0 %v441
  %991 = vmatpush.bf16.msra.mxu0 %v438
  %992 = vmatmul.bf16.gmra.mxu0 %v743
  %v993 = vpop.f32.mrf.mxu0
  %v994 = vadd.f32 0.0, %v993
  %v995 = vpop.f32.mrf.mxu0
  %996 = vdwg.mxu0
  %v997 = vpack.c.bf16 %v957, %v957
  %998 = vmatpush.bf16.msra.mxu0 %v625
  %999 = vmatpush.bf16.msra.mxu0 %v622
  %1000 = vmatpush.bf16.msra.mxu0 %v619
  %1001 = vmatpush.bf16.msra.mxu0 %v616
  %1002 = vmatpush.bf16.msra.mxu0 %v613
  %1003 = vmatpush.bf16.msra.mxu0 %v610
  %1004 = vmatpush.bf16.msra.mxu0 %v607
  %1005 = vmatpush.bf16.msra.mxu0 %v604
  %1006 = vmatmul.bf16.gmra.mxu0 %v997
  %v1007 = vpop.f32.mrf.mxu0
  %v1008 = vadd.f32 0.0, %v1007
  %v1009 = vpop.f32.mrf.mxu0
  %1010 = vdwg.mxu0
  %1011 = vmatpush.bf16.msra.mxu0 %v626
  %1012 = vmatpush.bf16.msra.mxu0 %v623
  %1013 = vmatpush.bf16.msra.mxu0 %v620
  %1014 = vmatpush.bf16.msra.mxu0 %v617
  %1015 = vmatpush.bf16.msra.mxu0 %v614
  %1016 = vmatpush.bf16.msra.mxu0 %v611
  %1017 = vmatpush.bf16.msra.mxu0 %v608
  %1018 = vmatpush.bf16.msra.mxu0 %v605
  %1019 = vmatmul.bf16.gmra.mxu0 %v997
  %v1020 = vpop.f32.mrf.mxu0
  %v1021 = vadd.f32 0.0, %v1020
  %v1022 = vpop.f32.mrf.mxu0
  %1023 = vdwg.mxu0
  %1024 = vmatpush.bf16.msra.mxu0 %v627
  %1025 = vmatpush.bf16.msra.mxu0 %v624
  %1026 = vmatpush.bf16.msra.mxu0 %v621
  %1027 = vmatpush.bf16.msra.mxu0 %v618
  %1028 = vmatpush.bf16.msra.mxu0 %v615
  %1029 = vmatpush.bf16.msra.mxu0 %v612
  %1030 = vmatpush.bf16.msra.mxu0 %v609
  %1031 = vmatpush.bf16.msra.mxu0 %v606
  %1032 = vmatmul.bf16.gmra.mxu0 %v997
  %v1033 = vpop.f32.mrf.mxu0
  %v1034 = vadd.f32 0.0, %v1033
  %v1035 = vpop.f32.mrf.mxu0
  %1036 = vdwg.mxu0
  %s1037 = scalar_lea.vmem [#allocation4], 12
  %v1038 = vld [vmem:[%s1037] sm:$0xff]
  %v1039 = vld [vmem:[%s1037 + $0x8] sm:$0xf]
  %v1040 = vunpack.c.l.bf16 %v1038
  %v1041 = vunpack.c.h.bf16 %v1038
  %v1042 = vunpack.c.l.bf16 %v1039
  %v1043 = vadd.f32 %v1040, %v968
  %v1044 = vadd.f32 %v1041, %v981
  %v1045 = vxor.u32 %v1043, 2147483648
  %v1046 = vxor.u32 %v1044, 2147483648
  %v1047 = vmul.f32 %v1045, 1.442695
  %v1048 = vpow.pop %v1047
  %v1049 = vmul.f32 %v1046, 1.442695
  %v1050 = vpow.pop %v1049
  %v1051 = vadd.f32 %v1048, 1.0
  %v1052 = vadd.f32 %v1050, 1.0
  %v1053 = vrcp.pop %v1051
  %v1054 = vmul.f32 %v1051, %v1053
  %v1055 = vsub.f32 1.0, %v1054
  %v1056 = vmul.f32 %v1053, %v1055
  %v1057 = vadd.f32 %v1053, %v1056
  %vm1058 = vweird.f32 %v1051
  %vm1059 = vweird.f32 %v1053
  %vm1060 = vmor %vm1058, %vm1059
  %v1061 = vsel %vm1060, %v1053, %v1057
  %v1062 = vand.u32 2147483647, %v1051
  %vm1063 = vcmp.eq.f32.partialorder %v1062, 8.507059e+37
  %v1064 = vand.u32 %v1051, 2147483648
  %v1065 = vor.u32 1.1754944e-38, %v1064
  %v1066 = vsel %vm1063, %v1065, %v1061
  %v1067 = vmul.f32 1.0, %v1066
  %v1068 = vrcp.pop %v1052
  %v1069 = vmul.f32 %v1052, %v1068
  %v1070 = vsub.f32 1.0, %v1069
  %v1071 = vmul.f32 %v1068, %v1070
  %v1072 = vadd.f32 %v1068, %v1071
  %vm1073 = vweird.f32 %v1052
  %vm1074 = vweird.f32 %v1068
  %vm1075 = vmor %vm1073, %vm1074
  %v1076 = vsel %vm1075, %v1068, %v1072
  %v1077 = vand.u32 2147483647, %v1052
  %vm1078 = vcmp.eq.f32.partialorder %v1077, 8.507059e+37
  %v1079 = vand.u32 %v1052, 2147483648
  %v1080 = vor.u32 1.1754944e-38, %v1079
  %v1081 = vsel %vm1078, %v1080, %v1076
  %v1082 = vmul.f32 1.0, %v1081
  %v1083 = vadd.f32 %v994, %v339
  %v1084 = vmul.f32 %v1067, %v1083
  %v1085 = vadd.f32 %v1042, %v1084
  %v1086 = vtanh.pop %v1085
  %v1087 = vsub.f32 %v742, %v1086
  %v1088 = vmul.f32 %v1082, %v1087
  %v1089 = vadd.f32 %v1086, %v1088
  %v1090 = vpack.c.bf16 %v1089, %v1089
  %1091 = vmatpush.bf16.msra.mxu0 %v845
  %1092 = vmatpush.bf16.msra.mxu0 %v842
  %1093 = vmatpush.bf16.msra.mxu0 %v839
  %1094 = vmatpush.bf16.msra.mxu0 %v836
  %1095 = vmatpush.bf16.msra.mxu0 %v833
  %1096 = vmatpush.bf16.msra.mxu0 %v830
  %1097 = vmatpush.bf16.msra.mxu0 %v827
  %1098 = vmatpush.bf16.msra.mxu0 %v824
  %1099 = vmatmul.bf16.gmra.mxu0 %v1090
  %v1100 = vpop.f32.mrf.mxu0
  %v1101 = vadd.f32 %v347, %v1100
  %v1102 = vpop.f32.mrf.mxu0
  %1103 = vdwg.mxu0
  %1104 = vmatpush.bf16.msra.mxu0 %v846
  %1105 = vmatpush.bf16.msra.mxu0 %v843
  %1106 = vmatpush.bf16.msra.mxu0 %v840
  %1107 = vmatpush.bf16.msra.mxu0 %v837
  %1108 = vmatpush.bf16.msra.mxu0 %v834
  %1109 = vmatpush.bf16.msra.mxu0 %v831
  %1110 = vmatpush.bf16.msra.mxu0 %v828
  %1111 = vmatpush.bf16.msra.mxu0 %v825
  %1112 = vmatmul.bf16.gmra.mxu0 %v1090
  %v1113 = vpop.f32.mrf.mxu0
  %v1114 = vadd.f32 %v348, %v1113
  %v1115 = vpop.f32.mrf.mxu0
  %1116 = vdwg.mxu0
  %1117 = vmatpush.bf16.msra.mxu0 %v847
  %1118 = vmatpush.bf16.msra.mxu0 %v844
  %1119 = vmatpush.bf16.msra.mxu0 %v841
  %1120 = vmatpush.bf16.msra.mxu0 %v838
  %1121 = vmatpush.bf16.msra.mxu0 %v835
  %1122 = vmatpush.bf16.msra.mxu0 %v832
  %1123 = vmatpush.bf16.msra.mxu0 %v829
  %1124 = vmatpush.bf16.msra.mxu0 %v826
  %1125 = vmatmul.bf16.gmra.mxu0 %v1090
  %v1126 = vpop.f32.mrf.mxu0
  %v1127 = vadd.f32 %v349, %v1126
  %v1128 = vpop.f32.mrf.mxu0
  %1129 = vdwg.mxu0
  %v1130 = vadd.f32 %v1101, %v1008
  %v1131 = vadd.f32 %v1114, %v1021
  %v1132 = vxor.u32 %v1130, 2147483648
  %v1133 = vxor.u32 %v1131, 2147483648
  %v1134 = vmul.f32 %v1132, 1.442695
  %v1135 = vpow.pop %v1134
  %v1136 = vmul.f32 %v1133, 1.442695
  %v1137 = vpow.pop %v1136
  %v1138 = vadd.f32 %v1135, 1.0
  %v1139 = vadd.f32 %v1137, 1.0
  %v1140 = vrcp.pop %v1138
  %v1141 = vmul.f32 %v1138, %v1140
  %v1142 = vsub.f32 1.0, %v1141
  %v1143 = vmul.f32 %v1140, %v1142
  %v1144 = vadd.f32 %v1140, %v1143
  %vm1145 = vweird.f32 %v1138
  %vm1146 = vweird.f32 %v1140
  %vm1147 = vmor %vm1145, %vm1146
  %v1148 = vsel %vm1147, %v1140, %v1144
  %v1149 = vand.u32 2147483647, %v1138
  %vm1150 = vcmp.eq.f32.partialorder %v1149, 8.507059e+37
  %v1151 = vand.u32 %v1138, 2147483648
  %v1152 = vor.u32 1.1754944e-38, %v1151
  %v1153 = vsel %vm1150, %v1152, %v1148
  %v1154 = vmul.f32 1.0, %v1153
  %v1155 = vrcp.pop %v1139
  %v1156 = vmul.f32 %v1139, %v1155
  %v1157 = vsub.f32 1.0, %v1156
  %v1158 = vmul.f32 %v1155, %v1157
  %v1159 = vadd.f32 %v1155, %v1158
  %vm1160 = vweird.f32 %v1139
  %vm1161 = vweird.f32 %v1155
  %vm1162 = vmor %vm1160, %vm1161
  %v1163 = vsel %vm1162, %v1155, %v1159
  %v1164 = vand.u32 2147483647, %v1139
  %vm1165 = vcmp.eq.f32.partialorder %v1164, 8.507059e+37
  %v1166 = vand.u32 %v1139, 2147483648
  %v1167 = vor.u32 1.1754944e-38, %v1166
  %v1168 = vsel %vm1165, %v1167, %v1163
  %v1169 = vmul.f32 1.0, %v1168
  %v1170 = vadd.f32 %v1034, %v343
  %v1171 = vmul.f32 %v1154, %v1170
  %v1172 = vadd.f32 %v1127, %v1171
  %v1173 = vtanh.pop %v1172
  %v1174 = vsub.f32 %v957, %v1173
  %v1175 = vmul.f32 %v1169, %v1174
  %v1176 = vadd.f32 %v1173, %v1175
  %1177 = vmatpush.bf16.msra.mxu0 %v457
  %1178 = vmatpush.bf16.msra.mxu0 %v454
  %1179 = vmatpush.bf16.msra.mxu0 %v451
  %1180 = vmatpush.bf16.msra.mxu0 %v448
  %1181 = vmatpush.bf16.msra.mxu0 %v445
  %1182 = vmatpush.bf16.msra.mxu0 %v442
  %1183 = vmatpush.bf16.msra.mxu0 %v439
  %1184 = vmatpush.bf16.msra.mxu0 %v436
  %1185 = vmatmul.bf16.gmra.mxu0 %v1090
  %v1186 = vpop.f32.mrf.mxu0
  %v1187 = vadd.f32 0.0, %v1186
  %v1188 = vpop.f32.mrf.mxu0
  %1189 = vdwg.mxu0
  %1190 = vmatpush.bf16.msra.mxu0 %v458
  %1191 = vmatpush.bf16.msra.mxu0 %v455
  %1192 = vmatpush.bf16.msra.mxu0 %v452
  %1193 = vmatpush.bf16.msra.mxu0 %v449
  %1194 = vmatpush.bf16.msra.mxu0 %v446
  %1195 = vmatpush.bf16.msra.mxu0 %v443
  %1196 = vmatpush.bf16.msra.mxu0 %v440
  %1197 = vmatpush.bf16.msra.mxu0 %v437
  %1198 = vmatmul.bf16.gmra.mxu0 %v1090
  %v1199 = vpop.f32.mrf.mxu0
  %v1200 = vadd.f32 0.0, %v1199
  %v1201 = vpop.f32.mrf.mxu0
  %1202 = vdwg.mxu0
  %1203 = vmatpush.bf16.msra.mxu0 %v459
  %1204 = vmatpush.bf16.msra.mxu0 %v456
  %1205 = vmatpush.bf16.msra.mxu0 %v453
  %1206 = vmatpush.bf16.msra.mxu0 %v450
  %1207 = vmatpush.bf16.msra.mxu0 %v447
  %1208 = vmatpush.bf16.msra.mxu0 %v444
  %1209 = vmatpush.bf16.msra.mxu0 %v441
  %1210 = vmatpush.bf16.msra.mxu0 %v438
  %1211 = vmatmul.bf16.gmra.mxu0 %v1090
  %v1212 = vpop.f32.mrf.mxu0
  %v1213 = vadd.f32 0.0, %v1212
  %v1214 = vpop.f32.mrf.mxu0
  %1215 = vdwg.mxu0
  %v1216 = vpack.c.bf16 %v1176, %v1176
  %1217 = vmatpush.bf16.msra.mxu0 %v625
  %1218 = vmatpush.bf16.msra.mxu0 %v622
  %1219 = vmatpush.bf16.msra.mxu0 %v619
  %1220 = vmatpush.bf16.msra.mxu0 %v616
  %1221 = vmatpush.bf16.msra.mxu0 %v613
  %1222 = vmatpush.bf16.msra.mxu0 %v610
  %1223 = vmatpush.bf16.msra.mxu0 %v607
  %1224 = vmatpush.bf16.msra.mxu0 %v604
  %1225 = vmatmul.bf16.gmra.mxu0 %v1216
  %v1226 = vpop.f32.mrf.mxu0
  %v1227 = vadd.f32 0.0, %v1226
  %v1228 = vpop.f32.mrf.mxu0
  %1229 = vdwg.mxu0
  %1230 = vmatpush.bf16.msra.mxu0 %v626
  %1231 = vmatpush.bf16.msra.mxu0 %v623
  %1232 = vmatpush.bf16.msra.mxu0 %v620
  %1233 = vmatpush.bf16.msra.mxu0 %v617
  %1234 = vmatpush.bf16.msra.mxu0 %v614
  %1235 = vmatpush.bf16.msra.mxu0 %v611
  %1236 = vmatpush.bf16.msra.mxu0 %v608
  %1237 = vmatpush.bf16.msra.mxu0 %v605
  %1238 = vmatmul.bf16.gmra.mxu0 %v1216
  %v1239 = vpop.f32.mrf.mxu0
  %v1240 = vadd.f32 0.0, %v1239
  %v1241 = vpop.f32.mrf.mxu0
  %1242 = vdwg.mxu0
  %1243 = vmatpush.bf16.msra.mxu0 %v627
  %1244 = vmatpush.bf16.msra.mxu0 %v624
  %1245 = vmatpush.bf16.msra.mxu0 %v621
  %1246 = vmatpush.bf16.msra.mxu0 %v618
  %1247 = vmatpush.bf16.msra.mxu0 %v615
  %1248 = vmatpush.bf16.msra.mxu0 %v612
  %1249 = vmatpush.bf16.msra.mxu0 %v609
  %1250 = vmatpush.bf16.msra.mxu0 %v606
  %1251 = vmatmul.bf16.gmra.mxu0 %v1216
  %v1252 = vpop.f32.mrf.mxu0
  %v1253 = vadd.f32 0.0, %v1252
  %v1254 = vpop.f32.mrf.mxu0
  %1255 = vdwg.mxu0
  %s1256 = scalar_lea.vmem [#allocation4], 24
  %v1257 = vld [vmem:[%s1256] sm:$0xff]
  %v1258 = vld [vmem:[%s1256 + $0x8] sm:$0xf]
  %v1259 = vunpack.c.l.bf16 %v1257
  %v1260 = vunpack.c.h.bf16 %v1257
  %v1261 = vunpack.c.l.bf16 %v1258
  %v1262 = vadd.f32 %v1259, %v1187
  %v1263 = vadd.f32 %v1260, %v1200
  %v1264 = vxor.u32 %v1262, 2147483648
  %v1265 = vxor.u32 %v1263, 2147483648
  %v1266 = vmul.f32 %v1264, 1.442695
  %v1267 = vpow.pop %v1266
  %v1268 = vmul.f32 %v1265, 1.442695
  %v1269 = vpow.pop %v1268
  %v1270 = vadd.f32 %v1267, 1.0
  %v1271 = vadd.f32 %v1269, 1.0
  %v1272 = vrcp.pop %v1270
  %v1273 = vmul.f32 %v1270, %v1272
  %v1274 = vsub.f32 1.0, %v1273
  %v1275 = vmul.f32 %v1272, %v1274
  %v1276 = vadd.f32 %v1272, %v1275
  %vm1277 = vweird.f32 %v1270
  %vm1278 = vweird.f32 %v1272
  %vm1279 = vmor %vm1277, %vm1278
  %v1280 = vsel %vm1279, %v1272, %v1276
  %v1281 = vand.u32 2147483647, %v1270
  %vm1282 = vcmp.eq.f32.partialorder %v1281, 8.507059e+37
  %v1283 = vand.u32 %v1270, 2147483648
  %v1284 = vor.u32 1.1754944e-38, %v1283
  %v1285 = vsel %vm1282, %v1284, %v1280
  %v1286 = vmul.f32 1.0, %v1285
  %v1287 = vrcp.pop %v1271
  %v1288 = vmul.f32 %v1271, %v1287
  %v1289 = vsub.f32 1.0, %v1288
  %v1290 = vmul.f32 %v1287, %v1289
  %v1291 = vadd.f32 %v1287, %v1290
  %vm1292 = vweird.f32 %v1271
  %vm1293 = vweird.f32 %v1287
  %vm1294 = vmor %vm1292, %vm1293
  %v1295 = vsel %vm1294, %v1287, %v1291
  %v1296 = vand.u32 2147483647, %v1271
  %vm1297 = vcmp.eq.f32.partialorder %v1296, 8.507059e+37
  %v1298 = vand.u32 %v1271, 2147483648
  %v1299 = vor.u32 1.1754944e-38, %v1298
  %v1300 = vsel %vm1297, %v1299, %v1295
  %v1301 = vmul.f32 1.0, %v1300
  %v1302 = vadd.f32 %v1213, %v339
  %v1303 = vmul.f32 %v1286, %v1302
  %v1304 = vadd.f32 %v1261, %v1303
  %v1305 = vtanh.pop %v1304
  %v1306 = vsub.f32 %v1089, %v1305
  %v1307 = vmul.f32 %v1301, %v1306
  %v1308 = vadd.f32 %v1305, %v1307
  %v1309 = vpack.c.bf16 %v1308, %v1308
  %1310 = vmatpush.bf16.msra.mxu0 %v845
  %1311 = vmatpush.bf16.msra.mxu0 %v842
  %1312 = vmatpush.bf16.msra.mxu0 %v839
  %1313 = vmatpush.bf16.msra.mxu0 %v836
  %1314 = vmatpush.bf16.msra.mxu0 %v833
  %1315 = vmatpush.bf16.msra.mxu0 %v830
  %1316 = vmatpush.bf16.msra.mxu0 %v827
  %1317 = vmatpush.bf16.msra.mxu0 %v824
  %1318 = vmatmul.bf16.gmra.mxu0 %v1309
  %v1319 = vpop.f32.mrf.mxu0
  %v1320 = vadd.f32 %v347, %v1319
  %v1321 = vpop.f32.mrf.mxu0
  %1322 = vdwg.mxu0
  %1323 = vmatpush.bf16.msra.mxu0 %v846
  %1324 = vmatpush.bf16.msra.mxu0 %v843
  %1325 = vmatpush.bf16.msra.mxu0 %v840
  %1326 = vmatpush.bf16.msra.mxu0 %v837
  %1327 = vmatpush.bf16.msra.mxu0 %v834
  %1328 = vmatpush.bf16.msra.mxu0 %v831
  %1329 = vmatpush.bf16.msra.mxu0 %v828
  %1330 = vmatpush.bf16.msra.mxu0 %v825
  %1331 = vmatmul.bf16.gmra.mxu0 %v1309
  %v1332 = vpop.f32.mrf.mxu0
  %v1333 = vadd.f32 %v348, %v1332
  %v1334 = vpop.f32.mrf.mxu0
  %1335 = vdwg.mxu0
  %1336 = vmatpush.bf16.msra.mxu0 %v847
  %1337 = vmatpush.bf16.msra.mxu0 %v844
  %1338 = vmatpush.bf16.msra.mxu0 %v841
  %1339 = vmatpush.bf16.msra.mxu0 %v838
  %1340 = vmatpush.bf16.msra.mxu0 %v835
  %1341 = vmatpush.bf16.msra.mxu0 %v832
  %1342 = vmatpush.bf16.msra.mxu0 %v829
  %1343 = vmatpush.bf16.msra.mxu0 %v826
  %1344 = vmatmul.bf16.gmra.mxu0 %v1309
  %v1345 = vpop.f32.mrf.mxu0
  %v1346 = vadd.f32 %v349, %v1345
  %v1347 = vpop.f32.mrf.mxu0
  %1348 = vdwg.mxu0
  %v1349 = vadd.f32 %v1320, %v1227
  %v1350 = vadd.f32 %v1333, %v1240
  %v1351 = vxor.u32 %v1349, 2147483648
  %v1352 = vxor.u32 %v1350, 2147483648
  %v1353 = vmul.f32 %v1351, 1.442695
  %v1354 = vpow.pop %v1353
  %v1355 = vmul.f32 %v1352, 1.442695
  %v1356 = vpow.pop %v1355
  %v1357 = vadd.f32 %v1354, 1.0
  %v1358 = vadd.f32 %v1356, 1.0
  %v1359 = vrcp.pop %v1357
  %v1360 = vmul.f32 %v1357, %v1359
  %v1361 = vsub.f32 1.0, %v1360
  %v1362 = vmul.f32 %v1359, %v1361
  %v1363 = vadd.f32 %v1359, %v1362
  %vm1364 = vweird.f32 %v1357
  %vm1365 = vweird.f32 %v1359
  %vm1366 = vmor %vm1364, %vm1365
  %v1367 = vsel %vm1366, %v1359, %v1363
  %v1368 = vand.u32 2147483647, %v1357
  %vm1369 = vcmp.eq.f32.partialorder %v1368, 8.507059e+37
  %v1370 = vand.u32 %v1357, 2147483648
  %v1371 = vor.u32 1.1754944e-38, %v1370
  %v1372 = vsel %vm1369, %v1371, %v1367
  %v1373 = vmul.f32 1.0, %v1372
  %v1374 = vrcp.pop %v1358
  %v1375 = vmul.f32 %v1358, %v1374
  %v1376 = vsub.f32 1.0, %v1375
  %v1377 = vmul.f32 %v1374, %v1376
  %v1378 = vadd.f32 %v1374, %v1377
  %vm1379 = vweird.f32 %v1358
  %vm1380 = vweird.f32 %v1374
  %vm1381 = vmor %vm1379, %vm1380
  %v1382 = vsel %vm1381, %v1374, %v1378
  %v1383 = vand.u32 2147483647, %v1358
  %vm1384 = vcmp.eq.f32.partialorder %v1383, 8.507059e+37
  %v1385 = vand.u32 %v1358, 2147483648
  %v1386 = vor.u32 1.1754944e-38, %v1385
  %v1387 = vsel %vm1384, %v1386, %v1382
  %v1388 = vmul.f32 1.0, %v1387
  %v1389 = vadd.f32 %v1253, %v343
  %v1390 = vmul.f32 %v1373, %v1389
  %v1391 = vadd.f32 %v1346, %v1390
  %v1392 = vtanh.pop %v1391
  %v1393 = vsub.f32 %v1176, %v1392
  %v1394 = vmul.f32 %v1388, %v1393
  %v1395 = vadd.f32 %v1392, %v1394
  %1396 = vmatpush.bf16.msra.mxu0 %v457
  %1397 = vmatpush.bf16.msra.mxu0 %v454
  %1398 = vmatpush.bf16.msra.mxu0 %v451
  %1399 = vmatpush.bf16.msra.mxu0 %v448
  %1400 = vmatpush.bf16.msra.mxu0 %v445
  %1401 = vmatpush.bf16.msra.mxu0 %v442
  %1402 = vmatpush.bf16.msra.mxu0 %v439
  %1403 = vmatpush.bf16.msra.mxu0 %v436
  %1404 = vmatmul.bf16.gmra.mxu0 %v1309
  %v1405 = vpop.f32.mrf.mxu0
  %v1406 = vadd.f32 0.0, %v1405
  %v1407 = vpop.f32.mrf.mxu0
  %1408 = vdwg.mxu0
  %1409 = vmatpush.bf16.msra.mxu0 %v458
  %1410 = vmatpush.bf16.msra.mxu0 %v455
  %1411 = vmatpush.bf16.msra.mxu0 %v452
  %1412 = vmatpush.bf16.msra.mxu0 %v449
  %1413 = vmatpush.bf16.msra.mxu0 %v446
  %1414 = vmatpush.bf16.msra.mxu0 %v443
  %1415 = vmatpush.bf16.msra.mxu0 %v440
  %1416 = vmatpush.bf16.msra.mxu0 %v437
  %1417 = vmatmul.bf16.gmra.mxu0 %v1309
  %v1418 = vpop.f32.mrf.mxu0
  %v1419 = vadd.f32 0.0, %v1418
  %v1420 = vpop.f32.mrf.mxu0
  %1421 = vdwg.mxu0
  %1422 = vmatpush.bf16.msra.mxu0 %v459
  %1423 = vmatpush.bf16.msra.mxu0 %v456
  %1424 = vmatpush.bf16.msra.mxu0 %v453
  %1425 = vmatpush.bf16.msra.mxu0 %v450
  %1426 = vmatpush.bf16.msra.mxu0 %v447
  %1427 = vmatpush.bf16.msra.mxu0 %v444
  %1428 = vmatpush.bf16.msra.mxu0 %v441
  %1429 = vmatpush.bf16.msra.mxu0 %v438
  %1430 = vmatmul.bf16.gmra.mxu0 %v1309
  %v1431 = vpop.f32.mrf.mxu0
  %v1432 = vadd.f32 0.0, %v1431
  %v1433 = vpop.f32.mrf.mxu0
  %1434 = vdwg.mxu0
  %v1435 = vpack.c.bf16 %v1395, %v1395
  %1436 = vmatpush.bf16.msra.mxu0 %v625
  %1437 = vmatpush.bf16.msra.mxu0 %v622
  %1438 = vmatpush.bf16.msra.mxu0 %v619
  %1439 = vmatpush.bf16.msra.mxu0 %v616
  %1440 = vmatpush.bf16.msra.mxu0 %v613
  %1441 = vmatpush.bf16.msra.mxu0 %v610
  %1442 = vmatpush.bf16.msra.mxu0 %v607
  %1443 = vmatpush.bf16.msra.mxu0 %v604
  %1444 = vmatmul.bf16.gmra.mxu0 %v1435
  %v1445 = vpop.f32.mrf.mxu0
  %v1446 = vadd.f32 0.0, %v1445
  %v1447 = vpop.f32.mrf.mxu0
  %1448 = vdwg.mxu0
  %1449 = vmatpush.bf16.msra.mxu0 %v626
  %1450 = vmatpush.bf16.msra.mxu0 %v623
  %1451 = vmatpush.bf16.msra.mxu0 %v620
  %1452 = vmatpush.bf16.msra.mxu0 %v617
  %1453 = vmatpush.bf16.msra.mxu0 %v614
  %1454 = vmatpush.bf16.msra.mxu0 %v611
  %1455 = vmatpush.bf16.msra.mxu0 %v608
  %1456 = vmatpush.bf16.msra.mxu0 %v605
  %1457 = vmatmul.bf16.gmra.mxu0 %v1435
  %v1458 = vpop.f32.mrf.mxu0
  %v1459 = vadd.f32 0.0, %v1458
  %v1460 = vpop.f32.mrf.mxu0
  %1461 = vdwg.mxu0
  %1462 = vmatpush.bf16.msra.mxu0 %v627
  %1463 = vmatpush.bf16.msra.mxu0 %v624
  %1464 = vmatpush.bf16.msra.mxu0 %v621
  %1465 = vmatpush.bf16.msra.mxu0 %v618
  %1466 = vmatpush.bf16.msra.mxu0 %v615
  %1467 = vmatpush.bf16.msra.mxu0 %v612
  %1468 = vmatpush.bf16.msra.mxu0 %v609
  %1469 = vmatpush.bf16.msra.mxu0 %v606
  %1470 = vmatmul.bf16.gmra.mxu0 %v1435
  %v1471 = vpop.f32.mrf.mxu0
  %v1472 = vadd.f32 0.0, %v1471
  %v1473 = vpop.f32.mrf.mxu0
  %1474 = vdwg.mxu0
  %s1475 = scalar_lea.vmem [#allocation4], 36
  %v1476 = vld [vmem:[%s1475] sm:$0xff]
  %v1477 = vld [vmem:[%s1475 + $0x8] sm:$0xf]
  %v1478 = vunpack.c.l.bf16 %v1476
  %v1479 = vunpack.c.h.bf16 %v1476
  %v1480 = vunpack.c.l.bf16 %v1477
  %v1481 = vadd.f32 %v1478, %v1406
  %v1482 = vadd.f32 %v1479, %v1419
  %v1483 = vxor.u32 %v1481, 2147483648
  %v1484 = vxor.u32 %v1482, 2147483648
  %v1485 = vmul.f32 %v1483, 1.442695
  %v1486 = vpow.pop %v1485
  %v1487 = vmul.f32 %v1484, 1.442695
  %v1488 = vpow.pop %v1487
  %v1489 = vadd.f32 %v1486, 1.0
  %v1490 = vadd.f32 %v1488, 1.0
  %v1491 = vrcp.pop %v1489
  %v1492 = vmul.f32 %v1489, %v1491
  %v1493 = vsub.f32 1.0, %v1492
  %v1494 = vmul.f32 %v1491, %v1493
  %v1495 = vadd.f32 %v1491, %v1494
  %vm1496 = vweird.f32 %v1489
  %vm1497 = vweird.f32 %v1491
  %vm1498 = vmor %vm1496, %vm1497
  %v1499 = vsel %vm1498, %v1491, %v1495
  %v1500 = vand.u32 2147483647, %v1489
  %vm1501 = vcmp.eq.f32.partialorder %v1500, 8.507059e+37
  %v1502 = vand.u32 %v1489, 2147483648
  %v1503 = vor.u32 1.1754944e-38, %v1502
  %v1504 = vsel %vm1501, %v1503, %v1499
  %v1505 = vmul.f32 1.0, %v1504
  %v1506 = vrcp.pop %v1490
  %v1507 = vmul.f32 %v1490, %v1506
  %v1508 = vsub.f32 1.0, %v1507
  %v1509 = vmul.f32 %v1506, %v1508
  %v1510 = vadd.f32 %v1506, %v1509
  %vm1511 = vweird.f32 %v1490
  %vm1512 = vweird.f32 %v1506
  %vm1513 = vmor %vm1511, %vm1512
  %v1514 = vsel %vm1513, %v1506, %v1510
  %v1515 = vand.u32 2147483647, %v1490
  %vm1516 = vcmp.eq.f32.partialorder %v1515, 8.507059e+37
  %v1517 = vand.u32 %v1490, 2147483648
  %v1518 = vor.u32 1.1754944e-38, %v1517
  %v1519 = vsel %vm1516, %v1518, %v1514
  %v1520 = vmul.f32 1.0, %v1519
  %v1521 = vadd.f32 %v1432, %v339
  %v1522 = vmul.f32 %v1505, %v1521
  %v1523 = vadd.f32 %v1480, %v1522
  %v1524 = vtanh.pop %v1523
  %v1525 = vsub.f32 %v1308, %v1524
  %v1526 = vmul.f32 %v1520, %v1525
  %v1527 = vadd.f32 %v1524, %v1526
  %v1528 = vpack.c.bf16 %v1527, %v1527
  %1529 = vmatpush.bf16.msra.mxu0 %v845
  %1530 = vmatpush.bf16.msra.mxu0 %v842
  %1531 = vmatpush.bf16.msra.mxu0 %v839
  %1532 = vmatpush.bf16.msra.mxu0 %v836
  %1533 = vmatpush.bf16.msra.mxu0 %v833
  %1534 = vmatpush.bf16.msra.mxu0 %v830
  %1535 = vmatpush.bf16.msra.mxu0 %v827
  %1536 = vmatpush.bf16.msra.mxu0 %v824
  %1537 = vmatmul.bf16.gmra.mxu0 %v1528
  %v1538 = vpop.f32.mrf.mxu0
  %v1539 = vadd.f32 %v347, %v1538
  %v1540 = vpop.f32.mrf.mxu0
  %1541 = vdwg.mxu0
  %1542 = vmatpush.bf16.msra.mxu0 %v846
  %1543 = vmatpush.bf16.msra.mxu0 %v843
  %1544 = vmatpush.bf16.msra.mxu0 %v840
  %1545 = vmatpush.bf16.msra.mxu0 %v837
  %1546 = vmatpush.bf16.msra.mxu0 %v834
  %1547 = vmatpush.bf16.msra.mxu0 %v831
  %1548 = vmatpush.bf16.msra.mxu0 %v828
  %1549 = vmatpush.bf16.msra.mxu0 %v825
  %1550 = vmatmul.bf16.gmra.mxu0 %v1528
  %v1551 = vpop.f32.mrf.mxu0
  %v1552 = vadd.f32 %v348, %v1551
  %v1553 = vpop.f32.mrf.mxu0
  %1554 = vdwg.mxu0
  %1555 = vmatpush.bf16.msra.mxu0 %v847
  %1556 = vmatpush.bf16.msra.mxu0 %v844
  %1557 = vmatpush.bf16.msra.mxu0 %v841
  %1558 = vmatpush.bf16.msra.mxu0 %v838
  %1559 = vmatpush.bf16.msra.mxu0 %v835
  %1560 = vmatpush.bf16.msra.mxu0 %v832
  %1561 = vmatpush.bf16.msra.mxu0 %v829
  %1562 = vmatpush.bf16.msra.mxu0 %v826
  %1563 = vmatmul.bf16.gmra.mxu0 %v1528
  %v1564 = vpop.f32.mrf.mxu0
  %v1565 = vadd.f32 %v349, %v1564
  %v1566 = vpop.f32.mrf.mxu0
  %1567 = vdwg.mxu0
  %v1568 = vadd.f32 %v1539, %v1446
  %v1569 = vadd.f32 %v1552, %v1459
  %v1570 = vxor.u32 %v1568, 2147483648
  %v1571 = vxor.u32 %v1569, 2147483648
  %v1572 = vmul.f32 %v1570, 1.442695
  %v1573 = vpow.pop %v1572
  %v1574 = vmul.f32 %v1571, 1.442695
  %v1575 = vpow.pop %v1574
  %v1576 = vadd.f32 %v1573, 1.0
  %v1577 = vadd.f32 %v1575, 1.0
  %v1578 = vrcp.pop %v1576
  %v1579 = vmul.f32 %v1576, %v1578
  %v1580 = vsub.f32 1.0, %v1579
  %v1581 = vmul.f32 %v1578, %v1580
  %v1582 = vadd.f32 %v1578, %v1581
  %vm1583 = vweird.f32 %v1576
  %vm1584 = vweird.f32 %v1578
  %vm1585 = vmor %vm1583, %vm1584
  %v1586 = vsel %vm1585, %v1578, %v1582
  %v1587 = vand.u32 2147483647, %v1576
  %vm1588 = vcmp.eq.f32.partialorder %v1587, 8.507059e+37
  %v1589 = vand.u32 %v1576, 2147483648
  %v1590 = vor.u32 1.1754944e-38, %v1589
  %v1591 = vsel %vm1588, %v1590, %v1586
  %v1592 = vmul.f32 1.0, %v1591
  %v1593 = vrcp.pop %v1577
  %v1594 = vmul.f32 %v1577, %v1593
  %v1595 = vsub.f32 1.0, %v1594
  %v1596 = vmul.f32 %v1593, %v1595
  %v1597 = vadd.f32 %v1593, %v1596
  %vm1598 = vweird.f32 %v1577
  %vm1599 = vweird.f32 %v1593
  %vm1600 = vmor %vm1598, %vm1599
  %v1601 = vsel %vm1600, %v1593, %v1597
  %v1602 = vand.u32 2147483647, %v1577
  %vm1603 = vcmp.eq.f32.partialorder %v1602, 8.507059e+37
  %v1604 = vand.u32 %v1577, 2147483648
  %v1605 = vor.u32 1.1754944e-38, %v1604
  %v1606 = vsel %vm1603, %v1605, %v1601
  %v1607 = vmul.f32 1.0, %v1606
  %v1608 = vadd.f32 %v1472, %v343
  %v1609 = vmul.f32 %v1592, %v1608
  %v1610 = vadd.f32 %v1565, %v1609
  %v1611 = vtanh.pop %v1610
  %v1612 = vsub.f32 %v1395, %v1611
  %v1613 = vmul.f32 %v1607, %v1612
  %v1614 = vadd.f32 %v1611, %v1613
  %1615 = vmatpush.bf16.msra.mxu0 %v457
  %1616 = vmatpush.bf16.msra.mxu0 %v454
  %1617 = vmatpush.bf16.msra.mxu0 %v451
  %1618 = vmatpush.bf16.msra.mxu0 %v448
  %1619 = vmatpush.bf16.msra.mxu0 %v445
  %1620 = vmatpush.bf16.msra.mxu0 %v442
  %1621 = vmatpush.bf16.msra.mxu0 %v439
  %1622 = vmatpush.bf16.msra.mxu0 %v436
  %1623 = vmatmul.bf16.gmra.mxu0 %v1528
  %v1624 = vpop.f32.mrf.mxu0
  %v1625 = vadd.f32 0.0, %v1624
  %v1626 = vpop.f32.mrf.mxu0
  %1627 = vdwg.mxu0
  %1628 = vmatpush.bf16.msra.mxu0 %v458
  %1629 = vmatpush.bf16.msra.mxu0 %v455
  %1630 = vmatpush.bf16.msra.mxu0 %v452
  %1631 = vmatpush.bf16.msra.mxu0 %v449
  %1632 = vmatpush.bf16.msra.mxu0 %v446
  %1633 = vmatpush.bf16.msra.mxu0 %v443
  %1634 = vmatpush.bf16.msra.mxu0 %v440
  %1635 = vmatpush.bf16.msra.mxu0 %v437
  %1636 = vmatmul.bf16.gmra.mxu0 %v1528
  %v1637 = vpop.f32.mrf.mxu0
  %v1638 = vadd.f32 0.0, %v1637
  %v1639 = vpop.f32.mrf.mxu0
  %1640 = vdwg.mxu0
  %1641 = vmatpush.bf16.msra.mxu0 %v459
  %1642 = vmatpush.bf16.msra.mxu0 %v456
  %1643 = vmatpush.bf16.msra.mxu0 %v453
  %1644 = vmatpush.bf16.msra.mxu0 %v450
  %1645 = vmatpush.bf16.msra.mxu0 %v447
  %1646 = vmatpush.bf16.msra.mxu0 %v444
  %1647 = vmatpush.bf16.msra.mxu0 %v441
  %1648 = vmatpush.bf16.msra.mxu0 %v438
  %1649 = vmatmul.bf16.gmra.mxu0 %v1528
  %v1650 = vpop.f32.mrf.mxu0
  %v1651 = vadd.f32 0.0, %v1650
  %v1652 = vpop.f32.mrf.mxu0
  %1653 = vdwg.mxu0
  %v1654 = vpack.c.bf16 %v1614, %v1614
  %1655 = vmatpush.bf16.msra.mxu0 %v625
  %1656 = vmatpush.bf16.msra.mxu0 %v622
  %1657 = vmatpush.bf16.msra.mxu0 %v619
  %1658 = vmatpush.bf16.msra.mxu0 %v616
  %1659 = vmatpush.bf16.msra.mxu0 %v613
  %1660 = vmatpush.bf16.msra.mxu0 %v610
  %1661 = vmatpush.bf16.msra.mxu0 %v607
  %1662 = vmatpush.bf16.msra.mxu0 %v604
  %1663 = vmatmul.bf16.gmra.mxu0 %v1654
  %v1664 = vpop.f32.mrf.mxu0
  %v1665 = vadd.f32 0.0, %v1664
  %v1666 = vpop.f32.mrf.mxu0
  %1667 = vdwg.mxu0
  %1668 = vmatpush.bf16.msra.mxu0 %v626
  %1669 = vmatpush.bf16.msra.mxu0 %v623
  %1670 = vmatpush.bf16.msra.mxu0 %v620
  %1671 = vmatpush.bf16.msra.mxu0 %v617
  %1672 = vmatpush.bf16.msra.mxu0 %v614
  %1673 = vmatpush.bf16.msra.mxu0 %v611
  %1674 = vmatpush.bf16.msra.mxu0 %v608
  %1675 = vmatpush.bf16.msra.mxu0 %v605
  %1676 = vmatmul.bf16.gmra.mxu0 %v1654
  %v1677 = vpop.f32.mrf.mxu0
  %v1678 = vadd.f32 0.0, %v1677
  %v1679 = vpop.f32.mrf.mxu0
  %1680 = vdwg.mxu0
  %1681 = vmatpush.bf16.msra.mxu0 %v627
  %1682 = vmatpush.bf16.msra.mxu0 %v624
  %1683 = vmatpush.bf16.msra.mxu0 %v621
  %1684 = vmatpush.bf16.msra.mxu0 %v618
  %1685 = vmatpush.bf16.msra.mxu0 %v615
  %1686 = vmatpush.bf16.msra.mxu0 %v612
  %1687 = vmatpush.bf16.msra.mxu0 %v609
  %1688 = vmatpush.bf16.msra.mxu0 %v606
  %1689 = vmatmul.bf16.gmra.mxu0 %v1654
  %v1690 = vpop.f32.mrf.mxu0
  %v1691 = vadd.f32 0.0, %v1690
  %v1692 = vpop.f32.mrf.mxu0
  %1693 = vdwg.mxu0
  %s1694 = scalar_lea.vmem [#allocation4], 48
  %v1695 = vld [vmem:[%s1694] sm:$0xff]
  %v1696 = vld [vmem:[%s1694 + $0x8] sm:$0xf]
  %v1697 = vunpack.c.l.bf16 %v1695
  %v1698 = vunpack.c.h.bf16 %v1695
  %v1699 = vunpack.c.l.bf16 %v1696
  %v1700 = vadd.f32 %v1697, %v1625
  %v1701 = vadd.f32 %v1698, %v1638
  %v1702 = vxor.u32 %v1700, 2147483648
  %v1703 = vxor.u32 %v1701, 2147483648
  %v1704 = vmul.f32 %v1702, 1.442695
  %v1705 = vpow.pop %v1704
  %v1706 = vmul.f32 %v1703, 1.442695
  %v1707 = vpow.pop %v1706
  %v1708 = vadd.f32 %v1705, 1.0
  %v1709 = vadd.f32 %v1707, 1.0
  %v1710 = vrcp.pop %v1708
  %v1711 = vmul.f32 %v1708, %v1710
  %v1712 = vsub.f32 1.0, %v1711
  %v1713 = vmul.f32 %v1710, %v1712
  %v1714 = vadd.f32 %v1710, %v1713
  %vm1715 = vweird.f32 %v1708
  %vm1716 = vweird.f32 %v1710
  %vm1717 = vmor %vm1715, %vm1716
  %v1718 = vsel %vm1717, %v1710, %v1714
  %v1719 = vand.u32 2147483647, %v1708
  %vm1720 = vcmp.eq.f32.partialorder %v1719, 8.507059e+37
  %v1721 = vand.u32 %v1708, 2147483648
  %v1722 = vor.u32 1.1754944e-38, %v1721
  %v1723 = vsel %vm1720, %v1722, %v1718
  %v1724 = vmul.f32 1.0, %v1723
  %v1725 = vrcp.pop %v1709
  %v1726 = vmul.f32 %v1709, %v1725
  %v1727 = vsub.f32 1.0, %v1726
  %v1728 = vmul.f32 %v1725, %v1727
  %v1729 = vadd.f32 %v1725, %v1728
  %vm1730 = vweird.f32 %v1709
  %vm1731 = vweird.f32 %v1725
  %vm1732 = vmor %vm1730, %vm1731
  %v1733 = vsel %vm1732, %v1725, %v1729
  %v1734 = vand.u32 2147483647, %v1709
  %vm1735 = vcmp.eq.f32.partialorder %v1734, 8.507059e+37
  %v1736 = vand.u32 %v1709, 2147483648
  %v1737 = vor.u32 1.1754944e-38, %v1736
  %v1738 = vsel %vm1735, %v1737, %v1733
  %v1739 = vmul.f32 1.0, %v1738
  %v1740 = vadd.f32 %v1651, %v339
  %v1741 = vmul.f32 %v1724, %v1740
  %v1742 = vadd.f32 %v1699, %v1741
  %v1743 = vtanh.pop %v1742
  %v1744 = vsub.f32 %v1527, %v1743
  %v1745 = vmul.f32 %v1739, %v1744
  %v1746 = vadd.f32 %v1743, %v1745
  %v1747 = vpack.c.bf16 %v1746, %v1746
  %1748 = vmatpush.bf16.msra.mxu0 %v845
  %1749 = vmatpush.bf16.msra.mxu0 %v842
  %1750 = vmatpush.bf16.msra.mxu0 %v839
  %1751 = vmatpush.bf16.msra.mxu0 %v836
  %1752 = vmatpush.bf16.msra.mxu0 %v833
  %1753 = vmatpush.bf16.msra.mxu0 %v830
  %1754 = vmatpush.bf16.msra.mxu0 %v827
  %1755 = vmatpush.bf16.msra.mxu0 %v824
  %1756 = vmatmul.bf16.gmra.mxu0 %v1747
  %v1757 = vpop.f32.mrf.mxu0
  %v1758 = vadd.f32 %v347, %v1757
  %v1759 = vpop.f32.mrf.mxu0
  %1760 = vdwg.mxu0
  %1761 = vmatpush.bf16.msra.mxu0 %v846
  %1762 = vmatpush.bf16.msra.mxu0 %v843
  %1763 = vmatpush.bf16.msra.mxu0 %v840
  %1764 = vmatpush.bf16.msra.mxu0 %v837
  %1765 = vmatpush.bf16.msra.mxu0 %v834
  %1766 = vmatpush.bf16.msra.mxu0 %v831
  %1767 = vmatpush.bf16.msra.mxu0 %v828
  %1768 = vmatpush.bf16.msra.mxu0 %v825
  %1769 = vmatmul.bf16.gmra.mxu0 %v1747
  %v1770 = vpop.f32.mrf.mxu0
  %v1771 = vadd.f32 %v348, %v1770
  %v1772 = vpop.f32.mrf.mxu0
  %1773 = vdwg.mxu0
  %1774 = vmatpush.bf16.msra.mxu0 %v847
  %1775 = vmatpush.bf16.msra.mxu0 %v844
  %1776 = vmatpush.bf16.msra.mxu0 %v841
  %1777 = vmatpush.bf16.msra.mxu0 %v838
  %1778 = vmatpush.bf16.msra.mxu0 %v835
  %1779 = vmatpush.bf16.msra.mxu0 %v832
  %1780 = vmatpush.bf16.msra.mxu0 %v829
  %1781 = vmatpush.bf16.msra.mxu0 %v826
  %1782 = vmatmul.bf16.gmra.mxu0 %v1747
  %v1783 = vpop.f32.mrf.mxu0
  %v1784 = vadd.f32 %v349, %v1783
  %v1785 = vpop.f32.mrf.mxu0
  %1786 = vdwg.mxu0
  %v1787 = vadd.f32 %v1758, %v1665
  %v1788 = vadd.f32 %v1771, %v1678
  %v1789 = vxor.u32 %v1787, 2147483648
  %v1790 = vxor.u32 %v1788, 2147483648
  %v1791 = vmul.f32 %v1789, 1.442695
  %v1792 = vpow.pop %v1791
  %v1793 = vmul.f32 %v1790, 1.442695
  %v1794 = vpow.pop %v1793
  %v1795 = vadd.f32 %v1792, 1.0
  %v1796 = vadd.f32 %v1794, 1.0
  %v1797 = vrcp.pop %v1795
  %v1798 = vmul.f32 %v1795, %v1797
  %v1799 = vsub.f32 1.0, %v1798
  %v1800 = vmul.f32 %v1797, %v1799
  %v1801 = vadd.f32 %v1797, %v1800
  %vm1802 = vweird.f32 %v1795
  %vm1803 = vweird.f32 %v1797
  %vm1804 = vmor %vm1802, %vm1803
  %v1805 = vsel %vm1804, %v1797, %v1801
  %v1806 = vand.u32 2147483647, %v1795
  %vm1807 = vcmp.eq.f32.partialorder %v1806, 8.507059e+37
  %v1808 = vand.u32 %v1795, 2147483648
  %v1809 = vor.u32 1.1754944e-38, %v1808
  %v1810 = vsel %vm1807, %v1809, %v1805
  %v1811 = vmul.f32 1.0, %v1810
  %v1812 = vrcp.pop %v1796
  %v1813 = vmul.f32 %v1796, %v1812
  %v1814 = vsub.f32 1.0, %v1813
  %v1815 = vmul.f32 %v1812, %v1814
  %v1816 = vadd.f32 %v1812, %v1815
  %vm1817 = vweird.f32 %v1796
  %vm1818 = vweird.f32 %v1812
  %vm1819 = vmor %vm1817, %vm1818
  %v1820 = vsel %vm1819, %v1812, %v1816
  %v1821 = vand.u32 2147483647, %v1796
  %vm1822 = vcmp.eq.f32.partialorder %v1821, 8.507059e+37
  %v1823 = vand.u32 %v1796, 2147483648
  %v1824 = vor.u32 1.1754944e-38, %v1823
  %v1825 = vsel %vm1822, %v1824, %v1820
  %v1826 = vmul.f32 1.0, %v1825
  %v1827 = vadd.f32 %v1691, %v343
  %v1828 = vmul.f32 %v1811, %v1827
  %v1829 = vadd.f32 %v1784, %v1828
  %v1830 = vtanh.pop %v1829
  %v1831 = vsub.f32 %v1614, %v1830
  %v1832 = vmul.f32 %v1826, %v1831
  %v1833 = vadd.f32 %v1830, %v1832
  %1834 = vmatpush.bf16.msra.mxu0 %v457
  %1835 = vmatpush.bf16.msra.mxu0 %v454
  %1836 = vmatpush.bf16.msra.mxu0 %v451
  %1837 = vmatpush.bf16.msra.mxu0 %v448
  %1838 = vmatpush.bf16.msra.mxu0 %v445
  %1839 = vmatpush.bf16.msra.mxu0 %v442
  %1840 = vmatpush.bf16.msra.mxu0 %v439
  %1841 = vmatpush.bf16.msra.mxu0 %v436
  %1842 = vmatmul.bf16.gmra.mxu0 %v1747
  %v1843 = vpop.f32.mrf.mxu0
  %v1844 = vadd.f32 0.0, %v1843
  %v1845 = vpop.f32.mrf.mxu0
  %1846 = vdwg.mxu0
  %1847 = vmatpush.bf16.msra.mxu0 %v458
  %1848 = vmatpush.bf16.msra.mxu0 %v455
  %1849 = vmatpush.bf16.msra.mxu0 %v452
  %1850 = vmatpush.bf16.msra.mxu0 %v449
  %1851 = vmatpush.bf16.msra.mxu0 %v446
  %1852 = vmatpush.bf16.msra.mxu0 %v443
  %1853 = vmatpush.bf16.msra.mxu0 %v440
  %1854 = vmatpush.bf16.msra.mxu0 %v437
  %1855 = vmatmul.bf16.gmra.mxu0 %v1747
  %v1856 = vpop.f32.mrf.mxu0
  %v1857 = vadd.f32 0.0, %v1856
  %v1858 = vpop.f32.mrf.mxu0
  %1859 = vdwg.mxu0
  %1860 = vmatpush.bf16.msra.mxu0 %v459
  %1861 = vmatpush.bf16.msra.mxu0 %v456
  %1862 = vmatpush.bf16.msra.mxu0 %v453
  %1863 = vmatpush.bf16.msra.mxu0 %v450
  %1864 = vmatpush.bf16.msra.mxu0 %v447
  %1865 = vmatpush.bf16.msra.mxu0 %v444
  %1866 = vmatpush.bf16.msra.mxu0 %v441
  %1867 = vmatpush.bf16.msra.mxu0 %v438
  %1868 = vmatmul.bf16.gmra.mxu0 %v1747
  %v1869 = vpop.f32.mrf.mxu0
  %v1870 = vadd.f32 0.0, %v1869
  %v1871 = vpop.f32.mrf.mxu0
  %1872 = vdwg.mxu0
  %v1873 = vpack.c.bf16 %v1833, %v1833
  %1874 = vmatpush.bf16.msra.mxu0 %v625
  %1875 = vmatpush.bf16.msra.mxu0 %v622
  %1876 = vmatpush.bf16.msra.mxu0 %v619
  %1877 = vmatpush.bf16.msra.mxu0 %v616
  %1878 = vmatpush.bf16.msra.mxu0 %v613
  %1879 = vmatpush.bf16.msra.mxu0 %v610
  %1880 = vmatpush.bf16.msra.mxu0 %v607
  %1881 = vmatpush.bf16.msra.mxu0 %v604
  %1882 = vmatmul.bf16.gmra.mxu0 %v1873
  %v1883 = vpop.f32.mrf.mxu0
  %v1884 = vadd.f32 0.0, %v1883
  %v1885 = vpop.f32.mrf.mxu0
  %1886 = vdwg.mxu0
  %1887 = vmatpush.bf16.msra.mxu0 %v626
  %1888 = vmatpush.bf16.msra.mxu0 %v623
  %1889 = vmatpush.bf16.msra.mxu0 %v620
  %1890 = vmatpush.bf16.msra.mxu0 %v617
  %1891 = vmatpush.bf16.msra.mxu0 %v614
  %1892 = vmatpush.bf16.msra.mxu0 %v611
  %1893 = vmatpush.bf16.msra.mxu0 %v608
  %1894 = vmatpush.bf16.msra.mxu0 %v605
  %1895 = vmatmul.bf16.gmra.mxu0 %v1873
  %v1896 = vpop.f32.mrf.mxu0
  %v1897 = vadd.f32 0.0, %v1896
  %v1898 = vpop.f32.mrf.mxu0
  %1899 = vdwg.mxu0
  %1900 = vmatpush.bf16.msra.mxu0 %v627
  %1901 = vmatpush.bf16.msra.mxu0 %v624
  %1902 = vmatpush.bf16.msra.mxu0 %v621
  %1903 = vmatpush.bf16.msra.mxu0 %v618
  %1904 = vmatpush.bf16.msra.mxu0 %v615
  %1905 = vmatpush.bf16.msra.mxu0 %v612
  %1906 = vmatpush.bf16.msra.mxu0 %v609
  %1907 = vmatpush.bf16.msra.mxu0 %v606
  %1908 = vmatmul.bf16.gmra.mxu0 %v1873
  %v1909 = vpop.f32.mrf.mxu0
  %v1910 = vadd.f32 0.0, %v1909
  %v1911 = vpop.f32.mrf.mxu0
  %1912 = vdwg.mxu0
  %s1913 = scalar_lea.vmem [#allocation4], 60
  %v1914 = vld [vmem:[%s1913] sm:$0xff]
  %v1915 = vld [vmem:[%s1913 + $0x8] sm:$0xf]
  %v1916 = vunpack.c.l.bf16 %v1914
  %v1917 = vunpack.c.h.bf16 %v1914
  %v1918 = vunpack.c.l.bf16 %v1915
  %v1919 = vadd.f32 %v1916, %v1844
  %v1920 = vadd.f32 %v1917, %v1857
  %v1921 = vxor.u32 %v1919, 2147483648
  %v1922 = vxor.u32 %v1920, 2147483648
  %v1923 = vmul.f32 %v1921, 1.442695
  %v1924 = vpow.pop %v1923
  %v1925 = vmul.f32 %v1922, 1.442695
  %v1926 = vpow.pop %v1925
  %v1927 = vadd.f32 %v1924, 1.0
  %v1928 = vadd.f32 %v1926, 1.0
  %v1929 = vrcp.pop %v1927
  %v1930 = vmul.f32 %v1927, %v1929
  %v1931 = vsub.f32 1.0, %v1930
  %v1932 = vmul.f32 %v1929, %v1931
  %v1933 = vadd.f32 %v1929, %v1932
  %vm1934 = vweird.f32 %v1927
  %vm1935 = vweird.f32 %v1929
  %vm1936 = vmor %vm1934, %vm1935
  %v1937 = vsel %vm1936, %v1929, %v1933
  %v1938 = vand.u32 2147483647, %v1927
  %vm1939 = vcmp.eq.f32.partialorder %v1938, 8.507059e+37
  %v1940 = vand.u32 %v1927, 2147483648
  %v1941 = vor.u32 1.1754944e-38, %v1940
  %v1942 = vsel %vm1939, %v1941, %v1937
  %v1943 = vmul.f32 1.0, %v1942
  %v1944 = vrcp.pop %v1928
  %v1945 = vmul.f32 %v1928, %v1944
  %v1946 = vsub.f32 1.0, %v1945
  %v1947 = vmul.f32 %v1944, %v1946
  %v1948 = vadd.f32 %v1944, %v1947
  %vm1949 = vweird.f32 %v1928
  %vm1950 = vweird.f32 %v1944
  %vm1951 = vmor %vm1949, %vm1950
  %v1952 = vsel %vm1951, %v1944, %v1948
  %v1953 = vand.u32 2147483647, %v1928
  %vm1954 = vcmp.eq.f32.partialorder %v1953, 8.507059e+37
  %v1955 = vand.u32 %v1928, 2147483648
  %v1956 = vor.u32 1.1754944e-38, %v1955
  %v1957 = vsel %vm1954, %v1956, %v1952
  %v1958 = vmul.f32 1.0, %v1957
  %v1959 = vadd.f32 %v1870, %v339
  %v1960 = vmul.f32 %v1943, %v1959
  %v1961 = vadd.f32 %v1918, %v1960
  %v1962 = vtanh.pop %v1961
  %v1963 = vsub.f32 %v1746, %v1962
  %v1964 = vmul.f32 %v1958, %v1963
  %v1965 = vadd.f32 %v1962, %v1964
  %v1966 = vpack.c.bf16 %v1965, %v1965
  %1967 = vmatpush.bf16.msra.mxu0 %v845
  %1968 = vmatpush.bf16.msra.mxu0 %v842
  %1969 = vmatpush.bf16.msra.mxu0 %v839
  %1970 = vmatpush.bf16.msra.mxu0 %v836
  %1971 = vmatpush.bf16.msra.mxu0 %v833
  %1972 = vmatpush.bf16.msra.mxu0 %v830
  %1973 = vmatpush.bf16.msra.mxu0 %v827
  %1974 = vmatpush.bf16.msra.mxu0 %v824
  %1975 = vmatmul.bf16.gmra.mxu0 %v1966
  %v1976 = vpop.f32.mrf.mxu0
  %v1977 = vadd.f32 %v347, %v1976
  %v1978 = vpop.f32.mrf.mxu0
  %1979 = vdwg.mxu0
  %1980 = vmatpush.bf16.msra.mxu0 %v846
  %1981 = vmatpush.bf16.msra.mxu0 %v843
  %1982 = vmatpush.bf16.msra.mxu0 %v840
  %1983 = vmatpush.bf16.msra.mxu0 %v837
  %1984 = vmatpush.bf16.msra.mxu0 %v834
  %1985 = vmatpush.bf16.msra.mxu0 %v831
  %1986 = vmatpush.bf16.msra.mxu0 %v828
  %1987 = vmatpush.bf16.msra.mxu0 %v825
  %1988 = vmatmul.bf16.gmra.mxu0 %v1966
  %v1989 = vpop.f32.mrf.mxu0
  %v1990 = vadd.f32 %v348, %v1989
  %v1991 = vpop.f32.mrf.mxu0
  %1992 = vdwg.mxu0
  %1993 = vmatpush.bf16.msra.mxu0 %v847
  %1994 = vmatpush.bf16.msra.mxu0 %v844
  %1995 = vmatpush.bf16.msra.mxu0 %v841
  %1996 = vmatpush.bf16.msra.mxu0 %v838
  %1997 = vmatpush.bf16.msra.mxu0 %v835
  %1998 = vmatpush.bf16.msra.mxu0 %v832
  %1999 = vmatpush.bf16.msra.mxu0 %v829
  %2000 = vmatpush.bf16.msra.mxu0 %v826
  %2001 = vmatmul.bf16.gmra.mxu0 %v1966
  %v2002 = vpop.f32.mrf.mxu0
  %v2003 = vadd.f32 %v349, %v2002
  %v2004 = vpop.f32.mrf.mxu0
  %2005 = vdwg.mxu0
  %v2006 = vadd.f32 %v1977, %v1884
  %v2007 = vadd.f32 %v1990, %v1897
  %v2008 = vxor.u32 %v2006, 2147483648
  %v2009 = vxor.u32 %v2007, 2147483648
  %v2010 = vmul.f32 %v2008, 1.442695
  %v2011 = vpow.pop %v2010
  %v2012 = vmul.f32 %v2009, 1.442695
  %v2013 = vpow.pop %v2012
  %v2014 = vadd.f32 %v2011, 1.0
  %v2015 = vadd.f32 %v2013, 1.0
  %v2016 = vrcp.pop %v2014
  %v2017 = vmul.f32 %v2014, %v2016
  %v2018 = vsub.f32 1.0, %v2017
  %v2019 = vmul.f32 %v2016, %v2018
  %v2020 = vadd.f32 %v2016, %v2019
  %vm2021 = vweird.f32 %v2014
  %vm2022 = vweird.f32 %v2016
  %vm2023 = vmor %vm2021, %vm2022
  %v2024 = vsel %vm2023, %v2016, %v2020
  %v2025 = vand.u32 2147483647, %v2014
  %vm2026 = vcmp.eq.f32.partialorder %v2025, 8.507059e+37
  %v2027 = vand.u32 %v2014, 2147483648
  %v2028 = vor.u32 1.1754944e-38, %v2027
  %v2029 = vsel %vm2026, %v2028, %v2024
  %v2030 = vmul.f32 1.0, %v2029
  %v2031 = vrcp.pop %v2015
  %v2032 = vmul.f32 %v2015, %v2031
  %v2033 = vsub.f32 1.0, %v2032
  %v2034 = vmul.f32 %v2031, %v2033
  %v2035 = vadd.f32 %v2031, %v2034
  %vm2036 = vweird.f32 %v2015
  %vm2037 = vweird.f32 %v2031
  %vm2038 = vmor %vm2036, %vm2037
  %v2039 = vsel %vm2038, %v2031, %v2035
  %v2040 = vand.u32 2147483647, %v2015
  %vm2041 = vcmp.eq.f32.partialorder %v2040, 8.507059e+37
  %v2042 = vand.u32 %v2015, 2147483648
  %v2043 = vor.u32 1.1754944e-38, %v2042
  %v2044 = vsel %vm2041, %v2043, %v2039
  %v2045 = vmul.f32 1.0, %v2044
  %v2046 = vadd.f32 %v1910, %v343
  %v2047 = vmul.f32 %v2030, %v2046
  %v2048 = vadd.f32 %v2003, %v2047
  %v2049 = vtanh.pop %v2048
  %v2050 = vsub.f32 %v1833, %v2049
  %v2051 = vmul.f32 %v2045, %v2050
  %v2052 = vadd.f32 %v2049, %v2051
  %2053 = vmatpush.bf16.msra.mxu0 %v457
  %2054 = vmatpush.bf16.msra.mxu0 %v454
  %2055 = vmatpush.bf16.msra.mxu0 %v451
  %2056 = vmatpush.bf16.msra.mxu0 %v448
  %2057 = vmatpush.bf16.msra.mxu0 %v445
  %2058 = vmatpush.bf16.msra.mxu0 %v442
  %2059 = vmatpush.bf16.msra.mxu0 %v439
  %2060 = vmatpush.bf16.msra.mxu0 %v436
  %2061 = vmatmul.bf16.gmra.mxu0 %v1966
  %v2062 = vpop.f32.mrf.mxu0
  %v2063 = vadd.f32 0.0, %v2062
  %v2064 = vpop.f32.mrf.mxu0
  %2065 = vdwg.mxu0
  %2066 = vmatpush.bf16.msra.mxu0 %v458
  %2067 = vmatpush.bf16.msra.mxu0 %v455
  %2068 = vmatpush.bf16.msra.mxu0 %v452
  %2069 = vmatpush.bf16.msra.mxu0 %v449
  %2070 = vmatpush.bf16.msra.mxu0 %v446
  %2071 = vmatpush.bf16.msra.mxu0 %v443
  %2072 = vmatpush.bf16.msra.mxu0 %v440
  %2073 = vmatpush.bf16.msra.mxu0 %v437
  %2074 = vmatmul.bf16.gmra.mxu0 %v1966
  %v2075 = vpop.f32.mrf.mxu0
  %v2076 = vadd.f32 0.0, %v2075
  %v2077 = vpop.f32.mrf.mxu0
  %2078 = vdwg.mxu0
  %2079 = vmatpush.bf16.msra.mxu0 %v459
  %2080 = vmatpush.bf16.msra.mxu0 %v456
  %2081 = vmatpush.bf16.msra.mxu0 %v453
  %2082 = vmatpush.bf16.msra.mxu0 %v450
  %2083 = vmatpush.bf16.msra.mxu0 %v447
  %2084 = vmatpush.bf16.msra.mxu0 %v444
  %2085 = vmatpush.bf16.msra.mxu0 %v441
  %2086 = vmatpush.bf16.msra.mxu0 %v438
  %2087 = vmatmul.bf16.gmra.mxu0 %v1966
  %v2088 = vpop.f32.mrf.mxu0
  %v2089 = vadd.f32 0.0, %v2088
  %v2090 = vpop.f32.mrf.mxu0
  %2091 = vdwg.mxu0
  %v2092 = vpack.c.bf16 %v2052, %v2052
  %2093 = vmatpush.bf16.msra.mxu0 %v625
  %2094 = vmatpush.bf16.msra.mxu0 %v622
  %2095 = vmatpush.bf16.msra.mxu0 %v619
  %2096 = vmatpush.bf16.msra.mxu0 %v616
  %2097 = vmatpush.bf16.msra.mxu0 %v613
  %2098 = vmatpush.bf16.msra.mxu0 %v610
  %2099 = vmatpush.bf16.msra.mxu0 %v607
  %2100 = vmatpush.bf16.msra.mxu0 %v604
  %2101 = vmatmul.bf16.gmra.mxu0 %v2092
  %v2102 = vpop.f32.mrf.mxu0
  %v2103 = vadd.f32 0.0, %v2102
  %v2104 = vpop.f32.mrf.mxu0
  %2105 = vdwg.mxu0
  %2106 = vmatpush.bf16.msra.mxu0 %v626
  %2107 = vmatpush.bf16.msra.mxu0 %v623
  %2108 = vmatpush.bf16.msra.mxu0 %v620
  %2109 = vmatpush.bf16.msra.mxu0 %v617
  %2110 = vmatpush.bf16.msra.mxu0 %v614
  %2111 = vmatpush.bf16.msra.mxu0 %v611
  %2112 = vmatpush.bf16.msra.mxu0 %v608
  %2113 = vmatpush.bf16.msra.mxu0 %v605
  %2114 = vmatmul.bf16.gmra.mxu0 %v2092
  %v2115 = vpop.f32.mrf.mxu0
  %v2116 = vadd.f32 0.0, %v2115
  %v2117 = vpop.f32.mrf.mxu0
  %2118 = vdwg.mxu0
  %2119 = vmatpush.bf16.msra.mxu0 %v627
  %2120 = vmatpush.bf16.msra.mxu0 %v624
  %2121 = vmatpush.bf16.msra.mxu0 %v621
  %2122 = vmatpush.bf16.msra.mxu0 %v618
  %2123 = vmatpush.bf16.msra.mxu0 %v615
  %2124 = vmatpush.bf16.msra.mxu0 %v612
  %2125 = vmatpush.bf16.msra.mxu0 %v609
  %2126 = vmatpush.bf16.msra.mxu0 %v606
  %2127 = vmatmul.bf16.gmra.mxu0 %v2092
  %v2128 = vpop.f32.mrf.mxu0
  %v2129 = vadd.f32 0.0, %v2128
  %v2130 = vpop.f32.mrf.mxu0
  %2131 = vdwg.mxu0
  %s2132 = scalar_lea.vmem [#allocation4], 72
  %v2133 = vld [vmem:[%s2132] sm:$0xff]
  %v2134 = vld [vmem:[%s2132 + $0x8] sm:$0xf]
  %v2135 = vunpack.c.l.bf16 %v2133
  %v2136 = vunpack.c.h.bf16 %v2133
  %v2137 = vunpack.c.l.bf16 %v2134
  %v2138 = vadd.f32 %v2135, %v2063
  %v2139 = vadd.f32 %v2136, %v2076
  %v2140 = vxor.u32 %v2138, 2147483648
  %v2141 = vxor.u32 %v2139, 2147483648
  %v2142 = vmul.f32 %v2140, 1.442695
  %v2143 = vpow.pop %v2142
  %v2144 = vmul.f32 %v2141, 1.442695
  %v2145 = vpow.pop %v2144
  %v2146 = vadd.f32 %v2143, 1.0
  %v2147 = vadd.f32 %v2145, 1.0
  %v2148 = vrcp.pop %v2146
  %v2149 = vmul.f32 %v2146, %v2148
  %v2150 = vsub.f32 1.0, %v2149
  %v2151 = vmul.f32 %v2148, %v2150
  %v2152 = vadd.f32 %v2148, %v2151
  %vm2153 = vweird.f32 %v2146
  %vm2154 = vweird.f32 %v2148
  %vm2155 = vmor %vm2153, %vm2154
  %v2156 = vsel %vm2155, %v2148, %v2152
  %v2157 = vand.u32 2147483647, %v2146
  %vm2158 = vcmp.eq.f32.partialorder %v2157, 8.507059e+37
  %v2159 = vand.u32 %v2146, 2147483648
  %v2160 = vor.u32 1.1754944e-38, %v2159
  %v2161 = vsel %vm2158, %v2160, %v2156
  %v2162 = vmul.f32 1.0, %v2161
  %v2163 = vrcp.pop %v2147
  %v2164 = vmul.f32 %v2147, %v2163
  %v2165 = vsub.f32 1.0, %v2164
  %v2166 = vmul.f32 %v2163, %v2165
  %v2167 = vadd.f32 %v2163, %v2166
  %vm2168 = vweird.f32 %v2147
  %vm2169 = vweird.f32 %v2163
  %vm2170 = vmor %vm2168, %vm2169
  %v2171 = vsel %vm2170, %v2163, %v2167
  %v2172 = vand.u32 2147483647, %v2147
  %vm2173 = vcmp.eq.f32.partialorder %v2172, 8.507059e+37
  %v2174 = vand.u32 %v2147, 2147483648
  %v2175 = vor.u32 1.1754944e-38, %v2174
  %v2176 = vsel %vm2173, %v2175, %v2171
  %v2177 = vmul.f32 1.0, %v2176
  %v2178 = vadd.f32 %v2089, %v339
  %v2179 = vmul.f32 %v2162, %v2178
  %v2180 = vadd.f32 %v2137, %v2179
  %v2181 = vtanh.pop %v2180
  %v2182 = vsub.f32 %v1965, %v2181
  %v2183 = vmul.f32 %v2177, %v2182
  %v2184 = vadd.f32 %v2181, %v2183
  %v2185 = vpack.c.bf16 %v2184, %v2184
  %2186 = vmatpush.bf16.msra.mxu0 %v845
  %2187 = vmatpush.bf16.msra.mxu0 %v842
  %2188 = vmatpush.bf16.msra.mxu0 %v839
  %2189 = vmatpush.bf16.msra.mxu0 %v836
  %2190 = vmatpush.bf16.msra.mxu0 %v833
  %2191 = vmatpush.bf16.msra.mxu0 %v830
  %2192 = vmatpush.bf16.msra.mxu0 %v827
  %2193 = vmatpush.bf16.msra.mxu0 %v824
  %2194 = vmatmul.bf16.gmra.mxu0 %v2185
  %v2195 = vpop.f32.mrf.mxu0
  %v2196 = vadd.f32 %v347, %v2195
  %v2197 = vpop.f32.mrf.mxu0
  %2198 = vdwg.mxu0
  %2199 = vmatpush.bf16.msra.mxu0 %v846
  %2200 = vmatpush.bf16.msra.mxu0 %v843
  %2201 = vmatpush.bf16.msra.mxu0 %v840
  %2202 = vmatpush.bf16.msra.mxu0 %v837
  %2203 = vmatpush.bf16.msra.mxu0 %v834
  %2204 = vmatpush.bf16.msra.mxu0 %v831
  %2205 = vmatpush.bf16.msra.mxu0 %v828
  %2206 = vmatpush.bf16.msra.mxu0 %v825
  %2207 = vmatmul.bf16.gmra.mxu0 %v2185
  %v2208 = vpop.f32.mrf.mxu0
  %v2209 = vadd.f32 %v348, %v2208
  %v2210 = vpop.f32.mrf.mxu0
  %2211 = vdwg.mxu0
  %2212 = vmatpush.bf16.msra.mxu0 %v847
  %2213 = vmatpush.bf16.msra.mxu0 %v844
  %2214 = vmatpush.bf16.msra.mxu0 %v841
  %2215 = vmatpush.bf16.msra.mxu0 %v838
  %2216 = vmatpush.bf16.msra.mxu0 %v835
  %2217 = vmatpush.bf16.msra.mxu0 %v832
  %2218 = vmatpush.bf16.msra.mxu0 %v829
  %2219 = vmatpush.bf16.msra.mxu0 %v826
  %2220 = vmatmul.bf16.gmra.mxu0 %v2185
  %v2221 = vpop.f32.mrf.mxu0
  %v2222 = vadd.f32 %v349, %v2221
  %v2223 = vpop.f32.mrf.mxu0
  %2224 = vdwg.mxu0
  %v2225 = vadd.f32 %v2196, %v2103
  %v2226 = vadd.f32 %v2209, %v2116
  %v2227 = vxor.u32 %v2225, 2147483648
  %v2228 = vxor.u32 %v2226, 2147483648
  %v2229 = vmul.f32 %v2227, 1.442695
  %v2230 = vpow.pop %v2229
  %v2231 = vmul.f32 %v2228, 1.442695
  %v2232 = vpow.pop %v2231
  %v2233 = vadd.f32 %v2230, 1.0
  %v2234 = vadd.f32 %v2232, 1.0
  %v2235 = vrcp.pop %v2233
  %v2236 = vmul.f32 %v2233, %v2235
  %v2237 = vsub.f32 1.0, %v2236
  %v2238 = vmul.f32 %v2235, %v2237
  %v2239 = vadd.f32 %v2235, %v2238
  %vm2240 = vweird.f32 %v2233
  %vm2241 = vweird.f32 %v2235
  %vm2242 = vmor %vm2240, %vm2241
  %v2243 = vsel %vm2242, %v2235, %v2239
  %v2244 = vand.u32 2147483647, %v2233
  %vm2245 = vcmp.eq.f32.partialorder %v2244, 8.507059e+37
  %v2246 = vand.u32 %v2233, 2147483648
  %v2247 = vor.u32 1.1754944e-38, %v2246
  %v2248 = vsel %vm2245, %v2247, %v2243
  %v2249 = vmul.f32 1.0, %v2248
  %v2250 = vrcp.pop %v2234
  %v2251 = vmul.f32 %v2234, %v2250
  %v2252 = vsub.f32 1.0, %v2251
  %v2253 = vmul.f32 %v2250, %v2252
  %v2254 = vadd.f32 %v2250, %v2253
  %vm2255 = vweird.f32 %v2234
  %vm2256 = vweird.f32 %v2250
  %vm2257 = vmor %vm2255, %vm2256
  %v2258 = vsel %vm2257, %v2250, %v2254
  %v2259 = vand.u32 2147483647, %v2234
  %vm2260 = vcmp.eq.f32.partialorder %v2259, 8.507059e+37
  %v2261 = vand.u32 %v2234, 2147483648
  %v2262 = vor.u32 1.1754944e-38, %v2261
  %v2263 = vsel %vm2260, %v2262, %v2258
  %v2264 = vmul.f32 1.0, %v2263
  %v2265 = vadd.f32 %v2129, %v343
  %v2266 = vmul.f32 %v2249, %v2265
  %v2267 = vadd.f32 %v2222, %v2266
  %v2268 = vtanh.pop %v2267
  %v2269 = vsub.f32 %v2052, %v2268
  %v2270 = vmul.f32 %v2264, %v2269
  %v2271 = vadd.f32 %v2268, %v2270
  %2272 = vmatpush.bf16.msra.mxu0 %v457
  %2273 = vmatpush.bf16.msra.mxu0 %v454
  %2274 = vmatpush.bf16.msra.mxu0 %v451
  %2275 = vmatpush.bf16.msra.mxu0 %v448
  %2276 = vmatpush.bf16.msra.mxu0 %v445
  %2277 = vmatpush.bf16.msra.mxu0 %v442
  %2278 = vmatpush.bf16.msra.mxu0 %v439
  %2279 = vmatpush.bf16.msra.mxu0 %v436
  %2280 = vmatmul.bf16.gmra.mxu0 %v2185
  %v2281 = vpop.f32.mrf.mxu0
  %v2282 = vadd.f32 0.0, %v2281
  %v2283 = vpop.f32.mrf.mxu0
  %2284 = vdwg.mxu0
  %2285 = vmatpush.bf16.msra.mxu0 %v458
  %2286 = vmatpush.bf16.msra.mxu0 %v455
  %2287 = vmatpush.bf16.msra.mxu0 %v452
  %2288 = vmatpush.bf16.msra.mxu0 %v449
  %2289 = vmatpush.bf16.msra.mxu0 %v446
  %2290 = vmatpush.bf16.msra.mxu0 %v443
  %2291 = vmatpush.bf16.msra.mxu0 %v440
  %2292 = vmatpush.bf16.msra.mxu0 %v437
  %2293 = vmatmul.bf16.gmra.mxu0 %v2185
  %v2294 = vpop.f32.mrf.mxu0
  %v2295 = vadd.f32 0.0, %v2294
  %v2296 = vpop.f32.mrf.mxu0
  %2297 = vdwg.mxu0
  %2298 = vmatpush.bf16.msra.mxu0 %v459
  %2299 = vmatpush.bf16.msra.mxu0 %v456
  %2300 = vmatpush.bf16.msra.mxu0 %v453
  %2301 = vmatpush.bf16.msra.mxu0 %v450
  %2302 = vmatpush.bf16.msra.mxu0 %v447
  %2303 = vmatpush.bf16.msra.mxu0 %v444
  %2304 = vmatpush.bf16.msra.mxu0 %v441
  %2305 = vmatpush.bf16.msra.mxu0 %v438
  %2306 = vmatmul.bf16.gmra.mxu0 %v2185
  %v2307 = vpop.f32.mrf.mxu0
  %v2308 = vadd.f32 0.0, %v2307
  %v2309 = vpop.f32.mrf.mxu0
  %2310 = vdwg.mxu0
  %v2311 = vpack.c.bf16 %v2271, %v2271
  %2312 = vmatpush.bf16.msra.mxu0 %v625
  %2313 = vmatpush.bf16.msra.mxu0 %v622
  %2314 = vmatpush.bf16.msra.mxu0 %v619
  %2315 = vmatpush.bf16.msra.mxu0 %v616
  %2316 = vmatpush.bf16.msra.mxu0 %v613
  %2317 = vmatpush.bf16.msra.mxu0 %v610
  %2318 = vmatpush.bf16.msra.mxu0 %v607
  %2319 = vmatpush.bf16.msra.mxu0 %v604
  %2320 = vmatmul.bf16.gmra.mxu0 %v2311
  %v2321 = vpop.f32.mrf.mxu0
  %v2322 = vadd.f32 0.0, %v2321
  %v2323 = vpop.f32.mrf.mxu0
  %2324 = vdwg.mxu0
  %2325 = vmatpush.bf16.msra.mxu0 %v626
  %2326 = vmatpush.bf16.msra.mxu0 %v623
  %2327 = vmatpush.bf16.msra.mxu0 %v620
  %2328 = vmatpush.bf16.msra.mxu0 %v617
  %2329 = vmatpush.bf16.msra.mxu0 %v614
  %2330 = vmatpush.bf16.msra.mxu0 %v611
  %2331 = vmatpush.bf16.msra.mxu0 %v608
  %2332 = vmatpush.bf16.msra.mxu0 %v605
  %2333 = vmatmul.bf16.gmra.mxu0 %v2311
  %v2334 = vpop.f32.mrf.mxu0
  %v2335 = vadd.f32 0.0, %v2334
  %v2336 = vpop.f32.mrf.mxu0
  %2337 = vdwg.mxu0
  %2338 = vmatpush.bf16.msra.mxu0 %v627
  %2339 = vmatpush.bf16.msra.mxu0 %v624
  %2340 = vmatpush.bf16.msra.mxu0 %v621
  %2341 = vmatpush.bf16.msra.mxu0 %v618
  %2342 = vmatpush.bf16.msra.mxu0 %v615
  %2343 = vmatpush.bf16.msra.mxu0 %v612
  %2344 = vmatpush.bf16.msra.mxu0 %v609
  %2345 = vmatpush.bf16.msra.mxu0 %v606
  %2346 = vmatmul.bf16.gmra.mxu0 %v2311
  %v2347 = vpop.f32.mrf.mxu0
  %v2348 = vadd.f32 0.0, %v2347
  %v2349 = vpop.f32.mrf.mxu0
  %2350 = vdwg.mxu0
  %s2351 = scalar_lea.vmem [#allocation4], 84
  %v2352 = vld [vmem:[%s2351] sm:$0xff]
  %v2353 = vld [vmem:[%s2351 + $0x8] sm:$0xf]
  %v2354 = vunpack.c.l.bf16 %v2352
  %v2355 = vunpack.c.h.bf16 %v2352
  %v2356 = vunpack.c.l.bf16 %v2353
  %v2357 = vadd.f32 %v2354, %v2282
  %v2358 = vadd.f32 %v2355, %v2295
  %v2359 = vxor.u32 %v2357, 2147483648
  %v2360 = vxor.u32 %v2358, 2147483648
  %v2361 = vmul.f32 %v2359, 1.442695
  %v2362 = vpow.pop %v2361
  %v2363 = vmul.f32 %v2360, 1.442695
  %v2364 = vpow.pop %v2363
  %v2365 = vadd.f32 %v2362, 1.0
  %v2366 = vadd.f32 %v2364, 1.0
  %v2367 = vrcp.pop %v2365
  %v2368 = vmul.f32 %v2365, %v2367
  %v2369 = vsub.f32 1.0, %v2368
  %v2370 = vmul.f32 %v2367, %v2369
  %v2371 = vadd.f32 %v2367, %v2370
  %vm2372 = vweird.f32 %v2365
  %vm2373 = vweird.f32 %v2367
  %vm2374 = vmor %vm2372, %vm2373
  %v2375 = vsel %vm2374, %v2367, %v2371
  %v2376 = vand.u32 2147483647, %v2365
  %vm2377 = vcmp.eq.f32.partialorder %v2376, 8.507059e+37
  %v2378 = vand.u32 %v2365, 2147483648
  %v2379 = vor.u32 1.1754944e-38, %v2378
  %v2380 = vsel %vm2377, %v2379, %v2375
  %v2381 = vmul.f32 1.0, %v2380
  %v2382 = vrcp.pop %v2366
  %v2383 = vmul.f32 %v2366, %v2382
  %v2384 = vsub.f32 1.0, %v2383
  %v2385 = vmul.f32 %v2382, %v2384
  %v2386 = vadd.f32 %v2382, %v2385
  %vm2387 = vweird.f32 %v2366
  %vm2388 = vweird.f32 %v2382
  %vm2389 = vmor %vm2387, %vm2388
  %v2390 = vsel %vm2389, %v2382, %v2386
  %v2391 = vand.u32 2147483647, %v2366
  %vm2392 = vcmp.eq.f32.partialorder %v2391, 8.507059e+37
  %v2393 = vand.u32 %v2366, 2147483648
  %v2394 = vor.u32 1.1754944e-38, %v2393
  %v2395 = vsel %vm2392, %v2394, %v2390
  %v2396 = vmul.f32 1.0, %v2395
  %v2397 = vadd.f32 %v2308, %v339
  %v2398 = vmul.f32 %v2381, %v2397
  %v2399 = vadd.f32 %v2356, %v2398
  %v2400 = vtanh.pop %v2399
  %v2401 = vsub.f32 %v2184, %v2400
  %v2402 = vmul.f32 %v2396, %v2401
  %v2403 = vadd.f32 %v2400, %v2402
  %v2404 = vpack.c.bf16 %v2403, %v2403
  %2405 = vmatpush.bf16.msra.mxu0 %v845
  %2406 = vmatpush.bf16.msra.mxu0 %v842
  %2407 = vmatpush.bf16.msra.mxu0 %v839
  %2408 = vmatpush.bf16.msra.mxu0 %v836
  %2409 = vmatpush.bf16.msra.mxu0 %v833
  %2410 = vmatpush.bf16.msra.mxu0 %v830
  %2411 = vmatpush.bf16.msra.mxu0 %v827
  %2412 = vmatpush.bf16.msra.mxu0 %v824
  %2413 = vmatmul.bf16.gmra.mxu0 %v2404
  %v2414 = vpop.f32.mrf.mxu0
  %v2415 = vadd.f32 %v347, %v2414
  %v2416 = vpop.f32.mrf.mxu0
  %2417 = vdwg.mxu0
  %2418 = vmatpush.bf16.msra.mxu0 %v846
  %2419 = vmatpush.bf16.msra.mxu0 %v843
  %2420 = vmatpush.bf16.msra.mxu0 %v840
  %2421 = vmatpush.bf16.msra.mxu0 %v837
  %2422 = vmatpush.bf16.msra.mxu0 %v834
  %2423 = vmatpush.bf16.msra.mxu0 %v831
  %2424 = vmatpush.bf16.msra.mxu0 %v828
  %2425 = vmatpush.bf16.msra.mxu0 %v825
  %2426 = vmatmul.bf16.gmra.mxu0 %v2404
  %v2427 = vpop.f32.mrf.mxu0
  %v2428 = vadd.f32 %v348, %v2427
  %v2429 = vpop.f32.mrf.mxu0
  %2430 = vdwg.mxu0
  %2431 = vmatpush.bf16.msra.mxu0 %v847
  %2432 = vmatpush.bf16.msra.mxu0 %v844
  %2433 = vmatpush.bf16.msra.mxu0 %v841
  %2434 = vmatpush.bf16.msra.mxu0 %v838
  %2435 = vmatpush.bf16.msra.mxu0 %v835
  %2436 = vmatpush.bf16.msra.mxu0 %v832
  %2437 = vmatpush.bf16.msra.mxu0 %v829
  %2438 = vmatpush.bf16.msra.mxu0 %v826
  %2439 = vmatmul.bf16.gmra.mxu0 %v2404
  %v2440 = vpop.f32.mrf.mxu0
  %v2441 = vadd.f32 %v349, %v2440
  %v2442 = vpop.f32.mrf.mxu0
  %2443 = vdwg.mxu0
  %v2444 = vadd.f32 %v2415, %v2322
  %v2445 = vadd.f32 %v2428, %v2335
  %v2446 = vxor.u32 %v2444, 2147483648
  %v2447 = vxor.u32 %v2445, 2147483648
  %v2448 = vmul.f32 %v2446, 1.442695
  %v2449 = vpow.pop %v2448
  %v2450 = vmul.f32 %v2447, 1.442695
  %v2451 = vpow.pop %v2450
  %v2452 = vadd.f32 %v2449, 1.0
  %v2453 = vadd.f32 %v2451, 1.0
  %v2454 = vrcp.pop %v2452
  %v2455 = vmul.f32 %v2452, %v2454
  %v2456 = vsub.f32 1.0, %v2455
  %v2457 = vmul.f32 %v2454, %v2456
  %v2458 = vadd.f32 %v2454, %v2457
  %vm2459 = vweird.f32 %v2452
  %vm2460 = vweird.f32 %v2454
  %vm2461 = vmor %vm2459, %vm2460
  %v2462 = vsel %vm2461, %v2454, %v2458
  %v2463 = vand.u32 2147483647, %v2452
  %vm2464 = vcmp.eq.f32.partialorder %v2463, 8.507059e+37
  %v2465 = vand.u32 %v2452, 2147483648
  %v2466 = vor.u32 1.1754944e-38, %v2465
  %v2467 = vsel %vm2464, %v2466, %v2462
  %v2468 = vmul.f32 1.0, %v2467
  %v2469 = vrcp.pop %v2453
  %v2470 = vmul.f32 %v2453, %v2469
  %v2471 = vsub.f32 1.0, %v2470
  %v2472 = vmul.f32 %v2469, %v2471
  %v2473 = vadd.f32 %v2469, %v2472
  %vm2474 = vweird.f32 %v2453
  %vm2475 = vweird.f32 %v2469
  %vm2476 = vmor %vm2474, %vm2475
  %v2477 = vsel %vm2476, %v2469, %v2473
  %v2478 = vand.u32 2147483647, %v2453
  %vm2479 = vcmp.eq.f32.partialorder %v2478, 8.507059e+37
  %v2480 = vand.u32 %v2453, 2147483648
  %v2481 = vor.u32 1.1754944e-38, %v2480
  %v2482 = vsel %vm2479, %v2481, %v2477
  %v2483 = vmul.f32 1.0, %v2482
  %v2484 = vadd.f32 %v2348, %v343
  %v2485 = vmul.f32 %v2468, %v2484
  %v2486 = vadd.f32 %v2441, %v2485
  %v2487 = vtanh.pop %v2486
  %v2488 = vsub.f32 %v2271, %v2487
  %v2489 = vmul.f32 %v2483, %v2488
  %v2490 = vadd.f32 %v2487, %v2489
  %2491 = vst [vmem:[#allocation2] sm:$0xff] %v2403
  %2492 = vst [vmem:[#allocation3] sm:$0xff] %v2490
  // Predicated region
  $region50: #{discriminator_forward.1} parent=0 // pred_check
    %p2493 = pneg %p39
  $region51: #{discriminator_forward.1} parent=0 // pred_check_branch
    %2495 = sbr.rel (%p2493) target = $region53
  $region52: #{discriminator_forward.1} parent=0 // pred_region
    %v2496 = vpack.c.bf16 %v2490, %v2490
    %v2497 = vld [vmem:[%s9] sm:$0xf]
    %v2498 = vld [vmem:[%s9 + $0x4] sm:$0xf]
    %v2499 = vld [vmem:[%s9 + $0x8] sm:$0xf]
    %v2500 = vld [vmem:[%s9 + $0xc] sm:$0xf]
    %v2501 = vld [vmem:[%s9 + $0x10] sm:$0xf]
    %v2502 = vld [vmem:[%s9 + $0x14] sm:$0xf]
    %v2503 = vld [vmem:[%s9 + $0x18] sm:$0xf]
    %v2504 = vld [vmem:[%s9 + $0x1c] sm:$0xf]
    %v2505 = vld [vmem:[%s9 + $0x20] sm:$0xf]
    %v2506 = vld [vmem:[%s9 + $0x24] sm:$0xf]
    %v2507 = vld [vmem:[%s9 + $0x28] sm:$0xf]
    %v2508 = vld [vmem:[%s9 + $0x2c] sm:$0xf]
    %v2509 = vld [vmem:[%s9 + $0x30] sm:$0xf]
    %v2510 = vld [vmem:[%s9 + $0x34] sm:$0xf]
    %v2511 = vld [vmem:[%s9 + $0x38] sm:$0xf]
    %v2512 = vld [vmem:[%s9 + $0x3c] sm:$0xf]
    %v2513 = vld [vmem:[%s10] sm:$0x1]
    %v2515 = vperm.slane %v2513, 0
    %v2533 = vunpack.c.l.b16 %v2497
    %v2534 = vunpack.c.l.b16 %v2498
    %v2535 = vunpack.c.l.b16 %v2499
    %v2536 = vunpack.c.l.b16 %v2500
    %v2537 = vunpack.c.l.b16 %v2501
    %v2538 = vunpack.c.l.b16 %v2502
    %v2539 = vunpack.c.l.b16 %v2503
    %v2540 = vunpack.c.l.b16 %v2504
    %v2541 = vunpack.c.l.b16 %v2505
    %v2542 = vunpack.c.l.b16 %v2506
    %v2543 = vunpack.c.l.b16 %v2507
    %v2544 = vunpack.c.l.b16 %v2508
    %v2545 = vunpack.c.l.b16 %v2509
    %v2546 = vunpack.c.l.b16 %v2510
    %v2547 = vunpack.c.l.b16 %v2511
    %v2548 = vunpack.c.l.b16 %v2512
    %v2549 = vpack.c.b16 %v2534, %v2533
    %v2550 = vpack.c.b16 %v2536, %v2535
    %v2551 = vpack.c.b16 %v2538, %v2537
    %v2552 = vpack.c.b16 %v2540, %v2539
    %v2553 = vpack.c.b16 %v2542, %v2541
    %v2554 = vpack.c.b16 %v2544, %v2543
    %v2555 = vpack.c.b16 %v2546, %v2545
    %v2556 = vpack.c.b16 %v2548, %v2547
    %2565 = vmatpush.bf16.msra.mxu0 %v2556
    %2566 = vmatpush.bf16.msra.mxu0 %v2555
    %2567 = vmatpush.bf16.msra.mxu0 %v2554
    %2568 = vmatpush.bf16.msra.mxu0 %v2553
    %2569 = vmatpush.bf16.msra.mxu0 %v2552
    %2570 = vmatpush.bf16.msra.mxu0 %v2551
    %2571 = vmatpush.bf16.msra.mxu0 %v2550
    %2572 = vmatpush.bf16.msra.mxu0 %v2549
    %2573 = vmatmul.bf16.gmra.mxu0 %v2496
    %v2574 = vpop.f32.mrf.mxu0
    %v2575 = vadd.f32 %v2515, %v2574
    %v2576 = vpop.f32.mrf.mxu0
    %2577 = vdwg.mxu0
    %2578 = vmax.xlane.f32.xlu0 %v2575
    %v2579 = vpop.xlane.xlu0 %2578
    %v2580 = vsub.f32 %v2575, %v2579
    %v2581 = vmul.f32 %v2580, 1.442695
    %v2582 = vpow.pop %v2581
    %2583 = vadd.xlane.f32.xlu0 %v2582
    %v2584 = vpop.xlane.xlu0 %2583
    %v2585 = vrcp.pop %v2584
    %v2586 = vmul.f32 %v2584, %v2585
    %v2587 = vsub.f32 1.0, %v2586
    %v2588 = vmul.f32 %v2585, %v2587
    %v2589 = vadd.f32 %v2585, %v2588
    %vm2590 = vweird.f32 %v2584
    %vm2591 = vweird.f32 %v2585
    %vm2592 = vmor %vm2590, %vm2591
    %v2593 = vsel %vm2592, %v2585, %v2589
    %v2594 = vand.u32 2147483647, %v2584
    %vm2595 = vcmp.eq.f32.partialorder %v2594, 8.507059e+37
    %v2596 = vand.u32 %v2584, 2147483648
    %v2597 = vor.u32 1.1754944e-38, %v2596
    %v2598 = vsel %vm2595, %v2597, %v2593
    %v2599 = vmul.f32 %v2582, %v2598
    %2600 = vst [vmem:[%s11] sm:$0xff] %v2599
  $region53: #{discriminator_forward.1} parent=0 // pred_fallthru
    _
  // Predicated region
  $region54: #{discriminator_forward.1} parent=0 // pred_check
    _
  $region55: #{discriminator_forward.1} parent=0 // pred_check_branch
    %2602 = sbr.rel (0) target = $region57
  $region56: #{discriminator_forward.1} parent=0 // pred_region
    _
  $region57: #{discriminator_forward.1} parent=0 // pred_fallthru
    _
  // Predicated region
  $region58: #{discriminator_forward.1} parent=0 // pred_check
    _
  $region59: #{discriminator_forward.1} parent=0 // pred_check_branch
    %2604 = sbr.rel (0) target = $region61
  $region60: #{discriminator_forward.1} parent=0 // pred_region
    _
  $region61: #{discriminator_forward.1} parent=0 // pred_fallthru
    _

</llo_original>
